<compile_context>
chip_gen: v7x
topology: tpu7x:2x2x1
jax: 0.10.0
libtpu: 0.0.40
codegen_flags: <defaults>
</compile_context>

<pallas_src>
import jax
import jax.numpy as jnp
from jax import lax
from jax.experimental import pallas as pl
from jax.experimental.pallas import tpu as pltpu


D_INPUT = 350  # d_input_dim from the module
LANE = 128
SUBLANE = 8

# (in_features, out_features) of each Linear, in forward order.
LAYER_DIMS = [
    (D_INPUT, D_INPUT),          # input : 350 -> 350
    (D_INPUT, D_INPUT * 2),      # fc1   : 350 -> 700
    (D_INPUT * 2, D_INPUT),      # fc2   : 700 -> 350
    (D_INPUT, D_INPUT // 2),     # fc3   : 350 -> 175
    (D_INPUT // 2, 1),           # output: 175 -> 1
]


def _round_up(n, m):
    return (n + m - 1) // m * m


def _pad_to(a, shape):
    return jnp.pad(a, [(0, s - d) for d, s in zip(a.shape, shape)])


# -----------------------------------------------------------------------------
# Kernel
# -----------------------------------------------------------------------------
def _mlp_kernel(x_ref,
                w0_ref, b0_ref,
                w1_ref, b1_ref,
                w2_ref, b2_ref,
                w3_ref, b3_ref,
                w4_ref, b4_ref,
                o_ref):
    """One (TB, 384) bf16 batch tile through the whole MLP (weights resident)."""
    f32 = jnp.float32
    bf16 = jnp.bfloat16

    h = x_ref[...]                                              # (TB, 384) bf16

    # Hidden layers: bf16 MXU matmul with f32 accumulation, bias + tanh in f32,
    # activations stored bf16 (dropout -> identity; see TODO above).
    for w_ref, b_ref in ((w0_ref, b0_ref),   # input: 350 -> 350
                         (w1_ref, b1_ref),   # fc1  : 350 -> 700
                         (w2_ref, b2_ref),   # fc2  : 700 -> 350
                         (w3_ref, b3_ref)):  # fc3  : 350 -> 175
        acc = jnp.dot(h, w_ref[...], preferred_element_type=f32) + b_ref[...]
        h = jnp.tanh(acc).astype(bf16)

    # output: Linear(175->1) + sigmoid as a lane-dense NT matmul:
    #   w4 (8, 256) bf16 (row 0 = real weights, rows 1..7 zero)
    #   h  (TB, 256) bf16, contracted on the feature dim -> (8, TB) f32.
    logits = lax.dot_general(w4_ref[...], h, (((1,), (1,)), ((), ())),
                             preferred_element_type=f32) + b4_ref[...]
    o_ref[...] = jax.nn.sigmoid(logits)                          # (8, TB) f32


# -----------------------------------------------------------------------------
# Host-side wrappers
# -----------------------------------------------------------------------------
def init_params(key, d_input_dim=D_INPUT):
    """Logical (unpadded, f32) params matching nn.Linear default init.

    Returns a list of (W_t, b) with W_t shaped (in_features, out_features)
    and b shaped (1, out_features).
    """
    del d_input_dim  # layer dims are fixed by LAYER_DIMS
    params = []
    for (fan_in, fan_out) in LAYER_DIMS:
        key, kw, kb = jax.random.split(key, 3)
        bound = 1.0 / jnp.sqrt(jnp.float32(fan_in))
        w_t = jax.random.uniform(kw, (fan_in, fan_out), jnp.float32,
                                 minval=-bound, maxval=bound)
        b = jax.random.uniform(kb, (1, fan_out), jnp.float32,
                               minval=-bound, maxval=bound)
        params.append((w_t, b))
    return params


def pack_params(params):
    """Pad feature dims to lane multiples and cast weights to bf16.

    Hidden layers:  W -> (in_pad, out_pad) bf16,  b -> (1, out_pad) f32.
    Output layer:   W (175,1) -> (8, in_pad) bf16 with the real weight row in
                    row 0 and zeros elsewhere (keeps the final matmul's M
                    sublane-aligned), b -> (1, 1) f32.
    """
    packed = []
    n = len(params)
    for i, (w_t, b) in enumerate(params):
        fi, fo = w_t.shape
        fi_p = _round_up(fi, LANE)
        if i < n - 1:
            fo_p = _round_up(fo, LANE)
            packed.append(_pad_to(w_t, (fi_p, fo_p)).astype(jnp.bfloat16))
            packed.append(_pad_to(b, (1, fo_p)).astype(jnp.float32))
        else:
            packed.append(_pad_to(w_t.T, (SUBLANE, fi_p)).astype(jnp.bfloat16))
            packed.append(b.reshape(1, 1).astype(jnp.float32))
    return packed


def blackbox_detector_forward(x, packed_params, *, tb=512):
    """x: (B, 350) float32.  packed_params: output of pack_params.

    tb: batch tile.  512 is a good default for v5e/v6e; on v7x larger tiles
    (1024-2048) amortize grid overhead further (VMEM limit already sized).
    """
    B, F = x.shape
    assert F == D_INPUT, (B, F)

    f_pad = _round_up(F, LANE)                  # 350 -> 384

    if _round_up(B, SUBLANE) <= tb:
        tb = _round_up(B, SUBLANE)              # single tile covers the batch
    else:
        tb = _round_up(tb, LANE)                # multi-tile: lane-aligned blocks
    b_pad = _round_up(B, tb)

    # bf16 x host-side: the first dot consumes bf16 anyway; halves DMA/VMEM.
    x_p = _pad_to(x.astype(jnp.bfloat16), (b_pad, f_pad))

    grid = (b_pad // tb,)
    in_specs = [pl.BlockSpec((tb, f_pad), lambda i: (i, 0))]
    for p in packed_params:
        # Full-extent block, constant index -> DMA'd once, stays VMEM-resident;
        # single-buffered so no dead second copy is allocated.
        in_specs.append(pl.BlockSpec(p.shape, lambda i: (0, 0),
                                     pipeline_mode=pl.Buffered(1)))
    # Lane-dense output: (8, b_pad) with the real logits in row 0.
    out_spec = pl.BlockSpec((SUBLANE, tb), lambda i: (0, i))

    out = pl.pallas_call(
        _mlp_kernel,
        out_shape=jax.ShapeDtypeStruct((SUBLANE, b_pad), jnp.float32),
        grid=grid,
        in_specs=in_specs,
        out_specs=out_spec,
        compiler_params=pltpu.CompilerParams(
            dimension_semantics=("parallel",),
            vmem_limit_bytes=32 << 20,
        ),
    )(x_p, *packed_params)
    return out[0, :B].reshape(B, 1)


# -----------------------------------------------------------------------------
# References for correctness checks
# -----------------------------------------------------------------------------
def _reference_forward_packed(x, packed_params):
    """Pure-JAX reference mirroring the kernel's padded bf16/f32 math."""
    B, F = x.shape
    f_pad = _round_up(F, LANE)
    h = _pad_to(x.astype(jnp.bfloat16), (B, f_pad))
    n_layers = len(packed_params) // 2
    for i in range(n_layers - 1):
        w = packed_params[2 * i]
        b = packed_params[2 * i + 1]
        acc = jnp.dot(h, w, preferred_element_type=jnp.float32) + b
        h = jnp.tanh(acc).astype(jnp.bfloat16)
    w4 = packed_params[-2]                       # (8, 256) bf16
    b4 = packed_params[-1]                       # (1, 1)   f32
    logits = lax.dot_general(h, w4, (((1,), (1,)), ((), ())),
                             preferred_element_type=jnp.float32)[:, :1] + b4[0, 0]
    return jax.nn.sigmoid(logits)


def _reference_forward_f32(x, params):
    """Full-f32, unpadded reference (loose check vs. bf16 kernel)."""
    h = x
    for i, (w_t, b) in enumerate(params):
        h = h @ w_t + b
        if i < len(params) - 1:
            h = jnp.tanh(h)
    return jax.nn.sigmoid(h)


if __name__ == "__main__":
    key = jax.random.PRNGKey(0)
    key, kx = jax.random.split(key)

    params = init_params(key)
    packed = pack_params(params)

    # Small batch (single-tile path).
    B = 8
    x = jax.random.normal(kx, (B, D_INPUT), jnp.float32)
    out = jax.block_until_ready(blackbox_detector_forward(x, packed))
    assert out.shape == (B, 1), out.shape

    ref_packed = _reference_forward_packed(x, packed)
    assert jnp.allclose(out, ref_packed, atol=1e-4, rtol=1e-4), (
        "mismatch vs. packed (bf16) pure-JAX reference")

    ref_f32 = _reference_forward_f32(x, params)
    assert jnp.allclose(out, ref_f32, atol=3e-2), (
        "mismatch vs. f32 pure-JAX reference")

    # Larger batch exercising the multi-tile (grid > 1) lane-dense output path.
    key, kx2 = jax.random.split(key)
    B2 = 260
    x2 = jax.random.normal(kx2, (B2, D_INPUT), jnp.float32)
    out2 = jax.block_until_ready(blackbox_detector_forward(x2, packed, tb=128))
    assert out2.shape == (B2, 1), out2.shape
    ref2 = _reference_forward_packed(x2, packed)
    assert jnp.allclose(out2, ref2, atol=1e-4, rtol=1e-4), (
        "multi-tile mismatch vs. packed (bf16) pure-JAX reference")

    print("KERNEL_OK")
</pallas_src>

<mosaic_0001>
module attributes {stable_mosaic.version = 11 : i64} {
  func.func @_mlp_kernel(%arg0: i32, %arg1: memref<8x384xbf16, #tpu.memory_space<vmem>>, %arg2: memref<384x384xbf16, #tpu.memory_space<vmem>>, %arg3: memref<1x384xf32, #tpu.memory_space<vmem>>, %arg4: memref<384x768xbf16, #tpu.memory_space<vmem>>, %arg5: memref<1x768xf32, #tpu.memory_space<vmem>>, %arg6: memref<768x384xbf16, #tpu.memory_space<vmem>>, %arg7: memref<1x384xf32, #tpu.memory_space<vmem>>, %arg8: memref<384x256xbf16, #tpu.memory_space<vmem>>, %arg9: memref<1x256xf32, #tpu.memory_space<vmem>>, %arg10: memref<8x256xbf16, #tpu.memory_space<vmem>>, %arg11: memref<1x1xf32, #tpu.memory_space<vmem>>, %arg12: memref<8x8xf32, #tpu.memory_space<vmem>>) attributes {dimension_semantics = [#tpu.dimension_semantics<parallel>], iteration_bounds = array<i64: 1>, scalar_prefetch = 0 : i64, scratch_operands = 0 : i64, tpu.core_type = #tpu.core_type<tc>, window_params = [{transform_indices = @transform_0, window_bounds = array<i64: 8, 384>}, {pipeline_mode = #tpu.pipeline_mode<synchronous>, transform_indices = @transform_1, window_bounds = array<i64: 384, 384>}, {pipeline_mode = #tpu.pipeline_mode<synchronous>, transform_indices = @transform_2, window_bounds = array<i64: 1, 384>}, {pipeline_mode = #tpu.pipeline_mode<synchronous>, transform_indices = @transform_3, window_bounds = array<i64: 384, 768>}, {pipeline_mode = #tpu.pipeline_mode<synchronous>, transform_indices = @transform_4, window_bounds = array<i64: 1, 768>}, {pipeline_mode = #tpu.pipeline_mode<synchronous>, transform_indices = @transform_5, window_bounds = array<i64: 768, 384>}, {pipeline_mode = #tpu.pipeline_mode<synchronous>, transform_indices = @transform_6, window_bounds = array<i64: 1, 384>}, {pipeline_mode = #tpu.pipeline_mode<synchronous>, transform_indices = @transform_7, window_bounds = array<i64: 384, 256>}, {pipeline_mode = #tpu.pipeline_mode<synchronous>, transform_indices = @transform_8, window_bounds = array<i64: 1, 256>}, {pipeline_mode = #tpu.pipeline_mode<synchronous>, transform_indices = @transform_9, window_bounds = array<i64: 8, 256>}, {pipeline_mode = #tpu.pipeline_mode<synchronous>, transform_indices = @transform_10, window_bounds = array<i64: 1, 1>}, {transform_indices = @transform_11, window_bounds = array<i64: 8, 8>}]} {
    %c0 = arith.constant 0 : index
    %c0_0 = arith.constant 0 : index
    %0 = vector.load %arg1[%c0, %c0_0] : memref<8x384xbf16, #tpu.memory_space<vmem>>, vector<8x384xbf16>
    %c0_1 = arith.constant 0 : index
    %c0_2 = arith.constant 0 : index
    %1 = vector.load %arg2[%c0_1, %c0_2] : memref<384x384xbf16, #tpu.memory_space<vmem>>, vector<384x384xbf16>
    %cst = arith.constant dense<0.000000e+00> : vector<8x384xf32>
    %2 = tpu.matmul %0, %1, %cst {dimension_numbers = #tpu.dot_dimension_numbers<[1], [0], [0], [1], [0, 0, 1, 1], [], []>} : vector<8x384xbf16>, vector<384x384xbf16>, vector<8x384xf32> -> vector<8x384xf32>
    %c0_3 = arith.constant 0 : index
    %c0_4 = arith.constant 0 : index
    %3 = vector.load %arg3[%c0_3, %c0_4] : memref<1x384xf32, #tpu.memory_space<vmem>>, vector<1x384xf32>
    %4 = vector.broadcast %3 : vector<1x384xf32> to vector<8x384xf32>
    %5 = arith.addf %2, %4 : vector<8x384xf32>
    %6 = math.tanh %5 : vector<8x384xf32>
    %7 = arith.truncf %6 : vector<8x384xf32> to vector<8x384xbf16>
    %c0_5 = arith.constant 0 : index
    %c0_6 = arith.constant 0 : index
    %8 = vector.load %arg4[%c0_5, %c0_6] : memref<384x768xbf16, #tpu.memory_space<vmem>>, vector<384x768xbf16>
    %cst_7 = arith.constant dense<0.000000e+00> : vector<8x768xf32>
    %9 = tpu.matmul %7, %8, %cst_7 {dimension_numbers = #tpu.dot_dimension_numbers<[1], [0], [0], [1], [0, 0, 1, 1], [], []>} : vector<8x384xbf16>, vector<384x768xbf16>, vector<8x768xf32> -> vector<8x768xf32>
    %c0_8 = arith.constant 0 : index
    %c0_9 = arith.constant 0 : index
    %10 = vector.load %arg5[%c0_8, %c0_9] : memref<1x768xf32, #tpu.memory_space<vmem>>, vector<1x768xf32>
    %11 = vector.broadcast %10 : vector<1x768xf32> to vector<8x768xf32>
    %12 = arith.addf %9, %11 : vector<8x768xf32>
    %13 = math.tanh %12 : vector<8x768xf32>
    %14 = arith.truncf %13 : vector<8x768xf32> to vector<8x768xbf16>
    %c0_10 = arith.constant 0 : index
    %c0_11 = arith.constant 0 : index
    %15 = vector.load %arg6[%c0_10, %c0_11] : memref<768x384xbf16, #tpu.memory_space<vmem>>, vector<768x384xbf16>
    %cst_12 = arith.constant dense<0.000000e+00> : vector<8x384xf32>
    %16 = tpu.matmul %14, %15, %cst_12 {dimension_numbers = #tpu.dot_dimension_numbers<[1], [0], [0], [1], [0, 0, 1, 1], [], []>} : vector<8x768xbf16>, vector<768x384xbf16>, vector<8x384xf32> -> vector<8x384xf32>
    %c0_13 = arith.constant 0 : index
    %c0_14 = arith.constant 0 : index
    %17 = vector.load %arg7[%c0_13, %c0_14] : memref<1x384xf32, #tpu.memory_space<vmem>>, vector<1x384xf32>
    %18 = vector.broadcast %17 : vector<1x384xf32> to vector<8x384xf32>
    %19 = arith.addf %16, %18 : vector<8x384xf32>
    %20 = math.tanh %19 : vector<8x384xf32>
    %21 = arith.truncf %20 : vector<8x384xf32> to vector<8x384xbf16>
    %c0_15 = arith.constant 0 : index
    %c0_16 = arith.constant 0 : index
    %22 = vector.load %arg8[%c0_15, %c0_16] : memref<384x256xbf16, #tpu.memory_space<vmem>>, vector<384x256xbf16>
    %cst_17 = arith.constant dense<0.000000e+00> : vector<8x256xf32>
    %23 = tpu.matmul %21, %22, %cst_17 {dimension_numbers = #tpu.dot_dimension_numbers<[1], [0], [0], [1], [0, 0, 1, 1], [], []>} : vector<8x384xbf16>, vector<384x256xbf16>, vector<8x256xf32> -> vector<8x256xf32>
    %c0_18 = arith.constant 0 : index
    %c0_19 = arith.constant 0 : index
    %24 = vector.load %arg9[%c0_18, %c0_19] : memref<1x256xf32, #tpu.memory_space<vmem>>, vector<1x256xf32>
    %25 = vector.broadcast %24 : vector<1x256xf32> to vector<8x256xf32>
    %26 = arith.addf %23, %25 : vector<8x256xf32>
    %27 = math.tanh %26 : vector<8x256xf32>
    %28 = arith.truncf %27 : vector<8x256xf32> to vector<8x256xbf16>
    %c0_20 = arith.constant 0 : index
    %c0_21 = arith.constant 0 : index
    %29 = vector.load %arg10[%c0_20, %c0_21] : memref<8x256xbf16, #tpu.memory_space<vmem>>, vector<8x256xbf16>
    %cst_22 = arith.constant dense<0.000000e+00> : vector<8x8xf32>
    %30 = tpu.matmul %29, %28, %cst_22 {dimension_numbers = #tpu.dot_dimension_numbers<[1], [1], [0], [0], [0, 0, 1, 0], [], []>} : vector<8x256xbf16>, vector<8x256xbf16>, vector<8x8xf32> -> vector<8x8xf32>
    %c0_23 = arith.constant 0 : index
    %c0_24 = arith.constant 0 : index
    %31 = vector.load %arg11[%c0_23, %c0_24] : memref<1x1xf32, #tpu.memory_space<vmem>>, vector<1x1xf32>
    %32 = vector.broadcast %31 : vector<1x1xf32> to vector<8x8xf32>
    %33 = arith.addf %30, %32 : vector<8x8xf32>
    %34 = arith.negf %33 : vector<8x8xf32>
    %35 = math.exp %34 : vector<8x8xf32>
    %cst_25 = arith.constant 1.000000e+00 : f32
    %36 = vector.broadcast %cst_25 : f32 to vector<8x8xf32>
    %37 = arith.addf %36, %35 : vector<8x8xf32>
    %38 = arith.divf %36, %37 : vector<8x8xf32>
    %c0_26 = arith.constant 0 : index
    %c0_27 = arith.constant 0 : index
    %39 = vector.load %arg12[%c0_26, %c0_27] : memref<8x8xf32, #tpu.memory_space<vmem>>, vector<8x8xf32>
    tpu.vector_store %arg12[%c0_26, %c0_27], %38 {strides = array<i32>} : memref<8x8xf32, #tpu.memory_space<vmem>>, vector<8x8xf32>,
    return
  }
  func.func @transform_0(%arg0: i32) -> (i32, i32) {
    %c0_i32 = arith.constant 0 : i32
    %c0_i32_0 = arith.constant 0 : i32
    return %arg0, %c0_i32 : i32, i32
  }
  func.func @transform_1(%arg0: i32) -> (i32, i32) {
    %c0_i32 = arith.constant 0 : i32
    %c0_i32_0 = arith.constant 0 : i32
    %c0_i32_1 = arith.constant 0 : i32
    return %c0_i32, %c0_i32_0 : i32, i32
  }
  func.func @transform_2(%arg0: i32) -> (i32, i32) {
    %c0_i32 = arith.constant 0 : i32
    %c0_i32_0 = arith.constant 0 : i32
    %c0_i32_1 = arith.constant 0 : i32
    return %c0_i32, %c0_i32_0 : i32, i32
  }
  func.func @transform_3(%arg0: i32) -> (i32, i32) {
    %c0_i32 = arith.constant 0 : i32
    %c0_i32_0 = arith.constant 0 : i32
    %c0_i32_1 = arith.constant 0 : i32
    return %c0_i32, %c0_i32_0 : i32, i32
  }
  func.func @transform_4(%arg0: i32) -> (i32, i32) {
    %c0_i32 = arith.constant 0 : i32
    %c0_i32_0 = arith.constant 0 : i32
    %c0_i32_1 = arith.constant 0 : i32
    return %c0_i32, %c0_i32_0 : i32, i32
  }
  func.func @transform_5(%arg0: i32) -> (i32, i32) {
    %c0_i32 = arith.constant 0 : i32
    %c0_i32_0 = arith.constant 0 : i32
    %c0_i32_1 = arith.constant 0 : i32
    return %c0_i32, %c0_i32_0 : i32, i32
  }
  func.func @transform_6(%arg0: i32) -> (i32, i32) {
    %c0_i32 = arith.constant 0 : i32
    %c0_i32_0 = arith.constant 0 : i32
    %c0_i32_1 = arith.constant 0 : i32
    return %c0_i32, %c0_i32_0 : i32, i32
  }
  func.func @transform_7(%arg0: i32) -> (i32, i32) {
    %c0_i32 = arith.constant 0 : i32
    %c0_i32_0 = arith.constant 0 : i32
    %c0_i32_1 = arith.constant 0 : i32
    return %c0_i32, %c0_i32_0 : i32, i32
  }
  func.func @transform_8(%arg0: i32) -> (i32, i32) {
    %c0_i32 = arith.constant 0 : i32
    %c0_i32_0 = arith.constant 0 : i32
    %c0_i32_1 = arith.constant 0 : i32
    return %c0_i32, %c0_i32_0 : i32, i32
  }
  func.func @transform_9(%arg0: i32) -> (i32, i32) {
    %c0_i32 = arith.constant 0 : i32
    %c0_i32_0 = arith.constant 0 : i32
    %c0_i32_1 = arith.constant 0 : i32
    return %c0_i32, %c0_i32_0 : i32, i32
  }
  func.func @transform_10(%arg0: i32) -> (i32, i32) {
    %c0_i32 = arith.constant 0 : i32
    %c0_i32_0 = arith.constant 0 : i32
    %c0_i32_1 = arith.constant 0 : i32
    return %c0_i32, %c0_i32_0 : i32, i32
  }
  func.func @transform_11(%arg0: i32) -> (i32, i32) {
    %c0_i32 = arith.constant 0 : i32
    %c0_i32_0 = arith.constant 0 : i32
    return %c0_i32, %arg0 : i32, i32
  }
}

</mosaic_0001>

<llo_original>
// kernel: tpu_custom_call.1
$region0: #{tpu_custom_call.1}
  #allocation0 [shape = 'u32[]', space=smem, size = 0x4, offset = 0x4, fixed_abs, tag = 'smem constant byte address 0x4 - core index']
  #allocation1 [shape = 'u32[144,128]{1,0:T(1,128)}', space=vmem, size = 0x12000, scoped, tag = 'internal scratch']
  #allocation2 [shape = 'f32[1,1]{1,0:T(1,128)S(1)}', space=vmem, size = 0x200, scoped, tag = 'scoped memory for tpu_custom_call.1']
  %s0 = inlined_call_operand.hbm [shape: bf16[8,384], index: 0, kind: input, shape index: {}]
  %s1 = inlined_call_operand.hbm [shape: bf16[384,384], index: 1, kind: input, shape index: {}]
  %s2 = inlined_call_operand.hbm [shape: f32[1,384], index: 2, kind: input, shape index: {}]
  %s3 = inlined_call_operand.hbm [shape: bf16[384,768], index: 3, kind: input, shape index: {}]
  %s4 = inlined_call_operand.vmem [shape: f32[1,768], index: 4, kind: input, shape index: {}]
  %s5 = inlined_call_operand.hbm [shape: bf16[768,384], index: 5, kind: input, shape index: {}]
  %s6 = inlined_call_operand.vmem [shape: f32[1,384], index: 6, kind: input, shape index: {}]
  %s7 = inlined_call_operand.hbm [shape: bf16[384,256], index: 7, kind: input, shape index: {}]
  %s8 = inlined_call_operand.vmem [shape: f32[1,256], index: 8, kind: input, shape index: {}]
  %s9 = inlined_call_operand.vmem [shape: bf16[8,256], index: 9, kind: input, shape index: {}]
  %s10 = inlined_call_operand.<no memory space> [shape: f32[1,1], index: 10, kind: input, shape index: {}]
  %s11 = inlined_call_operand.hbm [shape: f32[8,8], index: 11, kind: output, shape index: {}]
  %s12 = sld [smem:[#allocation0]]
  $region78: #{tpu_custom_call.1} parent=0
    _
  %s14 = ssub.s32 1, %s12
  %s15 = scalar_select 0, %s14, %s12
  %v16 = vstv %s10
  %17 = vst [vmem:[#allocation2] sm:$0x1] %v16
  $region1: #{tpu_custom_call.1} parent=0
    #allocation3 [shape = 'u8[6144]{0}', space=vmem, size = 0x1800, scoped, tag = 'input window, operand 0, single buffered']
    #allocation4 [shape = 's32[1]{0}', space=sflag, size = 0x4, scoped, tag = 'scoped memory for tpu_custom_call.1']
    #allocation5 [shape = 's32[1]{0}', space=sflag, size = 0x4, scoped, tag = 'scoped memory for tpu_custom_call.1']
    #allocation6 [shape = 'u8[294912]{0}', space=vmem, size = 0x48000, scoped, tag = 'input window, operand 1, single buffered']
    #allocation7 [shape = 's32[1]{0}', space=sflag, size = 0x4, scoped, tag = 'scoped memory for tpu_custom_call.1']
    #allocation8 [shape = 'u8[1536]{0}', space=vmem, size = 0x800, scoped, tag = 'input window, operand 2, single buffered']
    #allocation9 [shape = 'u8[589824]{0}', space=vmem, size = 0x90000, scoped, tag = 'input window, operand 3, single buffered']
    #allocation10 [shape = 's32[1]{0}', space=sflag, size = 0x4, scoped, tag = 'scoped memory for tpu_custom_call.1']
    #allocation11 [shape = 'u8[589824]{0}', space=vmem, size = 0x90000, scoped, tag = 'input window, operand 5, single buffered']
    #allocation12 [shape = 'u8[196608]{0}', space=vmem, size = 0x30000, scoped, tag = 'input window, operand 7, single buffered']
    #allocation13 [shape = 's32[1]{0}', space=sflag, size = 0x4, scoped, tag = 'scoped memory for tpu_custom_call.1']
    #allocation14 [shape = 'u8[4096]{0}', space=vmem, size = 0x1000, scoped, tag = 'output window, operand 0, single buffered']
    %18 = vsyncpa [#allocation4], 0
    %19 = vsyncpa [#allocation7], 0
    %20 = vsyncpa [#allocation10], 0
    %21 = vsyncpa [#allocation13], 0
    %22 = vsyncpa [#allocation5], 0
    // Predicated region
    $region2: #{tpu_custom_call.1} parent=1 // pred_check
      _
    $region3: #{tpu_custom_call.1} parent=1 // pred_check_branch
      %24 = sbr.rel (0) target = $region5
    $region4: #{tpu_custom_call.1} parent=1 // pred_region
      %s26 = ssub.s32 192, 192
      %27 = vsyncadd [#allocation4], %s26
      %s29 = sshll.u32 [#allocation3], 4
      %s30 = int_to_ptr.vmem [resolvable:$true] %s29
      %32 = dma.hbm_to_vmem [thread:$0]  %s0, 192, %s30, [#allocation4]
    $region5: #{tpu_custom_call.1} parent=1 // pred_fallthru
      _
    // Predicated region
    $region6: #{tpu_custom_call.1} parent=1 // pred_check
      _
    $region7: #{tpu_custom_call.1} parent=1 // pred_check_branch
      %34 = sbr.rel (0) target = $region9
    $region8: #{tpu_custom_call.1} parent=1 // pred_region
      %s36 = ssub.s32 9216, 9216
      %37 = vsyncadd [#allocation7], %s36
      %s38 = sshll.u32 [#allocation6], 4
      %s39 = int_to_ptr.vmem [resolvable:$true] %s38
      %44 = dma.hbm_to_vmem [thread:$0]  %s1, 9216, %s39, [#allocation7], 192, 192, 12
    $region9: #{tpu_custom_call.1} parent=1 // pred_fallthru
      _
    // Predicated region
    $region10: #{tpu_custom_call.1} parent=1 // pred_check
      _
    $region11: #{tpu_custom_call.1} parent=1 // pred_check_branch
      %46 = sbr.rel (0) target = $region13
    $region12: #{tpu_custom_call.1} parent=1 // pred_region
      %s48 = ssub.s32 48, 48
      %49 = vsyncadd [#allocation7], %s48
      %s51 = sshll.u32 [#allocation8], 4
      %s52 = int_to_ptr.vmem [resolvable:$true] %s51
      %54 = dma.hbm_to_vmem [thread:$0]  %s2, 48, %s52, [#allocation7]
    $region13: #{tpu_custom_call.1} parent=1 // pred_fallthru
      _
    // Predicated region
    $region14: #{tpu_custom_call.1} parent=1 // pred_check
      _
    $region15: #{tpu_custom_call.1} parent=1 // pred_check_branch
      %56 = sbr.rel (0) target = $region17
    $region16: #{tpu_custom_call.1} parent=1 // pred_region
      %s58 = ssub.s32 18432, 18432
      %59 = vsyncadd [#allocation10], %s58
      %s60 = sshll.u32 [#allocation9], 4
      %s61 = int_to_ptr.vmem [resolvable:$true] %s60
      %66 = dma.hbm_to_vmem [thread:$0]  %s3, 18432, %s61, [#allocation10], 384, 384, 24
    $region17: #{tpu_custom_call.1} parent=1 // pred_fallthru
      _
    // Predicated region
    $region18: #{tpu_custom_call.1} parent=1 // pred_check
      _
    $region19: #{tpu_custom_call.1} parent=1 // pred_check_branch
      %68 = sbr.rel (0) target = $region21
    $region20: #{tpu_custom_call.1} parent=1 // pred_region
      _
    $region21: #{tpu_custom_call.1} parent=1 // pred_fallthru
      _
    // Predicated region
    $region22: #{tpu_custom_call.1} parent=1 // pred_check
      _
    $region23: #{tpu_custom_call.1} parent=1 // pred_check_branch
      %70 = sbr.rel (0) target = $region25
    $region24: #{tpu_custom_call.1} parent=1 // pred_region
      %s72 = ssub.s32 18432, 18432
      %73 = vsyncadd [#allocation10], %s72
      %s74 = sshll.u32 [#allocation11], 4
      %s75 = int_to_ptr.vmem [resolvable:$true] %s74
      %80 = dma.hbm_to_vmem [thread:$0]  %s5, 18432, %s75, [#allocation10], 192, 192, 12
    $region25: #{tpu_custom_call.1} parent=1 // pred_fallthru
      _
    // Predicated region
    $region26: #{tpu_custom_call.1} parent=1 // pred_check
      _
    $region27: #{tpu_custom_call.1} parent=1 // pred_check_branch
      %82 = sbr.rel (0) target = $region29
    $region28: #{tpu_custom_call.1} parent=1 // pred_region
      _
    $region29: #{tpu_custom_call.1} parent=1 // pred_fallthru
      _
    // Predicated region
    $region30: #{tpu_custom_call.1} parent=1 // pred_check
      _
    $region31: #{tpu_custom_call.1} parent=1 // pred_check_branch
      %84 = sbr.rel (0) target = $region33
    $region32: #{tpu_custom_call.1} parent=1 // pred_region
      %s86 = ssub.s32 6144, 6144
      %87 = vsyncadd [#allocation13], %s86
      %s88 = sshll.u32 [#allocation12], 4
      %s89 = int_to_ptr.vmem [resolvable:$true] %s88
      %94 = dma.hbm_to_vmem [thread:$0]  %s7, 6144, %s89, [#allocation13], 128, 128, 8
    $region33: #{tpu_custom_call.1} parent=1 // pred_fallthru
      _
    // Predicated region
    $region34: #{tpu_custom_call.1} parent=1 // pred_check
      _
    $region35: #{tpu_custom_call.1} parent=1 // pred_check_branch
      %96 = sbr.rel (0) target = $region37
    $region36: #{tpu_custom_call.1} parent=1 // pred_region
      _
    $region37: #{tpu_custom_call.1} parent=1 // pred_fallthru
      _
    // Predicated region
    $region38: #{tpu_custom_call.1} parent=1 // pred_check
      _
    $region39: #{tpu_custom_call.1} parent=1 // pred_check_branch
      %98 = sbr.rel (0) target = $region41
    $region40: #{tpu_custom_call.1} parent=1 // pred_region
      _
    $region41: #{tpu_custom_call.1} parent=1 // pred_fallthru
      _
    // Predicated region
    $region42: #{tpu_custom_call.1} parent=1 // pred_check
      _
    $region43: #{tpu_custom_call.1} parent=1 // pred_check_branch
      %100 = sbr.rel (0) target = $region45
    $region44: #{tpu_custom_call.1} parent=1 // pred_region
      _
    $region45: #{tpu_custom_call.1} parent=1 // pred_fallthru
      _
    // Predicated region
    $region46: #{tpu_custom_call.1} parent=1 // pred_check
      _
    $region47: #{tpu_custom_call.1} parent=1 // pred_check_branch
      %102 = sbr.rel (0) target = $region49
    $region48: #{tpu_custom_call.1} parent=1 // pred_region
      %103 = dma.done [#allocation4], 192
    $region49: #{tpu_custom_call.1} parent=1 // pred_fallthru
      _
    // Predicated region
    $region50: #{tpu_custom_call.1} parent=1 // pred_check
      _
    $region51: #{tpu_custom_call.1} parent=1 // pred_check_branch
      %105 = sbr.rel (0) target = $region53
    $region52: #{tpu_custom_call.1} parent=1 // pred_region
      %106 = dma.done [#allocation7], 9216
    $region53: #{tpu_custom_call.1} parent=1 // pred_fallthru
      _
    // Predicated region
    $region54: #{tpu_custom_call.1} parent=1 // pred_check
      _
    $region55: #{tpu_custom_call.1} parent=1 // pred_check_branch
      %108 = sbr.rel (0) target = $region57
    $region56: #{tpu_custom_call.1} parent=1 // pred_region
      %109 = dma.done [#allocation7], 48
    $region57: #{tpu_custom_call.1} parent=1 // pred_fallthru
      _
    // Predicated region
    $region58: #{tpu_custom_call.1} parent=1 // pred_check
      _
    $region59: #{tpu_custom_call.1} parent=1 // pred_check_branch
      %111 = sbr.rel (0) target = $region61
    $region60: #{tpu_custom_call.1} parent=1 // pred_region
      %112 = dma.done [#allocation10], 18432
    $region61: #{tpu_custom_call.1} parent=1 // pred_fallthru
      _
    // Predicated region
    $region62: #{tpu_custom_call.1} parent=1 // pred_check
      _
    $region63: #{tpu_custom_call.1} parent=1 // pred_check_branch
      %114 = sbr.rel (0) target = $region65
    $region64: #{tpu_custom_call.1} parent=1 // pred_region
      %115 = dma.done [#allocation10], 18432
    $region65: #{tpu_custom_call.1} parent=1 // pred_fallthru
      _
    // Predicated region
    $region66: #{tpu_custom_call.1} parent=1 // pred_check
      _
    $region67: #{tpu_custom_call.1} parent=1 // pred_check_branch
      %117 = sbr.rel (0) target = $region69
    $region68: #{tpu_custom_call.1} parent=1 // pred_region
      %118 = dma.done [#allocation13], 6144
    $region69: #{tpu_custom_call.1} parent=1 // pred_fallthru
      _
    %v120 = vld [vmem:[#allocation3] sm:$0xff]
    %v121 = vld [vmem:[#allocation3 + $0x8] sm:$0xf]
    %v122 = vld [vmem:[#allocation6] sm:$0xff]
    %v123 = vld [vmem:[#allocation6 + $0x8] sm:$0xf]
    %v124 = vld [vmem:[#allocation6 + $0xc] sm:$0xff]
    %v125 = vld [vmem:[#allocation6 + $0x14] sm:$0xf]
    %v126 = vld [vmem:[#allocation6 + $0x18] sm:$0xff]
    %v127 = vld [vmem:[#allocation6 + $0x20] sm:$0xf]
    %v128 = vld [vmem:[#allocation6 + $0x24] sm:$0xff]
    %v129 = vld [vmem:[#allocation6 + $0x2c] sm:$0xf]
    %v130 = vld [vmem:[#allocation6 + $0x30] sm:$0xff]
    %v131 = vld [vmem:[#allocation6 + $0x38] sm:$0xf]
    %v132 = vld [vmem:[#allocation6 + $0x3c] sm:$0xff]
    %v133 = vld [vmem:[#allocation6 + $0x44] sm:$0xf]
    %v134 = vld [vmem:[#allocation6 + $0x48] sm:$0xff]
    %v135 = vld [vmem:[#allocation6 + $0x50] sm:$0xf]
    %v136 = vld [vmem:[#allocation6 + $0x54] sm:$0xff]
    %v137 = vld [vmem:[#allocation6 + $0x5c] sm:$0xf]
    %v138 = vld [vmem:[#allocation6 + $0x60] sm:$0xff]
    %v139 = vld [vmem:[#allocation6 + $0x68] sm:$0xf]
    %v140 = vld [vmem:[#allocation6 + $0x6c] sm:$0xff]
    %v141 = vld [vmem:[#allocation6 + $0x74] sm:$0xf]
    %v142 = vld [vmem:[#allocation6 + $0x78] sm:$0xff]
    %v143 = vld [vmem:[#allocation6 + $0x80] sm:$0xf]
    %v144 = vld [vmem:[#allocation6 + $0x84] sm:$0xff]
    %v145 = vld [vmem:[#allocation6 + $0x8c] sm:$0xf]
    %v146 = vld [vmem:[#allocation6 + $0x90] sm:$0xff]
    %v147 = vld [vmem:[#allocation6 + $0x98] sm:$0xf]
    %v148 = vld [vmem:[#allocation6 + $0x9c] sm:$0xff]
    %v149 = vld [vmem:[#allocation6 + $0xa4] sm:$0xf]
    %v150 = vld [vmem:[#allocation6 + $0xa8] sm:$0xff]
    %v151 = vld [vmem:[#allocation6 + $0xb0] sm:$0xf]
    %v152 = vld [vmem:[#allocation6 + $0xb4] sm:$0xff]
    %v153 = vld [vmem:[#allocation6 + $0xbc] sm:$0xf]
    %v154 = vld [vmem:[#allocation6 + $0xc0] sm:$0xff]
    %v155 = vld [vmem:[#allocation6 + $0xc8] sm:$0xf]
    %v156 = vld [vmem:[#allocation6 + $0xcc] sm:$0xff]
    %v157 = vld [vmem:[#allocation6 + $0xd4] sm:$0xf]
    %v158 = vld [vmem:[#allocation6 + $0xd8] sm:$0xff]
    %v159 = vld [vmem:[#allocation6 + $0xe0] sm:$0xf]
    %v160 = vld [vmem:[#allocation6 + $0xe4] sm:$0xff]
    %v161 = vld [vmem:[#allocation6 + $0xec] sm:$0xf]
    %v162 = vld [vmem:[#allocation6 + $0xf0] sm:$0xff]
    %v163 = vld [vmem:[#allocation6 + $0xf8] sm:$0xf]
    %v164 = vld [vmem:[#allocation6 + $0xfc] sm:$0xff]
    %v165 = vld [vmem:[#allocation6 + $0x104] sm:$0xf]
    %v166 = vld [vmem:[#allocation6 + $0x108] sm:$0xff]
    %v167 = vld [vmem:[#allocation6 + $0x110] sm:$0xf]
    %v168 = vld [vmem:[#allocation6 + $0x114] sm:$0xff]
    %v169 = vld [vmem:[#allocation6 + $0x11c] sm:$0xf]
    %v170 = vld [vmem:[#allocation6 + $0x120] sm:$0xff]
    %v171 = vld [vmem:[#allocation6 + $0x128] sm:$0xf]
    %v172 = vld [vmem:[#allocation6 + $0x12c] sm:$0xff]
    %v173 = vld [vmem:[#allocation6 + $0x134] sm:$0xf]
    %v174 = vld [vmem:[#allocation6 + $0x138] sm:$0xff]
    %v175 = vld [vmem:[#allocation6 + $0x140] sm:$0xf]
    %v176 = vld [vmem:[#allocation6 + $0x144] sm:$0xff]
    %v177 = vld [vmem:[#allocation6 + $0x14c] sm:$0xf]
    %v178 = vld [vmem:[#allocation6 + $0x150] sm:$0xff]
    %v179 = vld [vmem:[#allocation6 + $0x158] sm:$0xf]
    %v180 = vld [vmem:[#allocation6 + $0x15c] sm:$0xff]
    %v181 = vld [vmem:[#allocation6 + $0x164] sm:$0xf]
    %v182 = vld [vmem:[#allocation6 + $0x168] sm:$0xff]
    %v183 = vld [vmem:[#allocation6 + $0x170] sm:$0xf]
    %v184 = vld [vmem:[#allocation6 + $0x174] sm:$0xff]
    %v185 = vld [vmem:[#allocation6 + $0x17c] sm:$0xf]
    %v186 = vld [vmem:[#allocation6 + $0x180] sm:$0xff]
    %v187 = vld [vmem:[#allocation6 + $0x188] sm:$0xf]
    %v188 = vld [vmem:[#allocation6 + $0x18c] sm:$0xff]
    %v189 = vld [vmem:[#allocation6 + $0x194] sm:$0xf]
    %v190 = vld [vmem:[#allocation6 + $0x198] sm:$0xff]
    %v191 = vld [vmem:[#allocation6 + $0x1a0] sm:$0xf]
    %v192 = vld [vmem:[#allocation6 + $0x1a4] sm:$0xff]
    %v193 = vld [vmem:[#allocation6 + $0x1ac] sm:$0xf]
    %v194 = vld [vmem:[#allocation6 + $0x1b0] sm:$0xff]
    %v195 = vld [vmem:[#allocation6 + $0x1b8] sm:$0xf]
    %v196 = vld [vmem:[#allocation6 + $0x1bc] sm:$0xff]
    %v197 = vld [vmem:[#allocation6 + $0x1c4] sm:$0xf]
    %v198 = vld [vmem:[#allocation6 + $0x1c8] sm:$0xff]
    %v199 = vld [vmem:[#allocation6 + $0x1d0] sm:$0xf]
    %v200 = vld [vmem:[#allocation6 + $0x1d4] sm:$0xff]
    %v201 = vld [vmem:[#allocation6 + $0x1dc] sm:$0xf]
    %v202 = vld [vmem:[#allocation6 + $0x1e0] sm:$0xff]
    %v203 = vld [vmem:[#allocation6 + $0x1e8] sm:$0xf]
    %v204 = vld [vmem:[#allocation6 + $0x1ec] sm:$0xff]
    %v205 = vld [vmem:[#allocation6 + $0x1f4] sm:$0xf]
    %v206 = vld [vmem:[#allocation6 + $0x1f8] sm:$0xff]
    %v207 = vld [vmem:[#allocation6 + $0x200] sm:$0xf]
    %v208 = vld [vmem:[#allocation6 + $0x204] sm:$0xff]
    %v209 = vld [vmem:[#allocation6 + $0x20c] sm:$0xf]
    %v210 = vld [vmem:[#allocation6 + $0x210] sm:$0xff]
    %v211 = vld [vmem:[#allocation6 + $0x218] sm:$0xf]
    %v212 = vld [vmem:[#allocation6 + $0x21c] sm:$0xff]
    %v213 = vld [vmem:[#allocation6 + $0x224] sm:$0xf]
    %v214 = vld [vmem:[#allocation6 + $0x228] sm:$0xff]
    %v215 = vld [vmem:[#allocation6 + $0x230] sm:$0xf]
    %v216 = vld [vmem:[#allocation6 + $0x234] sm:$0xff]
    %v217 = vld [vmem:[#allocation6 + $0x23c] sm:$0xf]
    %v218 = vld [vmem:[#allocation8] sm:$0x7]
    %v220 = vlaneseq
    %v221 = vshrl.u32 %v220, 7
    %v222 = vsub.s32 0, %v221
    %v223 = vrot.slane %v218, %v222
    %v224 = vlaneseq
    %v225 = vshrl.u32 %v224, 7
    %v226 = vsub.s32 1, %v225
    %v227 = vrot.slane %v218, %v226
    %v228 = vlaneseq
    %v229 = vshrl.u32 %v228, 7
    %v230 = vsub.s32 2, %v229
    %v231 = vrot.slane %v218, %v230
    %v237 = vunpack.c.l.b16 %v120
    %v238 = vunpack.c.h.b16 %v120
    %v239 = vunpack.c.l.b16 %v121
    %v240 = vpack.c.b16 %v237, %v237
    %v241 = vpack.c.b16 %v238, %v238
    %v242 = vpack.c.b16 %v239, %v239
    %v342 = vunpack.c.l.b16 %v122
    %v343 = vunpack.c.h.b16 %v122
    %v344 = vunpack.c.l.b16 %v123
    %v345 = vunpack.c.l.b16 %v124
    %v346 = vunpack.c.h.b16 %v124
    %v347 = vunpack.c.l.b16 %v125
    %v348 = vunpack.c.l.b16 %v126
    %v349 = vunpack.c.h.b16 %v126
    %v350 = vunpack.c.l.b16 %v127
    %v351 = vunpack.c.l.b16 %v128
    %v352 = vunpack.c.h.b16 %v128
    %v353 = vunpack.c.l.b16 %v129
    %v354 = vunpack.c.l.b16 %v130
    %v355 = vunpack.c.h.b16 %v130
    %v356 = vunpack.c.l.b16 %v131
    %v357 = vunpack.c.l.b16 %v132
    %v358 = vunpack.c.h.b16 %v132
    %v359 = vunpack.c.l.b16 %v133
    %v360 = vunpack.c.l.b16 %v134
    %v361 = vunpack.c.h.b16 %v134
    %v362 = vunpack.c.l.b16 %v135
    %v363 = vunpack.c.l.b16 %v136
    %v364 = vunpack.c.h.b16 %v136
    %v365 = vunpack.c.l.b16 %v137
    %v366 = vunpack.c.l.b16 %v138
    %v367 = vunpack.c.h.b16 %v138
    %v368 = vunpack.c.l.b16 %v139
    %v369 = vunpack.c.l.b16 %v140
    %v370 = vunpack.c.h.b16 %v140
    %v371 = vunpack.c.l.b16 %v141
    %v372 = vunpack.c.l.b16 %v142
    %v373 = vunpack.c.h.b16 %v142
    %v374 = vunpack.c.l.b16 %v143
    %v375 = vunpack.c.l.b16 %v144
    %v376 = vunpack.c.h.b16 %v144
    %v377 = vunpack.c.l.b16 %v145
    %v378 = vunpack.c.l.b16 %v146
    %v379 = vunpack.c.h.b16 %v146
    %v380 = vunpack.c.l.b16 %v147
    %v381 = vunpack.c.l.b16 %v148
    %v382 = vunpack.c.h.b16 %v148
    %v383 = vunpack.c.l.b16 %v149
    %v384 = vunpack.c.l.b16 %v150
    %v385 = vunpack.c.h.b16 %v150
    %v386 = vunpack.c.l.b16 %v151
    %v387 = vunpack.c.l.b16 %v152
    %v388 = vunpack.c.h.b16 %v152
    %v389 = vunpack.c.l.b16 %v153
    %v390 = vunpack.c.l.b16 %v154
    %v391 = vunpack.c.h.b16 %v154
    %v392 = vunpack.c.l.b16 %v155
    %v393 = vunpack.c.l.b16 %v156
    %v394 = vunpack.c.h.b16 %v156
    %v395 = vunpack.c.l.b16 %v157
    %v396 = vunpack.c.l.b16 %v158
    %v397 = vunpack.c.h.b16 %v158
    %v398 = vunpack.c.l.b16 %v159
    %v399 = vunpack.c.l.b16 %v160
    %v400 = vunpack.c.h.b16 %v160
    %v401 = vunpack.c.l.b16 %v161
    %v402 = vunpack.c.l.b16 %v162
    %v403 = vunpack.c.h.b16 %v162
    %v404 = vunpack.c.l.b16 %v163
    %v405 = vunpack.c.l.b16 %v164
    %v406 = vunpack.c.h.b16 %v164
    %v407 = vunpack.c.l.b16 %v165
    %v408 = vunpack.c.l.b16 %v166
    %v409 = vunpack.c.h.b16 %v166
    %v410 = vunpack.c.l.b16 %v167
    %v411 = vunpack.c.l.b16 %v168
    %v412 = vunpack.c.h.b16 %v168
    %v413 = vunpack.c.l.b16 %v169
    %v414 = vunpack.c.l.b16 %v170
    %v415 = vunpack.c.h.b16 %v170
    %v416 = vunpack.c.l.b16 %v171
    %v417 = vunpack.c.l.b16 %v172
    %v418 = vunpack.c.h.b16 %v172
    %v419 = vunpack.c.l.b16 %v173
    %v420 = vunpack.c.l.b16 %v174
    %v421 = vunpack.c.h.b16 %v174
    %v422 = vunpack.c.l.b16 %v175
    %v423 = vunpack.c.l.b16 %v176
    %v424 = vunpack.c.h.b16 %v176
    %v425 = vunpack.c.l.b16 %v177
    %v426 = vunpack.c.l.b16 %v178
    %v427 = vunpack.c.h.b16 %v178
    %v428 = vunpack.c.l.b16 %v179
    %v429 = vunpack.c.l.b16 %v180
    %v430 = vunpack.c.h.b16 %v180
    %v431 = vunpack.c.l.b16 %v181
    %v432 = vunpack.c.l.b16 %v182
    %v433 = vunpack.c.h.b16 %v182
    %v434 = vunpack.c.l.b16 %v183
    %v435 = vunpack.c.l.b16 %v184
    %v436 = vunpack.c.h.b16 %v184
    %v437 = vunpack.c.l.b16 %v185
    %v438 = vunpack.c.l.b16 %v186
    %v439 = vunpack.c.h.b16 %v186
    %v440 = vunpack.c.l.b16 %v187
    %v441 = vunpack.c.l.b16 %v188
    %v442 = vunpack.c.h.b16 %v188
    %v443 = vunpack.c.l.b16 %v189
    %v444 = vunpack.c.l.b16 %v190
    %v445 = vunpack.c.h.b16 %v190
    %v446 = vunpack.c.l.b16 %v191
    %v447 = vunpack.c.l.b16 %v192
    %v448 = vunpack.c.h.b16 %v192
    %v449 = vunpack.c.l.b16 %v193
    %v450 = vunpack.c.l.b16 %v194
    %v451 = vunpack.c.h.b16 %v194
    %v452 = vunpack.c.l.b16 %v195
    %v453 = vunpack.c.l.b16 %v196
    %v454 = vunpack.c.h.b16 %v196
    %v455 = vunpack.c.l.b16 %v197
    %v456 = vunpack.c.l.b16 %v198
    %v457 = vunpack.c.h.b16 %v198
    %v458 = vunpack.c.l.b16 %v199
    %v459 = vunpack.c.l.b16 %v200
    %v460 = vunpack.c.h.b16 %v200
    %v461 = vunpack.c.l.b16 %v201
    %v462 = vunpack.c.l.b16 %v202
    %v463 = vunpack.c.h.b16 %v202
    %v464 = vunpack.c.l.b16 %v203
    %v465 = vunpack.c.l.b16 %v204
    %v466 = vunpack.c.h.b16 %v204
    %v467 = vunpack.c.l.b16 %v205
    %v468 = vunpack.c.l.b16 %v206
    %v469 = vunpack.c.h.b16 %v206
    %v470 = vunpack.c.l.b16 %v207
    %v471 = vunpack.c.l.b16 %v208
    %v472 = vunpack.c.h.b16 %v208
    %v473 = vunpack.c.l.b16 %v209
    %v474 = vunpack.c.l.b16 %v210
    %v475 = vunpack.c.h.b16 %v210
    %v476 = vunpack.c.l.b16 %v211
    %v477 = vunpack.c.l.b16 %v212
    %v478 = vunpack.c.h.b16 %v212
    %v479 = vunpack.c.l.b16 %v213
    %v480 = vunpack.c.l.b16 %v214
    %v481 = vunpack.c.h.b16 %v214
    %v482 = vunpack.c.l.b16 %v215
    %v483 = vunpack.c.l.b16 %v216
    %v484 = vunpack.c.h.b16 %v216
    %v485 = vunpack.c.l.b16 %v217
    %v486 = vpack.c.b16 %v345, %v342
    %v487 = vpack.c.b16 %v346, %v343
    %v488 = vpack.c.b16 %v347, %v344
    %v489 = vpack.c.b16 %v351, %v348
    %v490 = vpack.c.b16 %v352, %v349
    %v491 = vpack.c.b16 %v353, %v350
    %v492 = vpack.c.b16 %v357, %v354
    %v493 = vpack.c.b16 %v358, %v355
    %v494 = vpack.c.b16 %v359, %v356
    %v495 = vpack.c.b16 %v363, %v360
    %v496 = vpack.c.b16 %v364, %v361
    %v497 = vpack.c.b16 %v365, %v362
    %v498 = vpack.c.b16 %v369, %v366
    %v499 = vpack.c.b16 %v370, %v367
    %v500 = vpack.c.b16 %v371, %v368
    %v501 = vpack.c.b16 %v375, %v372
    %v502 = vpack.c.b16 %v376, %v373
    %v503 = vpack.c.b16 %v377, %v374
    %v504 = vpack.c.b16 %v381, %v378
    %v505 = vpack.c.b16 %v382, %v379
    %v506 = vpack.c.b16 %v383, %v380
    %v507 = vpack.c.b16 %v387, %v384
    %v508 = vpack.c.b16 %v388, %v385
    %v509 = vpack.c.b16 %v389, %v386
    %v510 = vpack.c.b16 %v393, %v390
    %v511 = vpack.c.b16 %v394, %v391
    %v512 = vpack.c.b16 %v395, %v392
    %v513 = vpack.c.b16 %v399, %v396
    %v514 = vpack.c.b16 %v400, %v397
    %v515 = vpack.c.b16 %v401, %v398
    %v516 = vpack.c.b16 %v405, %v402
    %v517 = vpack.c.b16 %v406, %v403
    %v518 = vpack.c.b16 %v407, %v404
    %v519 = vpack.c.b16 %v411, %v408
    %v520 = vpack.c.b16 %v412, %v409
    %v521 = vpack.c.b16 %v413, %v410
    %v522 = vpack.c.b16 %v417, %v414
    %v523 = vpack.c.b16 %v418, %v415
    %v524 = vpack.c.b16 %v419, %v416
    %v525 = vpack.c.b16 %v423, %v420
    %v526 = vpack.c.b16 %v424, %v421
    %v527 = vpack.c.b16 %v425, %v422
    %v528 = vpack.c.b16 %v429, %v426
    %v529 = vpack.c.b16 %v430, %v427
    %v530 = vpack.c.b16 %v431, %v428
    %v531 = vpack.c.b16 %v435, %v432
    %v532 = vpack.c.b16 %v436, %v433
    %v533 = vpack.c.b16 %v437, %v434
    %v534 = vpack.c.b16 %v441, %v438
    %v535 = vpack.c.b16 %v442, %v439
    %v536 = vpack.c.b16 %v443, %v440
    %v537 = vpack.c.b16 %v447, %v444
    %v538 = vpack.c.b16 %v448, %v445
    %v539 = vpack.c.b16 %v449, %v446
    %v540 = vpack.c.b16 %v453, %v450
    %v541 = vpack.c.b16 %v454, %v451
    %v542 = vpack.c.b16 %v455, %v452
    %v543 = vpack.c.b16 %v459, %v456
    %v544 = vpack.c.b16 %v460, %v457
    %v545 = vpack.c.b16 %v461, %v458
    %v546 = vpack.c.b16 %v465, %v462
    %v547 = vpack.c.b16 %v466, %v463
    %v548 = vpack.c.b16 %v467, %v464
    %v549 = vpack.c.b16 %v471, %v468
    %v550 = vpack.c.b16 %v472, %v469
    %v551 = vpack.c.b16 %v473, %v470
    %v552 = vpack.c.b16 %v477, %v474
    %v553 = vpack.c.b16 %v478, %v475
    %v554 = vpack.c.b16 %v479, %v476
    %v555 = vpack.c.b16 %v483, %v480
    %v556 = vpack.c.b16 %v484, %v481
    %v557 = vpack.c.b16 %v485, %v482
    %630 = vmatprep.subr.bf16.mxu0 %v487
    %631 = vmatpush1.bf16.msra.mxu0 %v486
    %632 = vmatprep.subr.bf16.mxu0 %v490
    %633 = vmatpush1.bf16.msra.mxu0 %v489
    %634 = vmatprep.subr.bf16.mxu0 %v493
    %635 = vmatpush1.bf16.msra.mxu0 %v492
    %636 = vmatprep.subr.bf16.mxu0 %v496
    %637 = vmatpush1.bf16.msra.mxu0 %v495
    %638 = vmatprep.subr.bf16.mxu0 %v499
    %639 = vmatpush1.bf16.msra.mxu0 %v498
    %640 = vmatprep.subr.bf16.mxu0 %v502
    %641 = vmatpush1.bf16.msra.mxu0 %v501
    %642 = vmatprep.subr.bf16.mxu0 %v505
    %643 = vmatpush1.bf16.msra.mxu0 %v504
    %644 = vmatprep.subr.bf16.mxu0 %v508
    %645 = vmatpush1.bf16.msra.mxu0 %v507
    %646 = vmatprep.subr.bf16.mxu0 %v511
    %647 = vmatpush1.bf16.msra.mxu0 %v510
    %648 = vmatprep.subr.bf16.mxu0 %v514
    %649 = vmatpush1.bf16.msra.mxu0 %v513
    %650 = vmatprep.subr.bf16.mxu0 %v517
    %651 = vmatpush1.bf16.msra.mxu0 %v516
    %652 = vmatprep.subr.bf16.mxu0 %v520
    %653 = vmatpush1.bf16.msra.mxu0 %v519
    %654 = vmatprep.subr.bf16.mxu0 %v523
    %655 = vmatpush1.bf16.msra.mxu0 %v522
    %656 = vmatprep.subr.bf16.mxu0 %v526
    %657 = vmatpush1.bf16.msra.mxu0 %v525
    %658 = vmatprep.subr.bf16.mxu0 %v529
    %659 = vmatpush1.bf16.msra.mxu0 %v528
    %660 = vmatprep.subr.bf16.mxu0 %v532
    %661 = vmatpush1.bf16.msra.mxu0 %v531
    %662 = vmatprep.mubr.bf16.mxu0 %v241
    %663 = vmatmul.mubr.bf16.gmra.mrb[0].mxu0 %v240
    %v664 = vpop.f32.mrb[0].mxu0
    %v665 = vadd.f32 %v223, %v664
    %v666 = vpop.f32.mrb[0].mxu0
    %v667 = vadd.f32 %v227, %v666
    %v668 = vpop.f32.mrb[0].mxu0
    %v669 = vpop.f32.mrb[0].mxu0
    %670 = vdwg.mxu0
    %671 = vmatprep.subr.bf16.mxu0 %v535
    %672 = vmatpush1.bf16.msra.mxu0 %v534
    %673 = vmatprep.subr.bf16.mxu0 %v538
    %674 = vmatpush1.bf16.msra.mxu0 %v537
    %675 = vmatprep.subr.bf16.mxu0 %v541
    %676 = vmatpush1.bf16.msra.mxu0 %v540
    %677 = vmatprep.subr.bf16.mxu0 %v544
    %678 = vmatpush1.bf16.msra.mxu0 %v543
    %679 = vmatprep.subr.bf16.mxu0 %v547
    %680 = vmatpush1.bf16.msra.mxu0 %v546
    %681 = vmatprep.subr.bf16.mxu0 %v550
    %682 = vmatpush1.bf16.msra.mxu0 %v549
    %683 = vmatprep.subr.bf16.mxu0 %v553
    %684 = vmatpush1.bf16.msra.mxu0 %v552
    %685 = vmatprep.subr.bf16.mxu0 %v556
    %686 = vmatpush1.bf16.msra.mxu0 %v555
    %687 = vmatprep.subr.bf16.mxu0 0
    %688 = vmatpush1.bf16.msra.mxu0 0
    %689 = vmatprep.subr.bf16.mxu0 0
    %690 = vmatpush1.bf16.msra.mxu0 0
    %691 = vmatprep.subr.bf16.mxu0 0
    %692 = vmatpush1.bf16.msra.mxu0 0
    %693 = vmatprep.subr.bf16.mxu0 0
    %694 = vmatpush1.bf16.msra.mxu0 0
    %695 = vmatprep.subr.bf16.mxu0 0
    %696 = vmatpush1.bf16.msra.mxu0 0
    %697 = vmatprep.subr.bf16.mxu0 0
    %698 = vmatpush1.bf16.msra.mxu0 0
    %699 = vmatprep.subr.bf16.mxu0 0
    %700 = vmatpush1.bf16.msra.mxu0 0
    %701 = vmatprep.subr.bf16.mxu0 0
    %702 = vmatpush1.bf16.msra.mxu0 0
    %703 = vmatprep.mubr.bf16.mxu0 0
    %704 = vmatmul.mubr.bf16.gmra.mrb[0].mxu0 %v242
    %v705 = vpop.f32.mrb[0].mxu0
    %v706 = vadd.f32 %v665, %v705
    %v707 = vpop.f32.mrb[0].mxu0
    %v708 = vadd.f32 %v667, %v707
    %v709 = vpop.f32.mrb[0].mxu0
    %v710 = vpop.f32.mrb[0].mxu0
    %711 = vdwg.mxu0
    %712 = vmatprep.subr.bf16.mxu0 0
    %713 = vmatpush1.bf16.msra.mxu0 %v488
    %714 = vmatprep.subr.bf16.mxu0 0
    %715 = vmatpush1.bf16.msra.mxu0 %v491
    %716 = vmatprep.subr.bf16.mxu0 0
    %717 = vmatpush1.bf16.msra.mxu0 %v494
    %718 = vmatprep.subr.bf16.mxu0 0
    %719 = vmatpush1.bf16.msra.mxu0 %v497
    %720 = vmatprep.subr.bf16.mxu0 0
    %721 = vmatpush1.bf16.msra.mxu0 %v500
    %722 = vmatprep.subr.bf16.mxu0 0
    %723 = vmatpush1.bf16.msra.mxu0 %v503
    %724 = vmatprep.subr.bf16.mxu0 0
    %725 = vmatpush1.bf16.msra.mxu0 %v506
    %726 = vmatprep.subr.bf16.mxu0 0
    %727 = vmatpush1.bf16.msra.mxu0 %v509
    %728 = vmatprep.subr.bf16.mxu0 0
    %729 = vmatpush1.bf16.msra.mxu0 %v512
    %730 = vmatprep.subr.bf16.mxu0 0
    %731 = vmatpush1.bf16.msra.mxu0 %v515
    %732 = vmatprep.subr.bf16.mxu0 0
    %733 = vmatpush1.bf16.msra.mxu0 %v518
    %734 = vmatprep.subr.bf16.mxu0 0
    %735 = vmatpush1.bf16.msra.mxu0 %v521
    %736 = vmatprep.subr.bf16.mxu0 0
    %737 = vmatpush1.bf16.msra.mxu0 %v524
    %738 = vmatprep.subr.bf16.mxu0 0
    %739 = vmatpush1.bf16.msra.mxu0 %v527
    %740 = vmatprep.subr.bf16.mxu0 0
    %741 = vmatpush1.bf16.msra.mxu0 %v530
    %742 = vmatprep.subr.bf16.mxu0 0
    %743 = vmatpush1.bf16.msra.mxu0 %v533
    %744 = vmatprep.mubr.bf16.mxu0 %v241
    %745 = vmatmul.mubr.bf16.gmra.mrb[0].mxu0 %v240
    %v746 = vpop.f32.mrb[0].mxu0
    %v747 = vadd.f32 %v231, %v746
    %v748 = vpop.f32.mrb[0].mxu0
    %v749 = vpop.f32.mrb[0].mxu0
    %v750 = vpop.f32.mrb[0].mxu0
    %751 = vdwg.mxu0
    %752 = vmatprep.subr.bf16.mxu0 0
    %753 = vmatpush1.bf16.msra.mxu0 %v536
    %754 = vmatprep.subr.bf16.mxu0 0
    %755 = vmatpush1.bf16.msra.mxu0 %v539
    %756 = vmatprep.subr.bf16.mxu0 0
    %757 = vmatpush1.bf16.msra.mxu0 %v542
    %758 = vmatprep.subr.bf16.mxu0 0
    %759 = vmatpush1.bf16.msra.mxu0 %v545
    %760 = vmatprep.subr.bf16.mxu0 0
    %761 = vmatpush1.bf16.msra.mxu0 %v548
    %762 = vmatprep.subr.bf16.mxu0 0
    %763 = vmatpush1.bf16.msra.mxu0 %v551
    %764 = vmatprep.subr.bf16.mxu0 0
    %765 = vmatpush1.bf16.msra.mxu0 %v554
    %766 = vmatprep.subr.bf16.mxu0 0
    %767 = vmatpush1.bf16.msra.mxu0 %v557
    %768 = vmatprep.subr.bf16.mxu0 0
    %769 = vmatpush1.bf16.msra.mxu0 0
    %770 = vmatprep.subr.bf16.mxu0 0
    %771 = vmatpush1.bf16.msra.mxu0 0
    %772 = vmatprep.subr.bf16.mxu0 0
    %773 = vmatpush1.bf16.msra.mxu0 0
    %774 = vmatprep.subr.bf16.mxu0 0
    %775 = vmatpush1.bf16.msra.mxu0 0
    %776 = vmatprep.subr.bf16.mxu0 0
    %777 = vmatpush1.bf16.msra.mxu0 0
    %778 = vmatprep.subr.bf16.mxu0 0
    %779 = vmatpush1.bf16.msra.mxu0 0
    %780 = vmatprep.subr.bf16.mxu0 0
    %781 = vmatpush1.bf16.msra.mxu0 0
    %782 = vmatprep.subr.bf16.mxu0 0
    %783 = vmatpush1.bf16.msra.mxu0 0
    %784 = vmatprep.mubr.bf16.mxu0 0
    %785 = vmatmul.mubr.bf16.gmra.mrb[0].mxu0 %v242
    %v786 = vpop.f32.mrb[0].mxu0
    %v787 = vadd.f32 %v747, %v786
    %v788 = vpop.f32.mrb[0].mxu0
    %v789 = vpop.f32.mrb[0].mxu0
    %v790 = vpop.f32.mrb[0].mxu0
    %791 = vdwg.mxu0
    %v792 = vtanh.pop %v706
    %v793 = vtanh.pop %v708
    %v794 = vtanh.pop %v787
    %v795 = vpack.c.bf16 %v792, %v792
    %v796 = vpack.c.bf16 %v793, %v793
    %v797 = vpack.c.bf16 %v794, %v794
    %v798 = vld [vmem:[#allocation9] sm:$0xff]
    %v799 = vld [vmem:[#allocation9 + $0x8] sm:$0xff]
    %v800 = vld [vmem:[#allocation9 + $0x10] sm:$0xff]
    %v801 = vld [vmem:[#allocation9 + $0x18] sm:$0xff]
    %v802 = vld [vmem:[#allocation9 + $0x20] sm:$0xff]
    %v803 = vld [vmem:[#allocation9 + $0x28] sm:$0xff]
    %v804 = vld [vmem:[#allocation9 + $0x30] sm:$0xff]
    %v805 = vld [vmem:[#allocation9 + $0x38] sm:$0xff]
    %v806 = vld [vmem:[#allocation9 + $0x40] sm:$0xff]
    %v807 = vld [vmem:[#allocation9 + $0x48] sm:$0xff]
    %v808 = vld [vmem:[#allocation9 + $0x50] sm:$0xff]
    %v809 = vld [vmem:[#allocation9 + $0x58] sm:$0xff]
    %v810 = vld [vmem:[#allocation9 + $0x60] sm:$0xff]
    %v811 = vld [vmem:[#allocation9 + $0x68] sm:$0xff]
    %v812 = vld [vmem:[#allocation9 + $0x70] sm:$0xff]
    %v813 = vld [vmem:[#allocation9 + $0x78] sm:$0xff]
    %v814 = vld [vmem:[#allocation9 + $0x80] sm:$0xff]
    %v815 = vld [vmem:[#allocation9 + $0x88] sm:$0xff]
    %v816 = vld [vmem:[#allocation9 + $0x90] sm:$0xff]
    %v817 = vld [vmem:[#allocation9 + $0x98] sm:$0xff]
    %v818 = vld [vmem:[#allocation9 + $0xa0] sm:$0xff]
    %v819 = vld [vmem:[#allocation9 + $0xa8] sm:$0xff]
    %v820 = vld [vmem:[#allocation9 + $0xb0] sm:$0xff]
    %v821 = vld [vmem:[#allocation9 + $0xb8] sm:$0xff]
    %v822 = vld [vmem:[#allocation9 + $0xc0] sm:$0xff]
    %v823 = vld [vmem:[#allocation9 + $0xc8] sm:$0xff]
    %v824 = vld [vmem:[#allocation9 + $0xd0] sm:$0xff]
    %v825 = vld [vmem:[#allocation9 + $0xd8] sm:$0xff]
    %v826 = vld [vmem:[#allocation9 + $0xe0] sm:$0xff]
    %v827 = vld [vmem:[#allocation9 + $0xe8] sm:$0xff]
    %v828 = vld [vmem:[#allocation9 + $0xf0] sm:$0xff]
    %v829 = vld [vmem:[#allocation9 + $0xf8] sm:$0xff]
    %v830 = vld [vmem:[#allocation9 + $0x100] sm:$0xff]
    %v831 = vld [vmem:[#allocation9 + $0x108] sm:$0xff]
    %v832 = vld [vmem:[#allocation9 + $0x110] sm:$0xff]
    %v833 = vld [vmem:[#allocation9 + $0x118] sm:$0xff]
    %v834 = vld [vmem:[#allocation9 + $0x120] sm:$0xff]
    %v835 = vld [vmem:[#allocation9 + $0x128] sm:$0xff]
    %v836 = vld [vmem:[#allocation9 + $0x130] sm:$0xff]
    %v837 = vld [vmem:[#allocation9 + $0x138] sm:$0xff]
    %v838 = vld [vmem:[#allocation9 + $0x140] sm:$0xff]
    %v839 = vld [vmem:[#allocation9 + $0x148] sm:$0xff]
    %v840 = vld [vmem:[#allocation9 + $0x150] sm:$0xff]
    %v841 = vld [vmem:[#allocation9 + $0x158] sm:$0xff]
    %v842 = vld [vmem:[#allocation9 + $0x160] sm:$0xff]
    %v843 = vld [vmem:[#allocation9 + $0x168] sm:$0xff]
    %v844 = vld [vmem:[#allocation9 + $0x170] sm:$0xff]
    %v845 = vld [vmem:[#allocation9 + $0x178] sm:$0xff]
    %v846 = vld [vmem:[#allocation9 + $0x180] sm:$0xff]
    %v847 = vld [vmem:[#allocation9 + $0x188] sm:$0xff]
    %v848 = vld [vmem:[#allocation9 + $0x190] sm:$0xff]
    %v849 = vld [vmem:[#allocation9 + $0x198] sm:$0xff]
    %v850 = vld [vmem:[#allocation9 + $0x1a0] sm:$0xff]
    %v851 = vld [vmem:[#allocation9 + $0x1a8] sm:$0xff]
    %v852 = vld [vmem:[#allocation9 + $0x1b0] sm:$0xff]
    %v853 = vld [vmem:[#allocation9 + $0x1b8] sm:$0xff]
    %v854 = vld [vmem:[#allocation9 + $0x1c0] sm:$0xff]
    %v855 = vld [vmem:[#allocation9 + $0x1c8] sm:$0xff]
    %v856 = vld [vmem:[#allocation9 + $0x1d0] sm:$0xff]
    %v857 = vld [vmem:[#allocation9 + $0x1d8] sm:$0xff]
    %v858 = vld [vmem:[#allocation9 + $0x1e0] sm:$0xff]
    %v859 = vld [vmem:[#allocation9 + $0x1e8] sm:$0xff]
    %v860 = vld [vmem:[#allocation9 + $0x1f0] sm:$0xff]
    %v861 = vld [vmem:[#allocation9 + $0x1f8] sm:$0xff]
    %v862 = vld [vmem:[#allocation9 + $0x200] sm:$0xff]
    %v863 = vld [vmem:[#allocation9 + $0x208] sm:$0xff]
    %v864 = vld [vmem:[#allocation9 + $0x210] sm:$0xff]
    %v865 = vld [vmem:[#allocation9 + $0x218] sm:$0xff]
    %v866 = vld [vmem:[#allocation9 + $0x220] sm:$0xff]
    %v867 = vld [vmem:[#allocation9 + $0x228] sm:$0xff]
    %v868 = vld [vmem:[#allocation9 + $0x230] sm:$0xff]
    %v869 = vld [vmem:[#allocation9 + $0x238] sm:$0xff]
    %v870 = vld [vmem:[#allocation9 + $0x240] sm:$0xff]
    %v871 = vld [vmem:[#allocation9 + $0x248] sm:$0xff]
    %v872 = vld [vmem:[#allocation9 + $0x250] sm:$0xff]
    %v873 = vld [vmem:[#allocation9 + $0x258] sm:$0xff]
    %v874 = vld [vmem:[#allocation9 + $0x260] sm:$0xff]
    %v875 = vld [vmem:[#allocation9 + $0x268] sm:$0xff]
    %v876 = vld [vmem:[#allocation9 + $0x270] sm:$0xff]
    %v877 = vld [vmem:[#allocation9 + $0x278] sm:$0xff]
    %v878 = vld [vmem:[#allocation9 + $0x280] sm:$0xff]
    %v879 = vld [vmem:[#allocation9 + $0x288] sm:$0xff]
    %v880 = vld [vmem:[#allocation9 + $0x290] sm:$0xff]
    %v881 = vld [vmem:[#allocation9 + $0x298] sm:$0xff]
    %v882 = vld [vmem:[#allocation9 + $0x2a0] sm:$0xff]
    %v883 = vld [vmem:[#allocation9 + $0x2a8] sm:$0xff]
    %v884 = vld [vmem:[#allocation9 + $0x2b0] sm:$0xff]
    %v885 = vld [vmem:[#allocation9 + $0x2b8] sm:$0xff]
    %v886 = vld [vmem:[#allocation9 + $0x2c0] sm:$0xff]
    %v887 = vld [vmem:[#allocation9 + $0x2c8] sm:$0xff]
    %v888 = vld [vmem:[#allocation9 + $0x2d0] sm:$0xff]
    %v889 = vld [vmem:[#allocation9 + $0x2d8] sm:$0xff]
    %v890 = vld [vmem:[#allocation9 + $0x2e0] sm:$0xff]
    %v891 = vld [vmem:[#allocation9 + $0x2e8] sm:$0xff]
    %v892 = vld [vmem:[#allocation9 + $0x2f0] sm:$0xff]
    %v893 = vld [vmem:[#allocation9 + $0x2f8] sm:$0xff]
    %v894 = vld [vmem:[#allocation9 + $0x300] sm:$0xff]
    %v895 = vld [vmem:[#allocation9 + $0x308] sm:$0xff]
    %v896 = vld [vmem:[#allocation9 + $0x310] sm:$0xff]
    %v897 = vld [vmem:[#allocation9 + $0x318] sm:$0xff]
    %v898 = vld [vmem:[#allocation9 + $0x320] sm:$0xff]
    %v899 = vld [vmem:[#allocation9 + $0x328] sm:$0xff]
    %v900 = vld [vmem:[#allocation9 + $0x330] sm:$0xff]
    %v901 = vld [vmem:[#allocation9 + $0x338] sm:$0xff]
    %v902 = vld [vmem:[#allocation9 + $0x340] sm:$0xff]
    %v903 = vld [vmem:[#allocation9 + $0x348] sm:$0xff]
    %v904 = vld [vmem:[#allocation9 + $0x350] sm:$0xff]
    %v905 = vld [vmem:[#allocation9 + $0x358] sm:$0xff]
    %v906 = vld [vmem:[#allocation9 + $0x360] sm:$0xff]
    %v907 = vld [vmem:[#allocation9 + $0x368] sm:$0xff]
    %v908 = vld [vmem:[#allocation9 + $0x370] sm:$0xff]
    %v909 = vld [vmem:[#allocation9 + $0x378] sm:$0xff]
    %v910 = vld [vmem:[#allocation9 + $0x380] sm:$0xff]
    %v911 = vld [vmem:[#allocation9 + $0x388] sm:$0xff]
    %v912 = vld [vmem:[#allocation9 + $0x390] sm:$0xff]
    %v913 = vld [vmem:[#allocation9 + $0x398] sm:$0xff]
    %v914 = vld [vmem:[#allocation9 + $0x3a0] sm:$0xff]
    %v915 = vld [vmem:[#allocation9 + $0x3a8] sm:$0xff]
    %v916 = vld [vmem:[#allocation9 + $0x3b0] sm:$0xff]
    %v917 = vld [vmem:[#allocation9 + $0x3b8] sm:$0xff]
    %v918 = vld [vmem:[#allocation9 + $0x3c0] sm:$0xff]
    %v919 = vld [vmem:[#allocation9 + $0x3c8] sm:$0xff]
    %v920 = vld [vmem:[#allocation9 + $0x3d0] sm:$0xff]
    %v921 = vld [vmem:[#allocation9 + $0x3d8] sm:$0xff]
    %v922 = vld [vmem:[#allocation9 + $0x3e0] sm:$0xff]
    %v923 = vld [vmem:[#allocation9 + $0x3e8] sm:$0xff]
    %v924 = vld [vmem:[#allocation9 + $0x3f0] sm:$0xff]
    %v925 = vld [vmem:[#allocation9 + $0x3f8] sm:$0xff]
    %v926 = vld [vmem:[#allocation9 + $0x400] sm:$0xff]
    %v927 = vld [vmem:[#allocation9 + $0x408] sm:$0xff]
    %v928 = vld [vmem:[#allocation9 + $0x410] sm:$0xff]
    %v929 = vld [vmem:[#allocation9 + $0x418] sm:$0xff]
    %v930 = vld [vmem:[#allocation9 + $0x420] sm:$0xff]
    %v931 = vld [vmem:[#allocation9 + $0x428] sm:$0xff]
    %v932 = vld [vmem:[#allocation9 + $0x430] sm:$0xff]
    %v933 = vld [vmem:[#allocation9 + $0x438] sm:$0xff]
    %v934 = vld [vmem:[#allocation9 + $0x440] sm:$0xff]
    %v935 = vld [vmem:[#allocation9 + $0x448] sm:$0xff]
    %v936 = vld [vmem:[#allocation9 + $0x450] sm:$0xff]
    %v937 = vld [vmem:[#allocation9 + $0x458] sm:$0xff]
    %v938 = vld [vmem:[#allocation9 + $0x460] sm:$0xff]
    %v939 = vld [vmem:[#allocation9 + $0x468] sm:$0xff]
    %v940 = vld [vmem:[#allocation9 + $0x470] sm:$0xff]
    %v941 = vld [vmem:[#allocation9 + $0x478] sm:$0xff]
    %v942 = vld [vmem:[%s4] sm:$0x3f]
    %v944 = vlaneseq
    %v945 = vshrl.u32 %v944, 7
    %v946 = vsub.s32 0, %v945
    %v947 = vrot.slane %v942, %v946
    %v948 = vlaneseq
    %v949 = vshrl.u32 %v948, 7
    %v950 = vsub.s32 1, %v949
    %v951 = vrot.slane %v942, %v950
    %v952 = vlaneseq
    %v953 = vshrl.u32 %v952, 7
    %v954 = vsub.s32 2, %v953
    %v955 = vrot.slane %v942, %v954
    %v956 = vlaneseq
    %v957 = vshrl.u32 %v956, 7
    %v958 = vsub.s32 3, %v957
    %v959 = vrot.slane %v942, %v958
    %v960 = vlaneseq
    %v961 = vshrl.u32 %v960, 7
    %v962 = vsub.s32 4, %v961
    %v963 = vrot.slane %v942, %v962
    %v964 = vlaneseq
    %v965 = vshrl.u32 %v964, 7
    %v966 = vsub.s32 5, %v965
    %v967 = vrot.slane %v942, %v966
    %v1118 = vunpack.c.l.b16 %v798
    %v1119 = vunpack.c.h.b16 %v798
    %v1120 = vunpack.c.l.b16 %v799
    %v1121 = vunpack.c.h.b16 %v799
    %v1122 = vunpack.c.l.b16 %v800
    %v1123 = vunpack.c.h.b16 %v800
    %v1124 = vunpack.c.l.b16 %v801
    %v1125 = vunpack.c.h.b16 %v801
    %v1126 = vunpack.c.l.b16 %v802
    %v1127 = vunpack.c.h.b16 %v802
    %v1128 = vunpack.c.l.b16 %v803
    %v1129 = vunpack.c.h.b16 %v803
    %v1130 = vunpack.c.l.b16 %v804
    %v1131 = vunpack.c.h.b16 %v804
    %v1132 = vunpack.c.l.b16 %v805
    %v1133 = vunpack.c.h.b16 %v805
    %v1134 = vunpack.c.l.b16 %v806
    %v1135 = vunpack.c.h.b16 %v806
    %v1136 = vunpack.c.l.b16 %v807
    %v1137 = vunpack.c.h.b16 %v807
    %v1138 = vunpack.c.l.b16 %v808
    %v1139 = vunpack.c.h.b16 %v808
    %v1140 = vunpack.c.l.b16 %v809
    %v1141 = vunpack.c.h.b16 %v809
    %v1142 = vunpack.c.l.b16 %v810
    %v1143 = vunpack.c.h.b16 %v810
    %v1144 = vunpack.c.l.b16 %v811
    %v1145 = vunpack.c.h.b16 %v811
    %v1146 = vunpack.c.l.b16 %v812
    %v1147 = vunpack.c.h.b16 %v812
    %v1148 = vunpack.c.l.b16 %v813
    %v1149 = vunpack.c.h.b16 %v813
    %v1150 = vunpack.c.l.b16 %v814
    %v1151 = vunpack.c.h.b16 %v814
    %v1152 = vunpack.c.l.b16 %v815
    %v1153 = vunpack.c.h.b16 %v815
    %v1154 = vunpack.c.l.b16 %v816
    %v1155 = vunpack.c.h.b16 %v816
    %v1156 = vunpack.c.l.b16 %v817
    %v1157 = vunpack.c.h.b16 %v817
    %v1158 = vunpack.c.l.b16 %v818
    %v1159 = vunpack.c.h.b16 %v818
    %v1160 = vunpack.c.l.b16 %v819
    %v1161 = vunpack.c.h.b16 %v819
    %v1162 = vunpack.c.l.b16 %v820
    %v1163 = vunpack.c.h.b16 %v820
    %v1164 = vunpack.c.l.b16 %v821
    %v1165 = vunpack.c.h.b16 %v821
    %v1166 = vunpack.c.l.b16 %v822
    %v1167 = vunpack.c.h.b16 %v822
    %v1168 = vunpack.c.l.b16 %v823
    %v1169 = vunpack.c.h.b16 %v823
    %v1170 = vunpack.c.l.b16 %v824
    %v1171 = vunpack.c.h.b16 %v824
    %v1172 = vunpack.c.l.b16 %v825
    %v1173 = vunpack.c.h.b16 %v825
    %v1174 = vunpack.c.l.b16 %v826
    %v1175 = vunpack.c.h.b16 %v826
    %v1176 = vunpack.c.l.b16 %v827
    %v1177 = vunpack.c.h.b16 %v827
    %v1178 = vunpack.c.l.b16 %v828
    %v1179 = vunpack.c.h.b16 %v828
    %v1180 = vunpack.c.l.b16 %v829
    %v1181 = vunpack.c.h.b16 %v829
    %v1182 = vunpack.c.l.b16 %v830
    %v1183 = vunpack.c.h.b16 %v830
    %v1184 = vunpack.c.l.b16 %v831
    %v1185 = vunpack.c.h.b16 %v831
    %v1186 = vunpack.c.l.b16 %v832
    %v1187 = vunpack.c.h.b16 %v832
    %v1188 = vunpack.c.l.b16 %v833
    %v1189 = vunpack.c.h.b16 %v833
    %v1190 = vunpack.c.l.b16 %v834
    %v1191 = vunpack.c.h.b16 %v834
    %v1192 = vunpack.c.l.b16 %v835
    %v1193 = vunpack.c.h.b16 %v835
    %v1194 = vunpack.c.l.b16 %v836
    %v1195 = vunpack.c.h.b16 %v836
    %v1196 = vunpack.c.l.b16 %v837
    %v1197 = vunpack.c.h.b16 %v837
    %v1198 = vunpack.c.l.b16 %v838
    %v1199 = vunpack.c.h.b16 %v838
    %v1200 = vunpack.c.l.b16 %v839
    %v1201 = vunpack.c.h.b16 %v839
    %v1202 = vunpack.c.l.b16 %v840
    %v1203 = vunpack.c.h.b16 %v840
    %v1204 = vunpack.c.l.b16 %v841
    %v1205 = vunpack.c.h.b16 %v841
    %v1206 = vunpack.c.l.b16 %v842
    %v1207 = vunpack.c.h.b16 %v842
    %v1208 = vunpack.c.l.b16 %v843
    %v1209 = vunpack.c.h.b16 %v843
    %v1210 = vunpack.c.l.b16 %v844
    %v1211 = vunpack.c.h.b16 %v844
    %v1212 = vunpack.c.l.b16 %v845
    %v1213 = vunpack.c.h.b16 %v845
    %v1214 = vunpack.c.l.b16 %v846
    %v1215 = vunpack.c.h.b16 %v846
    %v1216 = vunpack.c.l.b16 %v847
    %v1217 = vunpack.c.h.b16 %v847
    %v1218 = vunpack.c.l.b16 %v848
    %v1219 = vunpack.c.h.b16 %v848
    %v1220 = vunpack.c.l.b16 %v849
    %v1221 = vunpack.c.h.b16 %v849
    %v1222 = vunpack.c.l.b16 %v850
    %v1223 = vunpack.c.h.b16 %v850
    %v1224 = vunpack.c.l.b16 %v851
    %v1225 = vunpack.c.h.b16 %v851
    %v1226 = vunpack.c.l.b16 %v852
    %v1227 = vunpack.c.h.b16 %v852
    %v1228 = vunpack.c.l.b16 %v853
    %v1229 = vunpack.c.h.b16 %v853
    %v1230 = vunpack.c.l.b16 %v854
    %v1231 = vunpack.c.h.b16 %v854
    %v1232 = vunpack.c.l.b16 %v855
    %v1233 = vunpack.c.h.b16 %v855
    %v1234 = vunpack.c.l.b16 %v856
    %v1235 = vunpack.c.h.b16 %v856
    %v1236 = vunpack.c.l.b16 %v857
    %v1237 = vunpack.c.h.b16 %v857
    %v1238 = vunpack.c.l.b16 %v858
    %v1239 = vunpack.c.h.b16 %v858
    %v1240 = vunpack.c.l.b16 %v859
    %v1241 = vunpack.c.h.b16 %v859
    %v1242 = vunpack.c.l.b16 %v860
    %v1243 = vunpack.c.h.b16 %v860
    %v1244 = vunpack.c.l.b16 %v861
    %v1245 = vunpack.c.h.b16 %v861
    %v1246 = vunpack.c.l.b16 %v862
    %v1247 = vunpack.c.h.b16 %v862
    %v1248 = vunpack.c.l.b16 %v863
    %v1249 = vunpack.c.h.b16 %v863
    %v1250 = vunpack.c.l.b16 %v864
    %v1251 = vunpack.c.h.b16 %v864
    %v1252 = vunpack.c.l.b16 %v865
    %v1253 = vunpack.c.h.b16 %v865
    %v1254 = vunpack.c.l.b16 %v866
    %v1255 = vunpack.c.h.b16 %v866
    %v1256 = vunpack.c.l.b16 %v867
    %v1257 = vunpack.c.h.b16 %v867
    %v1258 = vunpack.c.l.b16 %v868
    %v1259 = vunpack.c.h.b16 %v868
    %v1260 = vunpack.c.l.b16 %v869
    %v1261 = vunpack.c.h.b16 %v869
    %v1262 = vunpack.c.l.b16 %v870
    %v1263 = vunpack.c.h.b16 %v870
    %v1264 = vunpack.c.l.b16 %v871
    %v1265 = vunpack.c.h.b16 %v871
    %v1266 = vunpack.c.l.b16 %v872
    %v1267 = vunpack.c.h.b16 %v872
    %v1268 = vunpack.c.l.b16 %v873
    %v1269 = vunpack.c.h.b16 %v873
    %v1270 = vunpack.c.l.b16 %v874
    %v1271 = vunpack.c.h.b16 %v874
    %v1272 = vunpack.c.l.b16 %v875
    %v1273 = vunpack.c.h.b16 %v875
    %v1274 = vunpack.c.l.b16 %v876
    %v1275 = vunpack.c.h.b16 %v876
    %v1276 = vunpack.c.l.b16 %v877
    %v1277 = vunpack.c.h.b16 %v877
    %v1278 = vunpack.c.l.b16 %v878
    %v1279 = vunpack.c.h.b16 %v878
    %v1280 = vunpack.c.l.b16 %v879
    %v1281 = vunpack.c.h.b16 %v879
    %v1282 = vunpack.c.l.b16 %v880
    %v1283 = vunpack.c.h.b16 %v880
    %v1284 = vunpack.c.l.b16 %v881
    %v1285 = vunpack.c.h.b16 %v881
    %v1286 = vunpack.c.l.b16 %v882
    %v1287 = vunpack.c.h.b16 %v882
    %v1288 = vunpack.c.l.b16 %v883
    %v1289 = vunpack.c.h.b16 %v883
    %v1290 = vunpack.c.l.b16 %v884
    %v1291 = vunpack.c.h.b16 %v884
    %v1292 = vunpack.c.l.b16 %v885
    %v1293 = vunpack.c.h.b16 %v885
    %v1294 = vunpack.c.l.b16 %v886
    %v1295 = vunpack.c.h.b16 %v886
    %v1296 = vunpack.c.l.b16 %v887
    %v1297 = vunpack.c.h.b16 %v887
    %v1298 = vunpack.c.l.b16 %v888
    %v1299 = vunpack.c.h.b16 %v888
    %v1300 = vunpack.c.l.b16 %v889
    %v1301 = vunpack.c.h.b16 %v889
    %v1302 = vunpack.c.l.b16 %v890
    %v1303 = vunpack.c.h.b16 %v890
    %v1304 = vunpack.c.l.b16 %v891
    %v1305 = vunpack.c.h.b16 %v891
    %v1306 = vunpack.c.l.b16 %v892
    %v1307 = vunpack.c.h.b16 %v892
    %v1308 = vunpack.c.l.b16 %v893
    %v1309 = vunpack.c.h.b16 %v893
    %v1310 = vunpack.c.l.b16 %v894
    %v1311 = vunpack.c.h.b16 %v894
    %v1312 = vunpack.c.l.b16 %v895
    %v1313 = vunpack.c.h.b16 %v895
    %v1314 = vunpack.c.l.b16 %v896
    %v1315 = vunpack.c.h.b16 %v896
    %v1316 = vunpack.c.l.b16 %v897
    %v1317 = vunpack.c.h.b16 %v897
    %v1318 = vunpack.c.l.b16 %v898
    %v1319 = vunpack.c.h.b16 %v898
    %v1320 = vunpack.c.l.b16 %v899
    %v1321 = vunpack.c.h.b16 %v899
    %v1322 = vunpack.c.l.b16 %v900
    %v1323 = vunpack.c.h.b16 %v900
    %v1324 = vunpack.c.l.b16 %v901
    %v1325 = vunpack.c.h.b16 %v901
    %v1326 = vunpack.c.l.b16 %v902
    %v1327 = vunpack.c.h.b16 %v902
    %v1328 = vunpack.c.l.b16 %v903
    %v1329 = vunpack.c.h.b16 %v903
    %v1330 = vunpack.c.l.b16 %v904
    %v1331 = vunpack.c.h.b16 %v904
    %v1332 = vunpack.c.l.b16 %v905
    %v1333 = vunpack.c.h.b16 %v905
    %v1334 = vunpack.c.l.b16 %v906
    %v1335 = vunpack.c.h.b16 %v906
    %v1336 = vunpack.c.l.b16 %v907
    %v1337 = vunpack.c.h.b16 %v907
    %v1338 = vunpack.c.l.b16 %v908
    %v1339 = vunpack.c.h.b16 %v908
    %v1340 = vunpack.c.l.b16 %v909
    %v1341 = vunpack.c.h.b16 %v909
    %v1342 = vunpack.c.l.b16 %v910
    %v1343 = vunpack.c.h.b16 %v910
    %v1344 = vunpack.c.l.b16 %v911
    %v1345 = vunpack.c.h.b16 %v911
    %v1346 = vunpack.c.l.b16 %v912
    %v1347 = vunpack.c.h.b16 %v912
    %v1348 = vunpack.c.l.b16 %v913
    %v1349 = vunpack.c.h.b16 %v913
    %v1350 = vunpack.c.l.b16 %v914
    %v1351 = vunpack.c.h.b16 %v914
    %v1352 = vunpack.c.l.b16 %v915
    %v1353 = vunpack.c.h.b16 %v915
    %v1354 = vunpack.c.l.b16 %v916
    %v1355 = vunpack.c.h.b16 %v916
    %v1356 = vunpack.c.l.b16 %v917
    %v1357 = vunpack.c.h.b16 %v917
    %v1358 = vunpack.c.l.b16 %v918
    %v1359 = vunpack.c.h.b16 %v918
    %v1360 = vunpack.c.l.b16 %v919
    %v1361 = vunpack.c.h.b16 %v919
    %v1362 = vunpack.c.l.b16 %v920
    %v1363 = vunpack.c.h.b16 %v920
    %v1364 = vunpack.c.l.b16 %v921
    %v1365 = vunpack.c.h.b16 %v921
    %v1366 = vunpack.c.l.b16 %v922
    %v1367 = vunpack.c.h.b16 %v922
    %v1368 = vunpack.c.l.b16 %v923
    %v1369 = vunpack.c.h.b16 %v923
    %v1370 = vunpack.c.l.b16 %v924
    %v1371 = vunpack.c.h.b16 %v924
    %v1372 = vunpack.c.l.b16 %v925
    %v1373 = vunpack.c.h.b16 %v925
    %v1374 = vunpack.c.l.b16 %v926
    %v1375 = vunpack.c.h.b16 %v926
    %v1376 = vunpack.c.l.b16 %v927
    %v1377 = vunpack.c.h.b16 %v927
    %v1378 = vunpack.c.l.b16 %v928
    %v1379 = vunpack.c.h.b16 %v928
    %v1380 = vunpack.c.l.b16 %v929
    %v1381 = vunpack.c.h.b16 %v929
    %v1382 = vunpack.c.l.b16 %v930
    %v1383 = vunpack.c.h.b16 %v930
    %v1384 = vunpack.c.l.b16 %v931
    %v1385 = vunpack.c.h.b16 %v931
    %v1386 = vunpack.c.l.b16 %v932
    %v1387 = vunpack.c.h.b16 %v932
    %v1388 = vunpack.c.l.b16 %v933
    %v1389 = vunpack.c.h.b16 %v933
    %v1390 = vunpack.c.l.b16 %v934
    %v1391 = vunpack.c.h.b16 %v934
    %v1392 = vunpack.c.l.b16 %v935
    %v1393 = vunpack.c.h.b16 %v935
    %v1394 = vunpack.c.l.b16 %v936
    %v1395 = vunpack.c.h.b16 %v936
    %v1396 = vunpack.c.l.b16 %v937
    %v1397 = vunpack.c.h.b16 %v937
    %v1398 = vunpack.c.l.b16 %v938
    %v1399 = vunpack.c.h.b16 %v938
    %v1400 = vunpack.c.l.b16 %v939
    %v1401 = vunpack.c.h.b16 %v939
    %v1402 = vunpack.c.l.b16 %v940
    %v1403 = vunpack.c.h.b16 %v940
    %v1404 = vunpack.c.l.b16 %v941
    %v1405 = vunpack.c.h.b16 %v941
    %v1406 = vpack.c.b16 %v1124, %v1118
    %v1407 = vpack.c.b16 %v1125, %v1119
    %v1408 = vpack.c.b16 %v1126, %v1120
    %v1409 = vpack.c.b16 %v1127, %v1121
    %v1410 = vpack.c.b16 %v1128, %v1122
    %v1411 = vpack.c.b16 %v1129, %v1123
    %v1412 = vpack.c.b16 %v1136, %v1130
    %v1413 = vpack.c.b16 %v1137, %v1131
    %v1414 = vpack.c.b16 %v1138, %v1132
    %v1415 = vpack.c.b16 %v1139, %v1133
    %v1416 = vpack.c.b16 %v1140, %v1134
    %v1417 = vpack.c.b16 %v1141, %v1135
    %v1418 = vpack.c.b16 %v1148, %v1142
    %v1419 = vpack.c.b16 %v1149, %v1143
    %v1420 = vpack.c.b16 %v1150, %v1144
    %v1421 = vpack.c.b16 %v1151, %v1145
    %v1422 = vpack.c.b16 %v1152, %v1146
    %v1423 = vpack.c.b16 %v1153, %v1147
    %v1424 = vpack.c.b16 %v1160, %v1154
    %v1425 = vpack.c.b16 %v1161, %v1155
    %v1426 = vpack.c.b16 %v1162, %v1156
    %v1427 = vpack.c.b16 %v1163, %v1157
    %v1428 = vpack.c.b16 %v1164, %v1158
    %v1429 = vpack.c.b16 %v1165, %v1159
    %v1430 = vpack.c.b16 %v1172, %v1166
    %v1431 = vpack.c.b16 %v1173, %v1167
    %v1432 = vpack.c.b16 %v1174, %v1168
    %v1433 = vpack.c.b16 %v1175, %v1169
    %v1434 = vpack.c.b16 %v1176, %v1170
    %v1435 = vpack.c.b16 %v1177, %v1171
    %v1436 = vpack.c.b16 %v1184, %v1178
    %v1437 = vpack.c.b16 %v1185, %v1179
    %v1438 = vpack.c.b16 %v1186, %v1180
    %v1439 = vpack.c.b16 %v1187, %v1181
    %v1440 = vpack.c.b16 %v1188, %v1182
    %v1441 = vpack.c.b16 %v1189, %v1183
    %v1442 = vpack.c.b16 %v1196, %v1190
    %v1443 = vpack.c.b16 %v1197, %v1191
    %v1444 = vpack.c.b16 %v1198, %v1192
    %v1445 = vpack.c.b16 %v1199, %v1193
    %v1446 = vpack.c.b16 %v1200, %v1194
    %v1447 = vpack.c.b16 %v1201, %v1195
    %v1448 = vpack.c.b16 %v1208, %v1202
    %v1449 = vpack.c.b16 %v1209, %v1203
    %v1450 = vpack.c.b16 %v1210, %v1204
    %v1451 = vpack.c.b16 %v1211, %v1205
    %v1452 = vpack.c.b16 %v1212, %v1206
    %v1453 = vpack.c.b16 %v1213, %v1207
    %v1454 = vpack.c.b16 %v1220, %v1214
    %v1455 = vpack.c.b16 %v1221, %v1215
    %v1456 = vpack.c.b16 %v1222, %v1216
    %v1457 = vpack.c.b16 %v1223, %v1217
    %v1458 = vpack.c.b16 %v1224, %v1218
    %v1459 = vpack.c.b16 %v1225, %v1219
    %v1460 = vpack.c.b16 %v1232, %v1226
    %v1461 = vpack.c.b16 %v1233, %v1227
    %v1462 = vpack.c.b16 %v1234, %v1228
    %v1463 = vpack.c.b16 %v1235, %v1229
    %v1464 = vpack.c.b16 %v1236, %v1230
    %v1465 = vpack.c.b16 %v1237, %v1231
    %v1466 = vpack.c.b16 %v1244, %v1238
    %v1467 = vpack.c.b16 %v1245, %v1239
    %v1468 = vpack.c.b16 %v1246, %v1240
    %v1469 = vpack.c.b16 %v1247, %v1241
    %v1470 = vpack.c.b16 %v1248, %v1242
    %v1471 = vpack.c.b16 %v1249, %v1243
    %v1472 = vpack.c.b16 %v1256, %v1250
    %v1473 = vpack.c.b16 %v1257, %v1251
    %v1474 = vpack.c.b16 %v1258, %v1252
    %v1475 = vpack.c.b16 %v1259, %v1253
    %v1476 = vpack.c.b16 %v1260, %v1254
    %v1477 = vpack.c.b16 %v1261, %v1255
    %v1478 = vpack.c.b16 %v1268, %v1262
    %v1479 = vpack.c.b16 %v1269, %v1263
    %v1480 = vpack.c.b16 %v1270, %v1264
    %v1481 = vpack.c.b16 %v1271, %v1265
    %v1482 = vpack.c.b16 %v1272, %v1266
    %v1483 = vpack.c.b16 %v1273, %v1267
    %v1484 = vpack.c.b16 %v1280, %v1274
    %v1485 = vpack.c.b16 %v1281, %v1275
    %v1486 = vpack.c.b16 %v1282, %v1276
    %v1487 = vpack.c.b16 %v1283, %v1277
    %v1488 = vpack.c.b16 %v1284, %v1278
    %v1489 = vpack.c.b16 %v1285, %v1279
    %v1490 = vpack.c.b16 %v1292, %v1286
    %v1491 = vpack.c.b16 %v1293, %v1287
    %v1492 = vpack.c.b16 %v1294, %v1288
    %v1493 = vpack.c.b16 %v1295, %v1289
    %v1494 = vpack.c.b16 %v1296, %v1290
    %v1495 = vpack.c.b16 %v1297, %v1291
    %v1496 = vpack.c.b16 %v1304, %v1298
    %v1497 = vpack.c.b16 %v1305, %v1299
    %v1498 = vpack.c.b16 %v1306, %v1300
    %v1499 = vpack.c.b16 %v1307, %v1301
    %v1500 = vpack.c.b16 %v1308, %v1302
    %v1501 = vpack.c.b16 %v1309, %v1303
    %v1502 = vpack.c.b16 %v1316, %v1310
    %v1503 = vpack.c.b16 %v1317, %v1311
    %v1504 = vpack.c.b16 %v1318, %v1312
    %v1505 = vpack.c.b16 %v1319, %v1313
    %v1506 = vpack.c.b16 %v1320, %v1314
    %v1507 = vpack.c.b16 %v1321, %v1315
    %v1508 = vpack.c.b16 %v1328, %v1322
    %v1509 = vpack.c.b16 %v1329, %v1323
    %v1510 = vpack.c.b16 %v1330, %v1324
    %v1511 = vpack.c.b16 %v1331, %v1325
    %v1512 = vpack.c.b16 %v1332, %v1326
    %v1513 = vpack.c.b16 %v1333, %v1327
    %v1514 = vpack.c.b16 %v1340, %v1334
    %v1515 = vpack.c.b16 %v1341, %v1335
    %v1516 = vpack.c.b16 %v1342, %v1336
    %v1517 = vpack.c.b16 %v1343, %v1337
    %v1518 = vpack.c.b16 %v1344, %v1338
    %v1519 = vpack.c.b16 %v1345, %v1339
    %v1520 = vpack.c.b16 %v1352, %v1346
    %v1521 = vpack.c.b16 %v1353, %v1347
    %v1522 = vpack.c.b16 %v1354, %v1348
    %v1523 = vpack.c.b16 %v1355, %v1349
    %v1524 = vpack.c.b16 %v1356, %v1350
    %v1525 = vpack.c.b16 %v1357, %v1351
    %v1526 = vpack.c.b16 %v1364, %v1358
    %v1527 = vpack.c.b16 %v1365, %v1359
    %v1528 = vpack.c.b16 %v1366, %v1360
    %v1529 = vpack.c.b16 %v1367, %v1361
    %v1530 = vpack.c.b16 %v1368, %v1362
    %v1531 = vpack.c.b16 %v1369, %v1363
    %v1532 = vpack.c.b16 %v1376, %v1370
    %v1533 = vpack.c.b16 %v1377, %v1371
    %v1534 = vpack.c.b16 %v1378, %v1372
    %v1535 = vpack.c.b16 %v1379, %v1373
    %v1536 = vpack.c.b16 %v1380, %v1374
    %v1537 = vpack.c.b16 %v1381, %v1375
    %v1538 = vpack.c.b16 %v1388, %v1382
    %v1539 = vpack.c.b16 %v1389, %v1383
    %v1540 = vpack.c.b16 %v1390, %v1384
    %v1541 = vpack.c.b16 %v1391, %v1385
    %v1542 = vpack.c.b16 %v1392, %v1386
    %v1543 = vpack.c.b16 %v1393, %v1387
    %v1544 = vpack.c.b16 %v1400, %v1394
    %v1545 = vpack.c.b16 %v1401, %v1395
    %v1546 = vpack.c.b16 %v1402, %v1396
    %v1547 = vpack.c.b16 %v1403, %v1397
    %v1548 = vpack.c.b16 %v1404, %v1398
    %v1549 = vpack.c.b16 %v1405, %v1399
    %1694 = vmatprep.subr.bf16.mxu0 %v1407
    %1695 = vmatpush1.bf16.msra.mxu0 %v1406
    %1696 = vmatprep.subr.bf16.mxu0 %v1413
    %1697 = vmatpush1.bf16.msra.mxu0 %v1412
    %1698 = vmatprep.subr.bf16.mxu0 %v1419
    %1699 = vmatpush1.bf16.msra.mxu0 %v1418
    %1700 = vmatprep.subr.bf16.mxu0 %v1425
    %1701 = vmatpush1.bf16.msra.mxu0 %v1424
    %1702 = vmatprep.subr.bf16.mxu0 %v1431
    %1703 = vmatpush1.bf16.msra.mxu0 %v1430
    %1704 = vmatprep.subr.bf16.mxu0 %v1437
    %1705 = vmatpush1.bf16.msra.mxu0 %v1436
    %1706 = vmatprep.subr.bf16.mxu0 %v1443
    %1707 = vmatpush1.bf16.msra.mxu0 %v1442
    %1708 = vmatprep.subr.bf16.mxu0 %v1449
    %1709 = vmatpush1.bf16.msra.mxu0 %v1448
    %1710 = vmatprep.subr.bf16.mxu0 %v1455
    %1711 = vmatpush1.bf16.msra.mxu0 %v1454
    %1712 = vmatprep.subr.bf16.mxu0 %v1461
    %1713 = vmatpush1.bf16.msra.mxu0 %v1460
    %1714 = vmatprep.subr.bf16.mxu0 %v1467
    %1715 = vmatpush1.bf16.msra.mxu0 %v1466
    %1716 = vmatprep.subr.bf16.mxu0 %v1473
    %1717 = vmatpush1.bf16.msra.mxu0 %v1472
    %1718 = vmatprep.subr.bf16.mxu0 %v1479
    %1719 = vmatpush1.bf16.msra.mxu0 %v1478
    %1720 = vmatprep.subr.bf16.mxu0 %v1485
    %1721 = vmatpush1.bf16.msra.mxu0 %v1484
    %1722 = vmatprep.subr.bf16.mxu0 %v1491
    %1723 = vmatpush1.bf16.msra.mxu0 %v1490
    %1724 = vmatprep.subr.bf16.mxu0 %v1497
    %1725 = vmatpush1.bf16.msra.mxu0 %v1496
    %1726 = vmatprep.mubr.bf16.mxu0 %v796
    %1727 = vmatmul.mubr.bf16.gmra.mrb[0].mxu0 %v795
    %v1728 = vpop.f32.mrb[0].mxu0
    %v1729 = vadd.f32 %v947, %v1728
    %v1730 = vpop.f32.mrb[0].mxu0
    %v1731 = vadd.f32 %v951, %v1730
    %v1732 = vpop.f32.mrb[0].mxu0
    %v1733 = vpop.f32.mrb[0].mxu0
    %1734 = vdwg.mxu0
    %1735 = vmatprep.subr.bf16.mxu0 %v1503
    %1736 = vmatpush1.bf16.msra.mxu0 %v1502
    %1737 = vmatprep.subr.bf16.mxu0 %v1509
    %1738 = vmatpush1.bf16.msra.mxu0 %v1508
    %1739 = vmatprep.subr.bf16.mxu0 %v1515
    %1740 = vmatpush1.bf16.msra.mxu0 %v1514
    %1741 = vmatprep.subr.bf16.mxu0 %v1521
    %1742 = vmatpush1.bf16.msra.mxu0 %v1520
    %1743 = vmatprep.subr.bf16.mxu0 %v1527
    %1744 = vmatpush1.bf16.msra.mxu0 %v1526
    %1745 = vmatprep.subr.bf16.mxu0 %v1533
    %1746 = vmatpush1.bf16.msra.mxu0 %v1532
    %1747 = vmatprep.subr.bf16.mxu0 %v1539
    %1748 = vmatpush1.bf16.msra.mxu0 %v1538
    %1749 = vmatprep.subr.bf16.mxu0 %v1545
    %1750 = vmatpush1.bf16.msra.mxu0 %v1544
    %1751 = vmatprep.subr.bf16.mxu0 0
    %1752 = vmatpush1.bf16.msra.mxu0 0
    %1753 = vmatprep.subr.bf16.mxu0 0
    %1754 = vmatpush1.bf16.msra.mxu0 0
    %1755 = vmatprep.subr.bf16.mxu0 0
    %1756 = vmatpush1.bf16.msra.mxu0 0
    %1757 = vmatprep.subr.bf16.mxu0 0
    %1758 = vmatpush1.bf16.msra.mxu0 0
    %1759 = vmatprep.subr.bf16.mxu0 0
    %1760 = vmatpush1.bf16.msra.mxu0 0
    %1761 = vmatprep.subr.bf16.mxu0 0
    %1762 = vmatpush1.bf16.msra.mxu0 0
    %1763 = vmatprep.subr.bf16.mxu0 0
    %1764 = vmatpush1.bf16.msra.mxu0 0
    %1765 = vmatprep.subr.bf16.mxu0 0
    %1766 = vmatpush1.bf16.msra.mxu0 0
    %1767 = vmatprep.mubr.bf16.mxu0 0
    %1768 = vmatmul.mubr.bf16.gmra.mrb[0].mxu0 %v797
    %v1769 = vpop.f32.mrb[0].mxu0
    %v1770 = vadd.f32 %v1729, %v1769
    %v1771 = vpop.f32.mrb[0].mxu0
    %v1772 = vadd.f32 %v1731, %v1771
    %v1773 = vpop.f32.mrb[0].mxu0
    %v1774 = vpop.f32.mrb[0].mxu0
    %1775 = vdwg.mxu0
    %1776 = vmatprep.subr.bf16.mxu0 %v1409
    %1777 = vmatpush1.bf16.msra.mxu0 %v1408
    %1778 = vmatprep.subr.bf16.mxu0 %v1415
    %1779 = vmatpush1.bf16.msra.mxu0 %v1414
    %1780 = vmatprep.subr.bf16.mxu0 %v1421
    %1781 = vmatpush1.bf16.msra.mxu0 %v1420
    %1782 = vmatprep.subr.bf16.mxu0 %v1427
    %1783 = vmatpush1.bf16.msra.mxu0 %v1426
    %1784 = vmatprep.subr.bf16.mxu0 %v1433
    %1785 = vmatpush1.bf16.msra.mxu0 %v1432
    %1786 = vmatprep.subr.bf16.mxu0 %v1439
    %1787 = vmatpush1.bf16.msra.mxu0 %v1438
    %1788 = vmatprep.subr.bf16.mxu0 %v1445
    %1789 = vmatpush1.bf16.msra.mxu0 %v1444
    %1790 = vmatprep.subr.bf16.mxu0 %v1451
    %1791 = vmatpush1.bf16.msra.mxu0 %v1450
    %1792 = vmatprep.subr.bf16.mxu0 %v1457
    %1793 = vmatpush1.bf16.msra.mxu0 %v1456
    %1794 = vmatprep.subr.bf16.mxu0 %v1463
    %1795 = vmatpush1.bf16.msra.mxu0 %v1462
    %1796 = vmatprep.subr.bf16.mxu0 %v1469
    %1797 = vmatpush1.bf16.msra.mxu0 %v1468
    %1798 = vmatprep.subr.bf16.mxu0 %v1475
    %1799 = vmatpush1.bf16.msra.mxu0 %v1474
    %1800 = vmatprep.subr.bf16.mxu0 %v1481
    %1801 = vmatpush1.bf16.msra.mxu0 %v1480
    %1802 = vmatprep.subr.bf16.mxu0 %v1487
    %1803 = vmatpush1.bf16.msra.mxu0 %v1486
    %1804 = vmatprep.subr.bf16.mxu0 %v1493
    %1805 = vmatpush1.bf16.msra.mxu0 %v1492
    %1806 = vmatprep.subr.bf16.mxu0 %v1499
    %1807 = vmatpush1.bf16.msra.mxu0 %v1498
    %1808 = vmatprep.mubr.bf16.mxu0 %v796
    %1809 = vmatmul.mubr.bf16.gmra.mrb[0].mxu0 %v795
    %v1810 = vpop.f32.mrb[0].mxu0
    %v1811 = vadd.f32 %v955, %v1810
    %v1812 = vpop.f32.mrb[0].mxu0
    %v1813 = vadd.f32 %v959, %v1812
    %v1814 = vpop.f32.mrb[0].mxu0
    %v1815 = vpop.f32.mrb[0].mxu0
    %1816 = vdwg.mxu0
    %1817 = vmatprep.subr.bf16.mxu0 %v1505
    %1818 = vmatpush1.bf16.msra.mxu0 %v1504
    %1819 = vmatprep.subr.bf16.mxu0 %v1511
    %1820 = vmatpush1.bf16.msra.mxu0 %v1510
    %1821 = vmatprep.subr.bf16.mxu0 %v1517
    %1822 = vmatpush1.bf16.msra.mxu0 %v1516
    %1823 = vmatprep.subr.bf16.mxu0 %v1523
    %1824 = vmatpush1.bf16.msra.mxu0 %v1522
    %1825 = vmatprep.subr.bf16.mxu0 %v1529
    %1826 = vmatpush1.bf16.msra.mxu0 %v1528
    %1827 = vmatprep.subr.bf16.mxu0 %v1535
    %1828 = vmatpush1.bf16.msra.mxu0 %v1534
    %1829 = vmatprep.subr.bf16.mxu0 %v1541
    %1830 = vmatpush1.bf16.msra.mxu0 %v1540
    %1831 = vmatprep.subr.bf16.mxu0 %v1547
    %1832 = vmatpush1.bf16.msra.mxu0 %v1546
    %1833 = vmatprep.subr.bf16.mxu0 0
    %1834 = vmatpush1.bf16.msra.mxu0 0
    %1835 = vmatprep.subr.bf16.mxu0 0
    %1836 = vmatpush1.bf16.msra.mxu0 0
    %1837 = vmatprep.subr.bf16.mxu0 0
    %1838 = vmatpush1.bf16.msra.mxu0 0
    %1839 = vmatprep.subr.bf16.mxu0 0
    %1840 = vmatpush1.bf16.msra.mxu0 0
    %1841 = vmatprep.subr.bf16.mxu0 0
    %1842 = vmatpush1.bf16.msra.mxu0 0
    %1843 = vmatprep.subr.bf16.mxu0 0
    %1844 = vmatpush1.bf16.msra.mxu0 0
    %1845 = vmatprep.subr.bf16.mxu0 0
    %1846 = vmatpush1.bf16.msra.mxu0 0
    %1847 = vmatprep.subr.bf16.mxu0 0
    %1848 = vmatpush1.bf16.msra.mxu0 0
    %1849 = vmatprep.mubr.bf16.mxu0 0
    %1850 = vmatmul.mubr.bf16.gmra.mrb[0].mxu0 %v797
    %v1851 = vpop.f32.mrb[0].mxu0
    %v1852 = vadd.f32 %v1811, %v1851
    %v1853 = vpop.f32.mrb[0].mxu0
    %v1854 = vadd.f32 %v1813, %v1853
    %v1855 = vpop.f32.mrb[0].mxu0
    %v1856 = vpop.f32.mrb[0].mxu0
    %1857 = vdwg.mxu0
    %1858 = vmatprep.subr.bf16.mxu0 %v1411
    %1859 = vmatpush1.bf16.msra.mxu0 %v1410
    %1860 = vmatprep.subr.bf16.mxu0 %v1417
    %1861 = vmatpush1.bf16.msra.mxu0 %v1416
    %1862 = vmatprep.subr.bf16.mxu0 %v1423
    %1863 = vmatpush1.bf16.msra.mxu0 %v1422
    %1864 = vmatprep.subr.bf16.mxu0 %v1429
    %1865 = vmatpush1.bf16.msra.mxu0 %v1428
    %1866 = vmatprep.subr.bf16.mxu0 %v1435
    %1867 = vmatpush1.bf16.msra.mxu0 %v1434
    %1868 = vmatprep.subr.bf16.mxu0 %v1441
    %1869 = vmatpush1.bf16.msra.mxu0 %v1440
    %1870 = vmatprep.subr.bf16.mxu0 %v1447
    %1871 = vmatpush1.bf16.msra.mxu0 %v1446
    %1872 = vmatprep.subr.bf16.mxu0 %v1453
    %1873 = vmatpush1.bf16.msra.mxu0 %v1452
    %1874 = vmatprep.subr.bf16.mxu0 %v1459
    %1875 = vmatpush1.bf16.msra.mxu0 %v1458
    %1876 = vmatprep.subr.bf16.mxu0 %v1465
    %1877 = vmatpush1.bf16.msra.mxu0 %v1464
    %1878 = vmatprep.subr.bf16.mxu0 %v1471
    %1879 = vmatpush1.bf16.msra.mxu0 %v1470
    %1880 = vmatprep.subr.bf16.mxu0 %v1477
    %1881 = vmatpush1.bf16.msra.mxu0 %v1476
    %1882 = vmatprep.subr.bf16.mxu0 %v1483
    %1883 = vmatpush1.bf16.msra.mxu0 %v1482
    %1884 = vmatprep.subr.bf16.mxu0 %v1489
    %1885 = vmatpush1.bf16.msra.mxu0 %v1488
    %1886 = vmatprep.subr.bf16.mxu0 %v1495
    %1887 = vmatpush1.bf16.msra.mxu0 %v1494
    %1888 = vmatprep.subr.bf16.mxu0 %v1501
    %1889 = vmatpush1.bf16.msra.mxu0 %v1500
    %1890 = vmatprep.mubr.bf16.mxu0 %v796
    %1891 = vmatmul.mubr.bf16.gmra.mrb[0].mxu0 %v795
    %v1892 = vpop.f32.mrb[0].mxu0
    %v1893 = vadd.f32 %v963, %v1892
    %v1894 = vpop.f32.mrb[0].mxu0
    %v1895 = vadd.f32 %v967, %v1894
    %v1896 = vpop.f32.mrb[0].mxu0
    %v1897 = vpop.f32.mrb[0].mxu0
    %1898 = vdwg.mxu0
    %1899 = vmatprep.subr.bf16.mxu0 %v1507
    %1900 = vmatpush1.bf16.msra.mxu0 %v1506
    %1901 = vmatprep.subr.bf16.mxu0 %v1513
    %1902 = vmatpush1.bf16.msra.mxu0 %v1512
    %1903 = vmatprep.subr.bf16.mxu0 %v1519
    %1904 = vmatpush1.bf16.msra.mxu0 %v1518
    %1905 = vmatprep.subr.bf16.mxu0 %v1525
    %1906 = vmatpush1.bf16.msra.mxu0 %v1524
    %1907 = vmatprep.subr.bf16.mxu0 %v1531
    %1908 = vmatpush1.bf16.msra.mxu0 %v1530
    %1909 = vmatprep.subr.bf16.mxu0 %v1537
    %1910 = vmatpush1.bf16.msra.mxu0 %v1536
    %1911 = vmatprep.subr.bf16.mxu0 %v1543
    %1912 = vmatpush1.bf16.msra.mxu0 %v1542
    %1913 = vmatprep.subr.bf16.mxu0 %v1549
    %1914 = vmatpush1.bf16.msra.mxu0 %v1548
    %1915 = vmatprep.subr.bf16.mxu0 0
    %1916 = vmatpush1.bf16.msra.mxu0 0
    %1917 = vmatprep.subr.bf16.mxu0 0
    %1918 = vmatpush1.bf16.msra.mxu0 0
    %1919 = vmatprep.subr.bf16.mxu0 0
    %1920 = vmatpush1.bf16.msra.mxu0 0
    %1921 = vmatprep.subr.bf16.mxu0 0
    %1922 = vmatpush1.bf16.msra.mxu0 0
    %1923 = vmatprep.subr.bf16.mxu0 0
    %1924 = vmatpush1.bf16.msra.mxu0 0
    %1925 = vmatprep.subr.bf16.mxu0 0
    %1926 = vmatpush1.bf16.msra.mxu0 0
    %1927 = vmatprep.subr.bf16.mxu0 0
    %1928 = vmatpush1.bf16.msra.mxu0 0
    %1929 = vmatprep.subr.bf16.mxu0 0
    %1930 = vmatpush1.bf16.msra.mxu0 0
    %1931 = vmatprep.mubr.bf16.mxu0 0
    %1932 = vmatmul.mubr.bf16.gmra.mrb[0].mxu0 %v797
    %v1933 = vpop.f32.mrb[0].mxu0
    %v1934 = vadd.f32 %v1893, %v1933
    %v1935 = vpop.f32.mrb[0].mxu0
    %v1936 = vadd.f32 %v1895, %v1935
    %v1937 = vpop.f32.mrb[0].mxu0
    %v1938 = vpop.f32.mrb[0].mxu0
    %1939 = vdwg.mxu0
    %v1940 = vtanh.pop %v1770
    %v1941 = vtanh.pop %v1772
    %v1942 = vtanh.pop %v1852
    %v1943 = vtanh.pop %v1854
    %v1944 = vtanh.pop %v1934
    %v1945 = vtanh.pop %v1936
    %v1946 = vpack.c.bf16 %v1940, %v1940
    %v1947 = vpack.c.bf16 %v1941, %v1941
    %v1948 = vpack.c.bf16 %v1942, %v1942
    %v1949 = vpack.c.bf16 %v1943, %v1943
    %v1950 = vpack.c.bf16 %v1944, %v1944
    %v1951 = vpack.c.bf16 %v1945, %v1945
    %v1952 = vld [vmem:[#allocation11] sm:$0xff]
    %v1953 = vld [vmem:[#allocation11 + $0x8] sm:$0xf]
    %v1954 = vld [vmem:[#allocation11 + $0xc] sm:$0xff]
    %v1955 = vld [vmem:[#allocation11 + $0x14] sm:$0xf]
    %v1956 = vld [vmem:[#allocation11 + $0x18] sm:$0xff]
    %v1957 = vld [vmem:[#allocation11 + $0x20] sm:$0xf]
    %v1958 = vld [vmem:[#allocation11 + $0x24] sm:$0xff]
    %v1959 = vld [vmem:[#allocation11 + $0x2c] sm:$0xf]
    %v1960 = vld [vmem:[#allocation11 + $0x30] sm:$0xff]
    %v1961 = vld [vmem:[#allocation11 + $0x38] sm:$0xf]
    %v1962 = vld [vmem:[#allocation11 + $0x3c] sm:$0xff]
    %v1963 = vld [vmem:[#allocation11 + $0x44] sm:$0xf]
    %v1964 = vld [vmem:[#allocation11 + $0x48] sm:$0xff]
    %v1965 = vld [vmem:[#allocation11 + $0x50] sm:$0xf]
    %v1966 = vld [vmem:[#allocation11 + $0x54] sm:$0xff]
    %v1967 = vld [vmem:[#allocation11 + $0x5c] sm:$0xf]
    %v1968 = vld [vmem:[#allocation11 + $0x60] sm:$0xff]
    %v1969 = vld [vmem:[#allocation11 + $0x68] sm:$0xf]
    %v1970 = vld [vmem:[#allocation11 + $0x6c] sm:$0xff]
    %v1971 = vld [vmem:[#allocation11 + $0x74] sm:$0xf]
    %v1972 = vld [vmem:[#allocation11 + $0x78] sm:$0xff]
    %v1973 = vld [vmem:[#allocation11 + $0x80] sm:$0xf]
    %v1974 = vld [vmem:[#allocation11 + $0x84] sm:$0xff]
    %v1975 = vld [vmem:[#allocation11 + $0x8c] sm:$0xf]
    %v1976 = vld [vmem:[#allocation11 + $0x90] sm:$0xff]
    %v1977 = vld [vmem:[#allocation11 + $0x98] sm:$0xf]
    %v1978 = vld [vmem:[#allocation11 + $0x9c] sm:$0xff]
    %v1979 = vld [vmem:[#allocation11 + $0xa4] sm:$0xf]
    %v1980 = vld [vmem:[#allocation11 + $0xa8] sm:$0xff]
    %v1981 = vld [vmem:[#allocation11 + $0xb0] sm:$0xf]
    %v1982 = vld [vmem:[#allocation11 + $0xb4] sm:$0xff]
    %v1983 = vld [vmem:[#allocation11 + $0xbc] sm:$0xf]
    %v1984 = vld [vmem:[#allocation11 + $0xc0] sm:$0xff]
    %v1985 = vld [vmem:[#allocation11 + $0xc8] sm:$0xf]
    %v1986 = vld [vmem:[#allocation11 + $0xcc] sm:$0xff]
    %v1987 = vld [vmem:[#allocation11 + $0xd4] sm:$0xf]
    %v1988 = vld [vmem:[#allocation11 + $0xd8] sm:$0xff]
    %v1989 = vld [vmem:[#allocation11 + $0xe0] sm:$0xf]
    %v1990 = vld [vmem:[#allocation11 + $0xe4] sm:$0xff]
    %v1991 = vld [vmem:[#allocation11 + $0xec] sm:$0xf]
    %v1992 = vld [vmem:[#allocation11 + $0xf0] sm:$0xff]
    %v1993 = vld [vmem:[#allocation11 + $0xf8] sm:$0xf]
    %v1994 = vld [vmem:[#allocation11 + $0xfc] sm:$0xff]
    %v1995 = vld [vmem:[#allocation11 + $0x104] sm:$0xf]
    %v1996 = vld [vmem:[#allocation11 + $0x108] sm:$0xff]
    %v1997 = vld [vmem:[#allocation11 + $0x110] sm:$0xf]
    %v1998 = vld [vmem:[#allocation11 + $0x114] sm:$0xff]
    %v1999 = vld [vmem:[#allocation11 + $0x11c] sm:$0xf]
    %v2000 = vld [vmem:[#allocation11 + $0x120] sm:$0xff]
    %v2001 = vld [vmem:[#allocation11 + $0x128] sm:$0xf]
    %v2002 = vld [vmem:[#allocation11 + $0x12c] sm:$0xff]
    %v2003 = vld [vmem:[#allocation11 + $0x134] sm:$0xf]
    %v2004 = vld [vmem:[#allocation11 + $0x138] sm:$0xff]
    %v2005 = vld [vmem:[#allocation11 + $0x140] sm:$0xf]
    %v2006 = vld [vmem:[#allocation11 + $0x144] sm:$0xff]
    %v2007 = vld [vmem:[#allocation11 + $0x14c] sm:$0xf]
    %v2008 = vld [vmem:[#allocation11 + $0x150] sm:$0xff]
    %v2009 = vld [vmem:[#allocation11 + $0x158] sm:$0xf]
    %v2010 = vld [vmem:[#allocation11 + $0x15c] sm:$0xff]
    %v2011 = vld [vmem:[#allocation11 + $0x164] sm:$0xf]
    %v2012 = vld [vmem:[#allocation11 + $0x168] sm:$0xff]
    %v2013 = vld [vmem:[#allocation11 + $0x170] sm:$0xf]
    %v2014 = vld [vmem:[#allocation11 + $0x174] sm:$0xff]
    %v2015 = vld [vmem:[#allocation11 + $0x17c] sm:$0xf]
    %v2016 = vld [vmem:[#allocation11 + $0x180] sm:$0xff]
    %v2017 = vld [vmem:[#allocation11 + $0x188] sm:$0xf]
    %v2018 = vld [vmem:[#allocation11 + $0x18c] sm:$0xff]
    %v2019 = vld [vmem:[#allocation11 + $0x194] sm:$0xf]
    %v2020 = vld [vmem:[#allocation11 + $0x198] sm:$0xff]
    %v2021 = vld [vmem:[#allocation11 + $0x1a0] sm:$0xf]
    %v2022 = vld [vmem:[#allocation11 + $0x1a4] sm:$0xff]
    %v2023 = vld [vmem:[#allocation11 + $0x1ac] sm:$0xf]
    %v2024 = vld [vmem:[#allocation11 + $0x1b0] sm:$0xff]
    %v2025 = vld [vmem:[#allocation11 + $0x1b8] sm:$0xf]
    %v2026 = vld [vmem:[#allocation11 + $0x1bc] sm:$0xff]
    %v2027 = vld [vmem:[#allocation11 + $0x1c4] sm:$0xf]
    %v2028 = vld [vmem:[#allocation11 + $0x1c8] sm:$0xff]
    %v2029 = vld [vmem:[#allocation11 + $0x1d0] sm:$0xf]
    %v2030 = vld [vmem:[#allocation11 + $0x1d4] sm:$0xff]
    %v2031 = vld [vmem:[#allocation11 + $0x1dc] sm:$0xf]
    %v2032 = vld [vmem:[#allocation11 + $0x1e0] sm:$0xff]
    %v2033 = vld [vmem:[#allocation11 + $0x1e8] sm:$0xf]
    %v2034 = vld [vmem:[#allocation11 + $0x1ec] sm:$0xff]
    %v2035 = vld [vmem:[#allocation11 + $0x1f4] sm:$0xf]
    %v2036 = vld [vmem:[#allocation11 + $0x1f8] sm:$0xff]
    %v2037 = vld [vmem:[#allocation11 + $0x200] sm:$0xf]
    %v2038 = vld [vmem:[#allocation11 + $0x204] sm:$0xff]
    %v2039 = vld [vmem:[#allocation11 + $0x20c] sm:$0xf]
    %v2040 = vld [vmem:[#allocation11 + $0x210] sm:$0xff]
    %v2041 = vld [vmem:[#allocation11 + $0x218] sm:$0xf]
    %v2042 = vld [vmem:[#allocation11 + $0x21c] sm:$0xff]
    %v2043 = vld [vmem:[#allocation11 + $0x224] sm:$0xf]
    %v2044 = vld [vmem:[#allocation11 + $0x228] sm:$0xff]
    %v2045 = vld [vmem:[#allocation11 + $0x230] sm:$0xf]
    %v2046 = vld [vmem:[#allocation11 + $0x234] sm:$0xff]
    %v2047 = vld [vmem:[#allocation11 + $0x23c] sm:$0xf]
    %v2048 = vld [vmem:[#allocation11 + $0x240] sm:$0xff]
    %v2049 = vld [vmem:[#allocation11 + $0x248] sm:$0xf]
    %v2050 = vld [vmem:[#allocation11 + $0x24c] sm:$0xff]
    %v2051 = vld [vmem:[#allocation11 + $0x254] sm:$0xf]
    %v2052 = vld [vmem:[#allocation11 + $0x258] sm:$0xff]
    %v2053 = vld [vmem:[#allocation11 + $0x260] sm:$0xf]
    %v2054 = vld [vmem:[#allocation11 + $0x264] sm:$0xff]
    %v2055 = vld [vmem:[#allocation11 + $0x26c] sm:$0xf]
    %v2056 = vld [vmem:[#allocation11 + $0x270] sm:$0xff]
    %v2057 = vld [vmem:[#allocation11 + $0x278] sm:$0xf]
    %v2058 = vld [vmem:[#allocation11 + $0x27c] sm:$0xff]
    %v2059 = vld [vmem:[#allocation11 + $0x284] sm:$0xf]
    %v2060 = vld [vmem:[#allocation11 + $0x288] sm:$0xff]
    %v2061 = vld [vmem:[#allocation11 + $0x290] sm:$0xf]
    %v2062 = vld [vmem:[#allocation11 + $0x294] sm:$0xff]
    %v2063 = vld [vmem:[#allocation11 + $0x29c] sm:$0xf]
    %v2064 = vld [vmem:[#allocation11 + $0x2a0] sm:$0xff]
    %v2065 = vld [vmem:[#allocation11 + $0x2a8] sm:$0xf]
    %v2066 = vld [vmem:[#allocation11 + $0x2ac] sm:$0xff]
    %v2067 = vld [vmem:[#allocation11 + $0x2b4] sm:$0xf]
    %v2068 = vld [vmem:[#allocation11 + $0x2b8] sm:$0xff]
    %v2069 = vld [vmem:[#allocation11 + $0x2c0] sm:$0xf]
    %v2070 = vld [vmem:[#allocation11 + $0x2c4] sm:$0xff]
    %v2071 = vld [vmem:[#allocation11 + $0x2cc] sm:$0xf]
    %v2072 = vld [vmem:[#allocation11 + $0x2d0] sm:$0xff]
    %v2073 = vld [vmem:[#allocation11 + $0x2d8] sm:$0xf]
    %v2074 = vld [vmem:[#allocation11 + $0x2dc] sm:$0xff]
    %v2075 = vld [vmem:[#allocation11 + $0x2e4] sm:$0xf]
    %v2076 = vld [vmem:[#allocation11 + $0x2e8] sm:$0xff]
    %v2077 = vld [vmem:[#allocation11 + $0x2f0] sm:$0xf]
    %v2078 = vld [vmem:[#allocation11 + $0x2f4] sm:$0xff]
    %v2079 = vld [vmem:[#allocation11 + $0x2fc] sm:$0xf]
    %v2080 = vld [vmem:[#allocation11 + $0x300] sm:$0xff]
    %v2081 = vld [vmem:[#allocation11 + $0x308] sm:$0xf]
    %v2082 = vld [vmem:[#allocation11 + $0x30c] sm:$0xff]
    %v2083 = vld [vmem:[#allocation11 + $0x314] sm:$0xf]
    %v2084 = vld [vmem:[#allocation11 + $0x318] sm:$0xff]
    %v2085 = vld [vmem:[#allocation11 + $0x320] sm:$0xf]
    %v2086 = vld [vmem:[#allocation11 + $0x324] sm:$0xff]
    %v2087 = vld [vmem:[#allocation11 + $0x32c] sm:$0xf]
    %v2088 = vld [vmem:[#allocation11 + $0x330] sm:$0xff]
    %v2089 = vld [vmem:[#allocation11 + $0x338] sm:$0xf]
    %v2090 = vld [vmem:[#allocation11 + $0x33c] sm:$0xff]
    %v2091 = vld [vmem:[#allocation11 + $0x344] sm:$0xf]
    %v2092 = vld [vmem:[#allocation11 + $0x348] sm:$0xff]
    %v2093 = vld [vmem:[#allocation11 + $0x350] sm:$0xf]
    %v2094 = vld [vmem:[#allocation11 + $0x354] sm:$0xff]
    %v2095 = vld [vmem:[#allocation11 + $0x35c] sm:$0xf]
    %v2096 = vld [vmem:[#allocation11 + $0x360] sm:$0xff]
    %v2097 = vld [vmem:[#allocation11 + $0x368] sm:$0xf]
    %v2098 = vld [vmem:[#allocation11 + $0x36c] sm:$0xff]
    %v2099 = vld [vmem:[#allocation11 + $0x374] sm:$0xf]
    %v2100 = vld [vmem:[#allocation11 + $0x378] sm:$0xff]
    %v2101 = vld [vmem:[#allocation11 + $0x380] sm:$0xf]
    %v2102 = vld [vmem:[#allocation11 + $0x384] sm:$0xff]
    %v2103 = vld [vmem:[#allocation11 + $0x38c] sm:$0xf]
    %v2104 = vld [vmem:[#allocation11 + $0x390] sm:$0xff]
    %v2105 = vld [vmem:[#allocation11 + $0x398] sm:$0xf]
    %v2106 = vld [vmem:[#allocation11 + $0x39c] sm:$0xff]
    %v2107 = vld [vmem:[#allocation11 + $0x3a4] sm:$0xf]
    %v2108 = vld [vmem:[#allocation11 + $0x3a8] sm:$0xff]
    %v2109 = vld [vmem:[#allocation11 + $0x3b0] sm:$0xf]
    %v2110 = vld [vmem:[#allocation11 + $0x3b4] sm:$0xff]
    %v2111 = vld [vmem:[#allocation11 + $0x3bc] sm:$0xf]
    %v2112 = vld [vmem:[#allocation11 + $0x3c0] sm:$0xff]
    %v2113 = vld [vmem:[#allocation11 + $0x3c8] sm:$0xf]
    %v2114 = vld [vmem:[#allocation11 + $0x3cc] sm:$0xff]
    %v2115 = vld [vmem:[#allocation11 + $0x3d4] sm:$0xf]
    %v2116 = vld [vmem:[#allocation11 + $0x3d8] sm:$0xff]
    %v2117 = vld [vmem:[#allocation11 + $0x3e0] sm:$0xf]
    %v2118 = vld [vmem:[#allocation11 + $0x3e4] sm:$0xff]
    %v2119 = vld [vmem:[#allocation11 + $0x3ec] sm:$0xf]
    %v2120 = vld [vmem:[#allocation11 + $0x3f0] sm:$0xff]
    %v2121 = vld [vmem:[#allocation11 + $0x3f8] sm:$0xf]
    %v2122 = vld [vmem:[#allocation11 + $0x3fc] sm:$0xff]
    %v2123 = vld [vmem:[#allocation11 + $0x404] sm:$0xf]
    %v2124 = vld [vmem:[#allocation11 + $0x408] sm:$0xff]
    %v2125 = vld [vmem:[#allocation11 + $0x410] sm:$0xf]
    %v2126 = vld [vmem:[#allocation11 + $0x414] sm:$0xff]
    %v2127 = vld [vmem:[#allocation11 + $0x41c] sm:$0xf]
    %v2128 = vld [vmem:[#allocation11 + $0x420] sm:$0xff]
    %v2129 = vld [vmem:[#allocation11 + $0x428] sm:$0xf]
    %v2130 = vld [vmem:[#allocation11 + $0x42c] sm:$0xff]
    %v2131 = vld [vmem:[#allocation11 + $0x434] sm:$0xf]
    %v2132 = vld [vmem:[#allocation11 + $0x438] sm:$0xff]
    %v2133 = vld [vmem:[#allocation11 + $0x440] sm:$0xf]
    %v2134 = vld [vmem:[#allocation11 + $0x444] sm:$0xff]
    %v2135 = vld [vmem:[#allocation11 + $0x44c] sm:$0xf]
    %v2136 = vld [vmem:[#allocation11 + $0x450] sm:$0xff]
    %v2137 = vld [vmem:[#allocation11 + $0x458] sm:$0xf]
    %v2138 = vld [vmem:[#allocation11 + $0x45c] sm:$0xff]
    %v2139 = vld [vmem:[#allocation11 + $0x464] sm:$0xf]
    %v2140 = vld [vmem:[#allocation11 + $0x468] sm:$0xff]
    %v2141 = vld [vmem:[#allocation11 + $0x470] sm:$0xf]
    %v2142 = vld [vmem:[#allocation11 + $0x474] sm:$0xff]
    %v2143 = vld [vmem:[#allocation11 + $0x47c] sm:$0xf]
    %v2144 = vld [vmem:[%s6] sm:$0x7]
    %v2146 = vlaneseq
    %v2147 = vshrl.u32 %v2146, 7
    %v2148 = vsub.s32 0, %v2147
    %v2149 = vrot.slane %v2144, %v2148
    %v2150 = vlaneseq
    %v2151 = vshrl.u32 %v2150, 7
    %v2152 = vsub.s32 1, %v2151
    %v2153 = vrot.slane %v2144, %v2152
    %v2154 = vlaneseq
    %v2155 = vshrl.u32 %v2154, 7
    %v2156 = vsub.s32 2, %v2155
    %v2157 = vrot.slane %v2144, %v2156
    %v2353 = vunpack.c.l.b16 %v1952
    %v2354 = vunpack.c.h.b16 %v1952
    %v2355 = vunpack.c.l.b16 %v1953
    %v2356 = vunpack.c.l.b16 %v1954
    %v2357 = vunpack.c.h.b16 %v1954
    %v2358 = vunpack.c.l.b16 %v1955
    %v2359 = vunpack.c.l.b16 %v1956
    %v2360 = vunpack.c.h.b16 %v1956
    %v2361 = vunpack.c.l.b16 %v1957
    %v2362 = vunpack.c.l.b16 %v1958
    %v2363 = vunpack.c.h.b16 %v1958
    %v2364 = vunpack.c.l.b16 %v1959
    %v2365 = vunpack.c.l.b16 %v1960
    %v2366 = vunpack.c.h.b16 %v1960
    %v2367 = vunpack.c.l.b16 %v1961
    %v2368 = vunpack.c.l.b16 %v1962
    %v2369 = vunpack.c.h.b16 %v1962
    %v2370 = vunpack.c.l.b16 %v1963
    %v2371 = vunpack.c.l.b16 %v1964
    %v2372 = vunpack.c.h.b16 %v1964
    %v2373 = vunpack.c.l.b16 %v1965
    %v2374 = vunpack.c.l.b16 %v1966
    %v2375 = vunpack.c.h.b16 %v1966
    %v2376 = vunpack.c.l.b16 %v1967
    %v2377 = vunpack.c.l.b16 %v1968
    %v2378 = vunpack.c.h.b16 %v1968
    %v2379 = vunpack.c.l.b16 %v1969
    %v2380 = vunpack.c.l.b16 %v1970
    %v2381 = vunpack.c.h.b16 %v1970
    %v2382 = vunpack.c.l.b16 %v1971
    %v2383 = vunpack.c.l.b16 %v1972
    %v2384 = vunpack.c.h.b16 %v1972
    %v2385 = vunpack.c.l.b16 %v1973
    %v2386 = vunpack.c.l.b16 %v1974
    %v2387 = vunpack.c.h.b16 %v1974
    %v2388 = vunpack.c.l.b16 %v1975
    %v2389 = vunpack.c.l.b16 %v1976
    %v2390 = vunpack.c.h.b16 %v1976
    %v2391 = vunpack.c.l.b16 %v1977
    %v2392 = vunpack.c.l.b16 %v1978
    %v2393 = vunpack.c.h.b16 %v1978
    %v2394 = vunpack.c.l.b16 %v1979
    %v2395 = vunpack.c.l.b16 %v1980
    %v2396 = vunpack.c.h.b16 %v1980
    %v2397 = vunpack.c.l.b16 %v1981
    %v2398 = vunpack.c.l.b16 %v1982
    %v2399 = vunpack.c.h.b16 %v1982
    %v2400 = vunpack.c.l.b16 %v1983
    %v2401 = vunpack.c.l.b16 %v1984
    %v2402 = vunpack.c.h.b16 %v1984
    %v2403 = vunpack.c.l.b16 %v1985
    %v2404 = vunpack.c.l.b16 %v1986
    %v2405 = vunpack.c.h.b16 %v1986
    %v2406 = vunpack.c.l.b16 %v1987
    %v2407 = vunpack.c.l.b16 %v1988
    %v2408 = vunpack.c.h.b16 %v1988
    %v2409 = vunpack.c.l.b16 %v1989
    %v2410 = vunpack.c.l.b16 %v1990
    %v2411 = vunpack.c.h.b16 %v1990
    %v2412 = vunpack.c.l.b16 %v1991
    %v2413 = vunpack.c.l.b16 %v1992
    %v2414 = vunpack.c.h.b16 %v1992
    %v2415 = vunpack.c.l.b16 %v1993
    %v2416 = vunpack.c.l.b16 %v1994
    %v2417 = vunpack.c.h.b16 %v1994
    %v2418 = vunpack.c.l.b16 %v1995
    %v2419 = vunpack.c.l.b16 %v1996
    %v2420 = vunpack.c.h.b16 %v1996
    %v2421 = vunpack.c.l.b16 %v1997
    %v2422 = vunpack.c.l.b16 %v1998
    %v2423 = vunpack.c.h.b16 %v1998
    %v2424 = vunpack.c.l.b16 %v1999
    %v2425 = vunpack.c.l.b16 %v2000
    %v2426 = vunpack.c.h.b16 %v2000
    %v2427 = vunpack.c.l.b16 %v2001
    %v2428 = vunpack.c.l.b16 %v2002
    %v2429 = vunpack.c.h.b16 %v2002
    %v2430 = vunpack.c.l.b16 %v2003
    %v2431 = vunpack.c.l.b16 %v2004
    %v2432 = vunpack.c.h.b16 %v2004
    %v2433 = vunpack.c.l.b16 %v2005
    %v2434 = vunpack.c.l.b16 %v2006
    %v2435 = vunpack.c.h.b16 %v2006
    %v2436 = vunpack.c.l.b16 %v2007
    %v2437 = vunpack.c.l.b16 %v2008
    %v2438 = vunpack.c.h.b16 %v2008
    %v2439 = vunpack.c.l.b16 %v2009
    %v2440 = vunpack.c.l.b16 %v2010
    %v2441 = vunpack.c.h.b16 %v2010
    %v2442 = vunpack.c.l.b16 %v2011
    %v2443 = vunpack.c.l.b16 %v2012
    %v2444 = vunpack.c.h.b16 %v2012
    %v2445 = vunpack.c.l.b16 %v2013
    %v2446 = vunpack.c.l.b16 %v2014
    %v2447 = vunpack.c.h.b16 %v2014
    %v2448 = vunpack.c.l.b16 %v2015
    %v2449 = vunpack.c.l.b16 %v2016
    %v2450 = vunpack.c.h.b16 %v2016
    %v2451 = vunpack.c.l.b16 %v2017
    %v2452 = vunpack.c.l.b16 %v2018
    %v2453 = vunpack.c.h.b16 %v2018
    %v2454 = vunpack.c.l.b16 %v2019
    %v2455 = vunpack.c.l.b16 %v2020
    %v2456 = vunpack.c.h.b16 %v2020
    %v2457 = vunpack.c.l.b16 %v2021
    %v2458 = vunpack.c.l.b16 %v2022
    %v2459 = vunpack.c.h.b16 %v2022
    %v2460 = vunpack.c.l.b16 %v2023
    %v2461 = vunpack.c.l.b16 %v2024
    %v2462 = vunpack.c.h.b16 %v2024
    %v2463 = vunpack.c.l.b16 %v2025
    %v2464 = vunpack.c.l.b16 %v2026
    %v2465 = vunpack.c.h.b16 %v2026
    %v2466 = vunpack.c.l.b16 %v2027
    %v2467 = vunpack.c.l.b16 %v2028
    %v2468 = vunpack.c.h.b16 %v2028
    %v2469 = vunpack.c.l.b16 %v2029
    %v2470 = vunpack.c.l.b16 %v2030
    %v2471 = vunpack.c.h.b16 %v2030
    %v2472 = vunpack.c.l.b16 %v2031
    %v2473 = vunpack.c.l.b16 %v2032
    %v2474 = vunpack.c.h.b16 %v2032
    %v2475 = vunpack.c.l.b16 %v2033
    %v2476 = vunpack.c.l.b16 %v2034
    %v2477 = vunpack.c.h.b16 %v2034
    %v2478 = vunpack.c.l.b16 %v2035
    %v2479 = vunpack.c.l.b16 %v2036
    %v2480 = vunpack.c.h.b16 %v2036
    %v2481 = vunpack.c.l.b16 %v2037
    %v2482 = vunpack.c.l.b16 %v2038
    %v2483 = vunpack.c.h.b16 %v2038
    %v2484 = vunpack.c.l.b16 %v2039
    %v2485 = vunpack.c.l.b16 %v2040
    %v2486 = vunpack.c.h.b16 %v2040
    %v2487 = vunpack.c.l.b16 %v2041
    %v2488 = vunpack.c.l.b16 %v2042
    %v2489 = vunpack.c.h.b16 %v2042
    %v2490 = vunpack.c.l.b16 %v2043
    %v2491 = vunpack.c.l.b16 %v2044
    %v2492 = vunpack.c.h.b16 %v2044
    %v2493 = vunpack.c.l.b16 %v2045
    %v2494 = vunpack.c.l.b16 %v2046
    %v2495 = vunpack.c.h.b16 %v2046
    %v2496 = vunpack.c.l.b16 %v2047
    %v2497 = vunpack.c.l.b16 %v2048
    %v2498 = vunpack.c.h.b16 %v2048
    %v2499 = vunpack.c.l.b16 %v2049
    %v2500 = vunpack.c.l.b16 %v2050
    %v2501 = vunpack.c.h.b16 %v2050
    %v2502 = vunpack.c.l.b16 %v2051
    %v2503 = vunpack.c.l.b16 %v2052
    %v2504 = vunpack.c.h.b16 %v2052
    %v2505 = vunpack.c.l.b16 %v2053
    %v2506 = vunpack.c.l.b16 %v2054
    %v2507 = vunpack.c.h.b16 %v2054
    %v2508 = vunpack.c.l.b16 %v2055
    %v2509 = vunpack.c.l.b16 %v2056
    %v2510 = vunpack.c.h.b16 %v2056
    %v2511 = vunpack.c.l.b16 %v2057
    %v2512 = vunpack.c.l.b16 %v2058
    %v2513 = vunpack.c.h.b16 %v2058
    %v2514 = vunpack.c.l.b16 %v2059
    %v2515 = vunpack.c.l.b16 %v2060
    %v2516 = vunpack.c.h.b16 %v2060
    %v2517 = vunpack.c.l.b16 %v2061
    %v2518 = vunpack.c.l.b16 %v2062
    %v2519 = vunpack.c.h.b16 %v2062
    %v2520 = vunpack.c.l.b16 %v2063
    %v2521 = vunpack.c.l.b16 %v2064
    %v2522 = vunpack.c.h.b16 %v2064
    %v2523 = vunpack.c.l.b16 %v2065
    %v2524 = vunpack.c.l.b16 %v2066
    %v2525 = vunpack.c.h.b16 %v2066
    %v2526 = vunpack.c.l.b16 %v2067
    %v2527 = vunpack.c.l.b16 %v2068
    %v2528 = vunpack.c.h.b16 %v2068
    %v2529 = vunpack.c.l.b16 %v2069
    %v2530 = vunpack.c.l.b16 %v2070
    %v2531 = vunpack.c.h.b16 %v2070
    %v2532 = vunpack.c.l.b16 %v2071
    %v2533 = vunpack.c.l.b16 %v2072
    %v2534 = vunpack.c.h.b16 %v2072
    %v2535 = vunpack.c.l.b16 %v2073
    %v2536 = vunpack.c.l.b16 %v2074
    %v2537 = vunpack.c.h.b16 %v2074
    %v2538 = vunpack.c.l.b16 %v2075
    %v2539 = vunpack.c.l.b16 %v2076
    %v2540 = vunpack.c.h.b16 %v2076
    %v2541 = vunpack.c.l.b16 %v2077
    %v2542 = vunpack.c.l.b16 %v2078
    %v2543 = vunpack.c.h.b16 %v2078
    %v2544 = vunpack.c.l.b16 %v2079
    %v2545 = vunpack.c.l.b16 %v2080
    %v2546 = vunpack.c.h.b16 %v2080
    %v2547 = vunpack.c.l.b16 %v2081
    %v2548 = vunpack.c.l.b16 %v2082
    %v2549 = vunpack.c.h.b16 %v2082
    %v2550 = vunpack.c.l.b16 %v2083
    %v2551 = vunpack.c.l.b16 %v2084
    %v2552 = vunpack.c.h.b16 %v2084
    %v2553 = vunpack.c.l.b16 %v2085
    %v2554 = vunpack.c.l.b16 %v2086
    %v2555 = vunpack.c.h.b16 %v2086
    %v2556 = vunpack.c.l.b16 %v2087
    %v2557 = vunpack.c.l.b16 %v2088
    %v2558 = vunpack.c.h.b16 %v2088
    %v2559 = vunpack.c.l.b16 %v2089
    %v2560 = vunpack.c.l.b16 %v2090
    %v2561 = vunpack.c.h.b16 %v2090
    %v2562 = vunpack.c.l.b16 %v2091
    %v2563 = vunpack.c.l.b16 %v2092
    %v2564 = vunpack.c.h.b16 %v2092
    %v2565 = vunpack.c.l.b16 %v2093
    %v2566 = vunpack.c.l.b16 %v2094
    %v2567 = vunpack.c.h.b16 %v2094
    %v2568 = vunpack.c.l.b16 %v2095
    %v2569 = vunpack.c.l.b16 %v2096
    %v2570 = vunpack.c.h.b16 %v2096
    %v2571 = vunpack.c.l.b16 %v2097
    %v2572 = vunpack.c.l.b16 %v2098
    %v2573 = vunpack.c.h.b16 %v2098
    %v2574 = vunpack.c.l.b16 %v2099
    %v2575 = vunpack.c.l.b16 %v2100
    %v2576 = vunpack.c.h.b16 %v2100
    %v2577 = vunpack.c.l.b16 %v2101
    %v2578 = vunpack.c.l.b16 %v2102
    %v2579 = vunpack.c.h.b16 %v2102
    %v2580 = vunpack.c.l.b16 %v2103
    %v2581 = vunpack.c.l.b16 %v2104
    %v2582 = vunpack.c.h.b16 %v2104
    %v2583 = vunpack.c.l.b16 %v2105
    %v2584 = vunpack.c.l.b16 %v2106
    %v2585 = vunpack.c.h.b16 %v2106
    %v2586 = vunpack.c.l.b16 %v2107
    %v2587 = vunpack.c.l.b16 %v2108
    %v2588 = vunpack.c.h.b16 %v2108
    %v2589 = vunpack.c.l.b16 %v2109
    %v2590 = vunpack.c.l.b16 %v2110
    %v2591 = vunpack.c.h.b16 %v2110
    %v2592 = vunpack.c.l.b16 %v2111
    %v2593 = vunpack.c.l.b16 %v2112
    %v2594 = vunpack.c.h.b16 %v2112
    %v2595 = vunpack.c.l.b16 %v2113
    %v2596 = vunpack.c.l.b16 %v2114
    %v2597 = vunpack.c.h.b16 %v2114
    %v2598 = vunpack.c.l.b16 %v2115
    %v2599 = vunpack.c.l.b16 %v2116
    %v2600 = vunpack.c.h.b16 %v2116
    %v2601 = vunpack.c.l.b16 %v2117
    %v2602 = vunpack.c.l.b16 %v2118
    %v2603 = vunpack.c.h.b16 %v2118
    %v2604 = vunpack.c.l.b16 %v2119
    %v2605 = vunpack.c.l.b16 %v2120
    %v2606 = vunpack.c.h.b16 %v2120
    %v2607 = vunpack.c.l.b16 %v2121
    %v2608 = vunpack.c.l.b16 %v2122
    %v2609 = vunpack.c.h.b16 %v2122
    %v2610 = vunpack.c.l.b16 %v2123
    %v2611 = vunpack.c.l.b16 %v2124
    %v2612 = vunpack.c.h.b16 %v2124
    %v2613 = vunpack.c.l.b16 %v2125
    %v2614 = vunpack.c.l.b16 %v2126
    %v2615 = vunpack.c.h.b16 %v2126
    %v2616 = vunpack.c.l.b16 %v2127
    %v2617 = vunpack.c.l.b16 %v2128
    %v2618 = vunpack.c.h.b16 %v2128
    %v2619 = vunpack.c.l.b16 %v2129
    %v2620 = vunpack.c.l.b16 %v2130
    %v2621 = vunpack.c.h.b16 %v2130
    %v2622 = vunpack.c.l.b16 %v2131
    %v2623 = vunpack.c.l.b16 %v2132
    %v2624 = vunpack.c.h.b16 %v2132
    %v2625 = vunpack.c.l.b16 %v2133
    %v2626 = vunpack.c.l.b16 %v2134
    %v2627 = vunpack.c.h.b16 %v2134
    %v2628 = vunpack.c.l.b16 %v2135
    %v2629 = vunpack.c.l.b16 %v2136
    %v2630 = vunpack.c.h.b16 %v2136
    %v2631 = vunpack.c.l.b16 %v2137
    %v2632 = vunpack.c.l.b16 %v2138
    %v2633 = vunpack.c.h.b16 %v2138
    %v2634 = vunpack.c.l.b16 %v2139
    %v2635 = vunpack.c.l.b16 %v2140
    %v2636 = vunpack.c.h.b16 %v2140
    %v2637 = vunpack.c.l.b16 %v2141
    %v2638 = vunpack.c.l.b16 %v2142
    %v2639 = vunpack.c.h.b16 %v2142
    %v2640 = vunpack.c.l.b16 %v2143
    %v2641 = vpack.c.b16 %v2356, %v2353
    %v2642 = vpack.c.b16 %v2357, %v2354
    %v2643 = vpack.c.b16 %v2358, %v2355
    %v2644 = vpack.c.b16 %v2362, %v2359
    %v2645 = vpack.c.b16 %v2363, %v2360
    %v2646 = vpack.c.b16 %v2364, %v2361
    %v2647 = vpack.c.b16 %v2368, %v2365
    %v2648 = vpack.c.b16 %v2369, %v2366
    %v2649 = vpack.c.b16 %v2370, %v2367
    %v2650 = vpack.c.b16 %v2374, %v2371
    %v2651 = vpack.c.b16 %v2375, %v2372
    %v2652 = vpack.c.b16 %v2376, %v2373
    %v2653 = vpack.c.b16 %v2380, %v2377
    %v2654 = vpack.c.b16 %v2381, %v2378
    %v2655 = vpack.c.b16 %v2382, %v2379
    %v2656 = vpack.c.b16 %v2386, %v2383
    %v2657 = vpack.c.b16 %v2387, %v2384
    %v2658 = vpack.c.b16 %v2388, %v2385
    %v2659 = vpack.c.b16 %v2392, %v2389
    %v2660 = vpack.c.b16 %v2393, %v2390
    %v2661 = vpack.c.b16 %v2394, %v2391
    %v2662 = vpack.c.b16 %v2398, %v2395
    %v2663 = vpack.c.b16 %v2399, %v2396
    %v2664 = vpack.c.b16 %v2400, %v2397
    %v2665 = vpack.c.b16 %v2404, %v2401
    %v2666 = vpack.c.b16 %v2405, %v2402
    %v2667 = vpack.c.b16 %v2406, %v2403
    %v2668 = vpack.c.b16 %v2410, %v2407
    %v2669 = vpack.c.b16 %v2411, %v2408
    %v2670 = vpack.c.b16 %v2412, %v2409
    %v2671 = vpack.c.b16 %v2416, %v2413
    %v2672 = vpack.c.b16 %v2417, %v2414
    %v2673 = vpack.c.b16 %v2418, %v2415
    %v2674 = vpack.c.b16 %v2422, %v2419
    %v2675 = vpack.c.b16 %v2423, %v2420
    %v2676 = vpack.c.b16 %v2424, %v2421
    %v2677 = vpack.c.b16 %v2428, %v2425
    %v2678 = vpack.c.b16 %v2429, %v2426
    %v2679 = vpack.c.b16 %v2430, %v2427
    %v2680 = vpack.c.b16 %v2434, %v2431
    %v2681 = vpack.c.b16 %v2435, %v2432
    %v2682 = vpack.c.b16 %v2436, %v2433
    %v2683 = vpack.c.b16 %v2440, %v2437
    %v2684 = vpack.c.b16 %v2441, %v2438
    %v2685 = vpack.c.b16 %v2442, %v2439
    %v2686 = vpack.c.b16 %v2446, %v2443
    %v2687 = vpack.c.b16 %v2447, %v2444
    %v2688 = vpack.c.b16 %v2448, %v2445
    %v2689 = vpack.c.b16 %v2452, %v2449
    %v2690 = vpack.c.b16 %v2453, %v2450
    %v2691 = vpack.c.b16 %v2454, %v2451
    %v2692 = vpack.c.b16 %v2458, %v2455
    %v2693 = vpack.c.b16 %v2459, %v2456
    %v2694 = vpack.c.b16 %v2460, %v2457
    %v2695 = vpack.c.b16 %v2464, %v2461
    %v2696 = vpack.c.b16 %v2465, %v2462
    %v2697 = vpack.c.b16 %v2466, %v2463
    %v2698 = vpack.c.b16 %v2470, %v2467
    %v2699 = vpack.c.b16 %v2471, %v2468
    %v2700 = vpack.c.b16 %v2472, %v2469
    %v2701 = vpack.c.b16 %v2476, %v2473
    %v2702 = vpack.c.b16 %v2477, %v2474
    %v2703 = vpack.c.b16 %v2478, %v2475
    %v2704 = vpack.c.b16 %v2482, %v2479
    %v2705 = vpack.c.b16 %v2483, %v2480
    %v2706 = vpack.c.b16 %v2484, %v2481
    %v2707 = vpack.c.b16 %v2488, %v2485
    %v2708 = vpack.c.b16 %v2489, %v2486
    %v2709 = vpack.c.b16 %v2490, %v2487
    %v2710 = vpack.c.b16 %v2494, %v2491
    %v2711 = vpack.c.b16 %v2495, %v2492
    %v2712 = vpack.c.b16 %v2496, %v2493
    %v2713 = vpack.c.b16 %v2500, %v2497
    %v2714 = vpack.c.b16 %v2501, %v2498
    %v2715 = vpack.c.b16 %v2502, %v2499
    %v2716 = vpack.c.b16 %v2506, %v2503
    %v2717 = vpack.c.b16 %v2507, %v2504
    %v2718 = vpack.c.b16 %v2508, %v2505
    %v2719 = vpack.c.b16 %v2512, %v2509
    %v2720 = vpack.c.b16 %v2513, %v2510
    %v2721 = vpack.c.b16 %v2514, %v2511
    %v2722 = vpack.c.b16 %v2518, %v2515
    %v2723 = vpack.c.b16 %v2519, %v2516
    %v2724 = vpack.c.b16 %v2520, %v2517
    %v2725 = vpack.c.b16 %v2524, %v2521
    %v2726 = vpack.c.b16 %v2525, %v2522
    %v2727 = vpack.c.b16 %v2526, %v2523
    %v2728 = vpack.c.b16 %v2530, %v2527
    %v2729 = vpack.c.b16 %v2531, %v2528
    %v2730 = vpack.c.b16 %v2532, %v2529
    %v2731 = vpack.c.b16 %v2536, %v2533
    %v2732 = vpack.c.b16 %v2537, %v2534
    %v2733 = vpack.c.b16 %v2538, %v2535
    %v2734 = vpack.c.b16 %v2542, %v2539
    %v2735 = vpack.c.b16 %v2543, %v2540
    %v2736 = vpack.c.b16 %v2544, %v2541
    %v2737 = vpack.c.b16 %v2548, %v2545
    %v2738 = vpack.c.b16 %v2549, %v2546
    %v2739 = vpack.c.b16 %v2550, %v2547
    %v2740 = vpack.c.b16 %v2554, %v2551
    %v2741 = vpack.c.b16 %v2555, %v2552
    %v2742 = vpack.c.b16 %v2556, %v2553
    %v2743 = vpack.c.b16 %v2560, %v2557
    %v2744 = vpack.c.b16 %v2561, %v2558
    %v2745 = vpack.c.b16 %v2562, %v2559
    %v2746 = vpack.c.b16 %v2566, %v2563
    %v2747 = vpack.c.b16 %v2567, %v2564
    %v2748 = vpack.c.b16 %v2568, %v2565
    %v2749 = vpack.c.b16 %v2572, %v2569
    %v2750 = vpack.c.b16 %v2573, %v2570
    %v2751 = vpack.c.b16 %v2574, %v2571
    %v2752 = vpack.c.b16 %v2578, %v2575
    %v2753 = vpack.c.b16 %v2579, %v2576
    %v2754 = vpack.c.b16 %v2580, %v2577
    %v2755 = vpack.c.b16 %v2584, %v2581
    %v2756 = vpack.c.b16 %v2585, %v2582
    %v2757 = vpack.c.b16 %v2586, %v2583
    %v2758 = vpack.c.b16 %v2590, %v2587
    %v2759 = vpack.c.b16 %v2591, %v2588
    %v2760 = vpack.c.b16 %v2592, %v2589
    %v2761 = vpack.c.b16 %v2596, %v2593
    %v2762 = vpack.c.b16 %v2597, %v2594
    %v2763 = vpack.c.b16 %v2598, %v2595
    %v2764 = vpack.c.b16 %v2602, %v2599
    %v2765 = vpack.c.b16 %v2603, %v2600
    %v2766 = vpack.c.b16 %v2604, %v2601
    %v2767 = vpack.c.b16 %v2608, %v2605
    %v2768 = vpack.c.b16 %v2609, %v2606
    %v2769 = vpack.c.b16 %v2610, %v2607
    %v2770 = vpack.c.b16 %v2614, %v2611
    %v2771 = vpack.c.b16 %v2615, %v2612
    %v2772 = vpack.c.b16 %v2616, %v2613
    %v2773 = vpack.c.b16 %v2620, %v2617
    %v2774 = vpack.c.b16 %v2621, %v2618
    %v2775 = vpack.c.b16 %v2622, %v2619
    %v2776 = vpack.c.b16 %v2626, %v2623
    %v2777 = vpack.c.b16 %v2627, %v2624
    %v2778 = vpack.c.b16 %v2628, %v2625
    %v2779 = vpack.c.b16 %v2632, %v2629
    %v2780 = vpack.c.b16 %v2633, %v2630
    %v2781 = vpack.c.b16 %v2634, %v2631
    %v2782 = vpack.c.b16 %v2638, %v2635
    %v2783 = vpack.c.b16 %v2639, %v2636
    %v2784 = vpack.c.b16 %v2640, %v2637
    %2929 = vmatprep.subr.bf16.mxu0 %v2642
    %2930 = vmatpush1.bf16.msra.mxu0 %v2641
    %2931 = vmatprep.subr.bf16.mxu0 %v2645
    %2932 = vmatpush1.bf16.msra.mxu0 %v2644
    %2933 = vmatprep.subr.bf16.mxu0 %v2648
    %2934 = vmatpush1.bf16.msra.mxu0 %v2647
    %2935 = vmatprep.subr.bf16.mxu0 %v2651
    %2936 = vmatpush1.bf16.msra.mxu0 %v2650
    %2937 = vmatprep.subr.bf16.mxu0 %v2654
    %2938 = vmatpush1.bf16.msra.mxu0 %v2653
    %2939 = vmatprep.subr.bf16.mxu0 %v2657
    %2940 = vmatpush1.bf16.msra.mxu0 %v2656
    %2941 = vmatprep.subr.bf16.mxu0 %v2660
    %2942 = vmatpush1.bf16.msra.mxu0 %v2659
    %2943 = vmatprep.subr.bf16.mxu0 %v2663
    %2944 = vmatpush1.bf16.msra.mxu0 %v2662
    %2945 = vmatprep.subr.bf16.mxu0 %v2666
    %2946 = vmatpush1.bf16.msra.mxu0 %v2665
    %2947 = vmatprep.subr.bf16.mxu0 %v2669
    %2948 = vmatpush1.bf16.msra.mxu0 %v2668
    %2949 = vmatprep.subr.bf16.mxu0 %v2672
    %2950 = vmatpush1.bf16.msra.mxu0 %v2671
    %2951 = vmatprep.subr.bf16.mxu0 %v2675
    %2952 = vmatpush1.bf16.msra.mxu0 %v2674
    %2953 = vmatprep.subr.bf16.mxu0 %v2678
    %2954 = vmatpush1.bf16.msra.mxu0 %v2677
    %2955 = vmatprep.subr.bf16.mxu0 %v2681
    %2956 = vmatpush1.bf16.msra.mxu0 %v2680
    %2957 = vmatprep.subr.bf16.mxu0 %v2684
    %2958 = vmatpush1.bf16.msra.mxu0 %v2683
    %2959 = vmatprep.subr.bf16.mxu0 %v2687
    %2960 = vmatpush1.bf16.msra.mxu0 %v2686
    %2961 = vmatprep.mubr.bf16.mxu0 %v1947
    %2962 = vmatmul.mubr.bf16.gmra.mrb[0].mxu0 %v1946
    %v2963 = vpop.f32.mrb[0].mxu0
    %v2964 = vadd.f32 %v2149, %v2963
    %v2965 = vpop.f32.mrb[0].mxu0
    %v2966 = vadd.f32 %v2153, %v2965
    %v2967 = vpop.f32.mrb[0].mxu0
    %v2968 = vpop.f32.mrb[0].mxu0
    %2969 = vdwg.mxu0
    %2970 = vmatprep.subr.bf16.mxu0 %v2690
    %2971 = vmatpush1.bf16.msra.mxu0 %v2689
    %2972 = vmatprep.subr.bf16.mxu0 %v2693
    %2973 = vmatpush1.bf16.msra.mxu0 %v2692
    %2974 = vmatprep.subr.bf16.mxu0 %v2696
    %2975 = vmatpush1.bf16.msra.mxu0 %v2695
    %2976 = vmatprep.subr.bf16.mxu0 %v2699
    %2977 = vmatpush1.bf16.msra.mxu0 %v2698
    %2978 = vmatprep.subr.bf16.mxu0 %v2702
    %2979 = vmatpush1.bf16.msra.mxu0 %v2701
    %2980 = vmatprep.subr.bf16.mxu0 %v2705
    %2981 = vmatpush1.bf16.msra.mxu0 %v2704
    %2982 = vmatprep.subr.bf16.mxu0 %v2708
    %2983 = vmatpush1.bf16.msra.mxu0 %v2707
    %2984 = vmatprep.subr.bf16.mxu0 %v2711
    %2985 = vmatpush1.bf16.msra.mxu0 %v2710
    %2986 = vmatprep.subr.bf16.mxu0 %v2714
    %2987 = vmatpush1.bf16.msra.mxu0 %v2713
    %2988 = vmatprep.subr.bf16.mxu0 %v2717
    %2989 = vmatpush1.bf16.msra.mxu0 %v2716
    %2990 = vmatprep.subr.bf16.mxu0 %v2720
    %2991 = vmatpush1.bf16.msra.mxu0 %v2719
    %2992 = vmatprep.subr.bf16.mxu0 %v2723
    %2993 = vmatpush1.bf16.msra.mxu0 %v2722
    %2994 = vmatprep.subr.bf16.mxu0 %v2726
    %2995 = vmatpush1.bf16.msra.mxu0 %v2725
    %2996 = vmatprep.subr.bf16.mxu0 %v2729
    %2997 = vmatpush1.bf16.msra.mxu0 %v2728
    %2998 = vmatprep.subr.bf16.mxu0 %v2732
    %2999 = vmatpush1.bf16.msra.mxu0 %v2731
    %3000 = vmatprep.subr.bf16.mxu0 %v2735
    %3001 = vmatpush1.bf16.msra.mxu0 %v2734
    %3002 = vmatprep.mubr.bf16.mxu0 %v1949
    %3003 = vmatmul.mubr.bf16.gmra.mrb[0].mxu0 %v1948
    %v3004 = vpop.f32.mrb[0].mxu0
    %v3005 = vadd.f32 %v2964, %v3004
    %v3006 = vpop.f32.mrb[0].mxu0
    %v3007 = vadd.f32 %v2966, %v3006
    %v3008 = vpop.f32.mrb[0].mxu0
    %v3009 = vpop.f32.mrb[0].mxu0
    %3010 = vdwg.mxu0
    %3011 = vmatprep.subr.bf16.mxu0 %v2738
    %3012 = vmatpush1.bf16.msra.mxu0 %v2737
    %3013 = vmatprep.subr.bf16.mxu0 %v2741
    %3014 = vmatpush1.bf16.msra.mxu0 %v2740
    %3015 = vmatprep.subr.bf16.mxu0 %v2744
    %3016 = vmatpush1.bf16.msra.mxu0 %v2743
    %3017 = vmatprep.subr.bf16.mxu0 %v2747
    %3018 = vmatpush1.bf16.msra.mxu0 %v2746
    %3019 = vmatprep.subr.bf16.mxu0 %v2750
    %3020 = vmatpush1.bf16.msra.mxu0 %v2749
    %3021 = vmatprep.subr.bf16.mxu0 %v2753
    %3022 = vmatpush1.bf16.msra.mxu0 %v2752
    %3023 = vmatprep.subr.bf16.mxu0 %v2756
    %3024 = vmatpush1.bf16.msra.mxu0 %v2755
    %3025 = vmatprep.subr.bf16.mxu0 %v2759
    %3026 = vmatpush1.bf16.msra.mxu0 %v2758
    %3027 = vmatprep.subr.bf16.mxu0 %v2762
    %3028 = vmatpush1.bf16.msra.mxu0 %v2761
    %3029 = vmatprep.subr.bf16.mxu0 %v2765
    %3030 = vmatpush1.bf16.msra.mxu0 %v2764
    %3031 = vmatprep.subr.bf16.mxu0 %v2768
    %3032 = vmatpush1.bf16.msra.mxu0 %v2767
    %3033 = vmatprep.subr.bf16.mxu0 %v2771
    %3034 = vmatpush1.bf16.msra.mxu0 %v2770
    %3035 = vmatprep.subr.bf16.mxu0 %v2774
    %3036 = vmatpush1.bf16.msra.mxu0 %v2773
    %3037 = vmatprep.subr.bf16.mxu0 %v2777
    %3038 = vmatpush1.bf16.msra.mxu0 %v2776
    %3039 = vmatprep.subr.bf16.mxu0 %v2780
    %3040 = vmatpush1.bf16.msra.mxu0 %v2779
    %3041 = vmatprep.subr.bf16.mxu0 %v2783
    %3042 = vmatpush1.bf16.msra.mxu0 %v2782
    %3043 = vmatprep.mubr.bf16.mxu0 %v1951
    %3044 = vmatmul.mubr.bf16.gmra.mrb[0].mxu0 %v1950
    %v3045 = vpop.f32.mrb[0].mxu0
    %v3046 = vadd.f32 %v3005, %v3045
    %v3047 = vpop.f32.mrb[0].mxu0
    %v3048 = vadd.f32 %v3007, %v3047
    %v3049 = vpop.f32.mrb[0].mxu0
    %v3050 = vpop.f32.mrb[0].mxu0
    %3051 = vdwg.mxu0
    %3052 = vmatprep.subr.bf16.mxu0 0
    %3053 = vmatpush1.bf16.msra.mxu0 %v2643
    %3054 = vmatprep.subr.bf16.mxu0 0
    %3055 = vmatpush1.bf16.msra.mxu0 %v2646
    %3056 = vmatprep.subr.bf16.mxu0 0
    %3057 = vmatpush1.bf16.msra.mxu0 %v2649
    %3058 = vmatprep.subr.bf16.mxu0 0
    %3059 = vmatpush1.bf16.msra.mxu0 %v2652
    %3060 = vmatprep.subr.bf16.mxu0 0
    %3061 = vmatpush1.bf16.msra.mxu0 %v2655
    %3062 = vmatprep.subr.bf16.mxu0 0
    %3063 = vmatpush1.bf16.msra.mxu0 %v2658
    %3064 = vmatprep.subr.bf16.mxu0 0
    %3065 = vmatpush1.bf16.msra.mxu0 %v2661
    %3066 = vmatprep.subr.bf16.mxu0 0
    %3067 = vmatpush1.bf16.msra.mxu0 %v2664
    %3068 = vmatprep.subr.bf16.mxu0 0
    %3069 = vmatpush1.bf16.msra.mxu0 %v2667
    %3070 = vmatprep.subr.bf16.mxu0 0
    %3071 = vmatpush1.bf16.msra.mxu0 %v2670
    %3072 = vmatprep.subr.bf16.mxu0 0
    %3073 = vmatpush1.bf16.msra.mxu0 %v2673
    %3074 = vmatprep.subr.bf16.mxu0 0
    %3075 = vmatpush1.bf16.msra.mxu0 %v2676
    %3076 = vmatprep.subr.bf16.mxu0 0
    %3077 = vmatpush1.bf16.msra.mxu0 %v2679
    %3078 = vmatprep.subr.bf16.mxu0 0
    %3079 = vmatpush1.bf16.msra.mxu0 %v2682
    %3080 = vmatprep.subr.bf16.mxu0 0
    %3081 = vmatpush1.bf16.msra.mxu0 %v2685
    %3082 = vmatprep.subr.bf16.mxu0 0
    %3083 = vmatpush1.bf16.msra.mxu0 %v2688
    %3084 = vmatprep.mubr.bf16.mxu0 %v1947
    %3085 = vmatmul.mubr.bf16.gmra.mrb[0].mxu0 %v1946
    %v3086 = vpop.f32.mrb[0].mxu0
    %v3087 = vadd.f32 %v2157, %v3086
    %v3088 = vpop.f32.mrb[0].mxu0
    %v3089 = vpop.f32.mrb[0].mxu0
    %v3090 = vpop.f32.mrb[0].mxu0
    %3091 = vdwg.mxu0
    %3092 = vmatprep.subr.bf16.mxu0 0
    %3093 = vmatpush1.bf16.msra.mxu0 %v2691
    %3094 = vmatprep.subr.bf16.mxu0 0
    %3095 = vmatpush1.bf16.msra.mxu0 %v2694
    %3096 = vmatprep.subr.bf16.mxu0 0
    %3097 = vmatpush1.bf16.msra.mxu0 %v2697
    %3098 = vmatprep.subr.bf16.mxu0 0
    %3099 = vmatpush1.bf16.msra.mxu0 %v2700
    %3100 = vmatprep.subr.bf16.mxu0 0
    %3101 = vmatpush1.bf16.msra.mxu0 %v2703
    %3102 = vmatprep.subr.bf16.mxu0 0
    %3103 = vmatpush1.bf16.msra.mxu0 %v2706
    %3104 = vmatprep.subr.bf16.mxu0 0
    %3105 = vmatpush1.bf16.msra.mxu0 %v2709
    %3106 = vmatprep.subr.bf16.mxu0 0
    %3107 = vmatpush1.bf16.msra.mxu0 %v2712
    %3108 = vmatprep.subr.bf16.mxu0 0
    %3109 = vmatpush1.bf16.msra.mxu0 %v2715
    %3110 = vmatprep.subr.bf16.mxu0 0
    %3111 = vmatpush1.bf16.msra.mxu0 %v2718
    %3112 = vmatprep.subr.bf16.mxu0 0
    %3113 = vmatpush1.bf16.msra.mxu0 %v2721
    %3114 = vmatprep.subr.bf16.mxu0 0
    %3115 = vmatpush1.bf16.msra.mxu0 %v2724
    %3116 = vmatprep.subr.bf16.mxu0 0
    %3117 = vmatpush1.bf16.msra.mxu0 %v2727
    %3118 = vmatprep.subr.bf16.mxu0 0
    %3119 = vmatpush1.bf16.msra.mxu0 %v2730
    %3120 = vmatprep.subr.bf16.mxu0 0
    %3121 = vmatpush1.bf16.msra.mxu0 %v2733
    %3122 = vmatprep.subr.bf16.mxu0 0
    %3123 = vmatpush1.bf16.msra.mxu0 %v2736
    %3124 = vmatprep.mubr.bf16.mxu0 %v1949
    %3125 = vmatmul.mubr.bf16.gmra.mrb[0].mxu0 %v1948
    %v3126 = vpop.f32.mrb[0].mxu0
    %v3127 = vadd.f32 %v3087, %v3126
    %v3128 = vpop.f32.mrb[0].mxu0
    %v3129 = vpop.f32.mrb[0].mxu0
    %v3130 = vpop.f32.mrb[0].mxu0
    %3131 = vdwg.mxu0
    %3132 = vmatprep.subr.bf16.mxu0 0
    %3133 = vmatpush1.bf16.msra.mxu0 %v2739
    %3134 = vmatprep.subr.bf16.mxu0 0
    %3135 = vmatpush1.bf16.msra.mxu0 %v2742
    %3136 = vmatprep.subr.bf16.mxu0 0
    %3137 = vmatpush1.bf16.msra.mxu0 %v2745
    %3138 = vmatprep.subr.bf16.mxu0 0
    %3139 = vmatpush1.bf16.msra.mxu0 %v2748
    %3140 = vmatprep.subr.bf16.mxu0 0
    %3141 = vmatpush1.bf16.msra.mxu0 %v2751
    %3142 = vmatprep.subr.bf16.mxu0 0
    %3143 = vmatpush1.bf16.msra.mxu0 %v2754
    %3144 = vmatprep.subr.bf16.mxu0 0
    %3145 = vmatpush1.bf16.msra.mxu0 %v2757
    %3146 = vmatprep.subr.bf16.mxu0 0
    %3147 = vmatpush1.bf16.msra.mxu0 %v2760
    %3148 = vmatprep.subr.bf16.mxu0 0
    %3149 = vmatpush1.bf16.msra.mxu0 %v2763
    %3150 = vmatprep.subr.bf16.mxu0 0
    %3151 = vmatpush1.bf16.msra.mxu0 %v2766
    %3152 = vmatprep.subr.bf16.mxu0 0
    %3153 = vmatpush1.bf16.msra.mxu0 %v2769
    %3154 = vmatprep.subr.bf16.mxu0 0
    %3155 = vmatpush1.bf16.msra.mxu0 %v2772
    %3156 = vmatprep.subr.bf16.mxu0 0
    %3157 = vmatpush1.bf16.msra.mxu0 %v2775
    %3158 = vmatprep.subr.bf16.mxu0 0
    %3159 = vmatpush1.bf16.msra.mxu0 %v2778
    %3160 = vmatprep.subr.bf16.mxu0 0
    %3161 = vmatpush1.bf16.msra.mxu0 %v2781
    %3162 = vmatprep.subr.bf16.mxu0 0
    %3163 = vmatpush1.bf16.msra.mxu0 %v2784
    %3164 = vmatprep.mubr.bf16.mxu0 %v1951
    %3165 = vmatmul.mubr.bf16.gmra.mrb[0].mxu0 %v1950
    %v3166 = vpop.f32.mrb[0].mxu0
    %v3167 = vadd.f32 %v3127, %v3166
    %v3168 = vpop.f32.mrb[0].mxu0
    %v3169 = vpop.f32.mrb[0].mxu0
    %v3170 = vpop.f32.mrb[0].mxu0
    %3171 = vdwg.mxu0
    %v3172 = vtanh.pop %v3046
    %v3173 = vtanh.pop %v3048
    %v3174 = vtanh.pop %v3167
    %v3175 = vpack.c.bf16 %v3172, %v3172
    %v3176 = vpack.c.bf16 %v3173, %v3173
    %v3177 = vpack.c.bf16 %v3174, %v3174
    %v3178 = vld [vmem:[#allocation12] sm:$0xff]
    %v3179 = vld [vmem:[#allocation12 + $0x8] sm:$0xff]
    %v3180 = vld [vmem:[#allocation12 + $0x10] sm:$0xff]
    %v3181 = vld [vmem:[#allocation12 + $0x18] sm:$0xff]
    %v3182 = vld [vmem:[#allocation12 + $0x20] sm:$0xff]
    %v3183 = vld [vmem:[#allocation12 + $0x28] sm:$0xff]
    %v3184 = vld [vmem:[#allocation12 + $0x30] sm:$0xff]
    %v3185 = vld [vmem:[#allocation12 + $0x38] sm:$0xff]
    %v3186 = vld [vmem:[#allocation12 + $0x40] sm:$0xff]
    %v3187 = vld [vmem:[#allocation12 + $0x48] sm:$0xff]
    %v3188 = vld [vmem:[#allocation12 + $0x50] sm:$0xff]
    %v3189 = vld [vmem:[#allocation12 + $0x58] sm:$0xff]
    %v3190 = vld [vmem:[#allocation12 + $0x60] sm:$0xff]
    %v3191 = vld [vmem:[#allocation12 + $0x68] sm:$0xff]
    %v3192 = vld [vmem:[#allocation12 + $0x70] sm:$0xff]
    %v3193 = vld [vmem:[#allocation12 + $0x78] sm:$0xff]
    %v3194 = vld [vmem:[#allocation12 + $0x80] sm:$0xff]
    %v3195 = vld [vmem:[#allocation12 + $0x88] sm:$0xff]
    %v3196 = vld [vmem:[#allocation12 + $0x90] sm:$0xff]
    %v3197 = vld [vmem:[#allocation12 + $0x98] sm:$0xff]
    %v3198 = vld [vmem:[#allocation12 + $0xa0] sm:$0xff]
    %v3199 = vld [vmem:[#allocation12 + $0xa8] sm:$0xff]
    %v3200 = vld [vmem:[#allocation12 + $0xb0] sm:$0xff]
    %v3201 = vld [vmem:[#allocation12 + $0xb8] sm:$0xff]
    %v3202 = vld [vmem:[#allocation12 + $0xc0] sm:$0xff]
    %v3203 = vld [vmem:[#allocation12 + $0xc8] sm:$0xff]
    %v3204 = vld [vmem:[#allocation12 + $0xd0] sm:$0xff]
    %v3205 = vld [vmem:[#allocation12 + $0xd8] sm:$0xff]
    %v3206 = vld [vmem:[#allocation12 + $0xe0] sm:$0xff]
    %v3207 = vld [vmem:[#allocation12 + $0xe8] sm:$0xff]
    %v3208 = vld [vmem:[#allocation12 + $0xf0] sm:$0xff]
    %v3209 = vld [vmem:[#allocation12 + $0xf8] sm:$0xff]
    %v3210 = vld [vmem:[#allocation12 + $0x100] sm:$0xff]
    %v3211 = vld [vmem:[#allocation12 + $0x108] sm:$0xff]
    %v3212 = vld [vmem:[#allocation12 + $0x110] sm:$0xff]
    %v3213 = vld [vmem:[#allocation12 + $0x118] sm:$0xff]
    %v3214 = vld [vmem:[#allocation12 + $0x120] sm:$0xff]
    %v3215 = vld [vmem:[#allocation12 + $0x128] sm:$0xff]
    %v3216 = vld [vmem:[#allocation12 + $0x130] sm:$0xff]
    %v3217 = vld [vmem:[#allocation12 + $0x138] sm:$0xff]
    %v3218 = vld [vmem:[#allocation12 + $0x140] sm:$0xff]
    %v3219 = vld [vmem:[#allocation12 + $0x148] sm:$0xff]
    %v3220 = vld [vmem:[#allocation12 + $0x150] sm:$0xff]
    %v3221 = vld [vmem:[#allocation12 + $0x158] sm:$0xff]
    %v3222 = vld [vmem:[#allocation12 + $0x160] sm:$0xff]
    %v3223 = vld [vmem:[#allocation12 + $0x168] sm:$0xff]
    %v3224 = vld [vmem:[#allocation12 + $0x170] sm:$0xff]
    %v3225 = vld [vmem:[#allocation12 + $0x178] sm:$0xff]
    %v3226 = vld [vmem:[%s8] sm:$0x3]
    %v3228 = vlaneseq
    %v3229 = vshrl.u32 %v3228, 7
    %v3230 = vsub.s32 0, %v3229
    %v3231 = vrot.slane %v3226, %v3230
    %v3232 = vlaneseq
    %v3233 = vshrl.u32 %v3232, 7
    %v3234 = vsub.s32 1, %v3233
    %v3235 = vrot.slane %v3226, %v3234
    %v3286 = vunpack.c.l.b16 %v3178
    %v3287 = vunpack.c.h.b16 %v3178
    %v3288 = vunpack.c.l.b16 %v3179
    %v3289 = vunpack.c.h.b16 %v3179
    %v3290 = vunpack.c.l.b16 %v3180
    %v3291 = vunpack.c.h.b16 %v3180
    %v3292 = vunpack.c.l.b16 %v3181
    %v3293 = vunpack.c.h.b16 %v3181
    %v3294 = vunpack.c.l.b16 %v3182
    %v3295 = vunpack.c.h.b16 %v3182
    %v3296 = vunpack.c.l.b16 %v3183
    %v3297 = vunpack.c.h.b16 %v3183
    %v3298 = vunpack.c.l.b16 %v3184
    %v3299 = vunpack.c.h.b16 %v3184
    %v3300 = vunpack.c.l.b16 %v3185
    %v3301 = vunpack.c.h.b16 %v3185
    %v3302 = vunpack.c.l.b16 %v3186
    %v3303 = vunpack.c.h.b16 %v3186
    %v3304 = vunpack.c.l.b16 %v3187
    %v3305 = vunpack.c.h.b16 %v3187
    %v3306 = vunpack.c.l.b16 %v3188
    %v3307 = vunpack.c.h.b16 %v3188
    %v3308 = vunpack.c.l.b16 %v3189
    %v3309 = vunpack.c.h.b16 %v3189
    %v3310 = vunpack.c.l.b16 %v3190
    %v3311 = vunpack.c.h.b16 %v3190
    %v3312 = vunpack.c.l.b16 %v3191
    %v3313 = vunpack.c.h.b16 %v3191
    %v3314 = vunpack.c.l.b16 %v3192
    %v3315 = vunpack.c.h.b16 %v3192
    %v3316 = vunpack.c.l.b16 %v3193
    %v3317 = vunpack.c.h.b16 %v3193
    %v3318 = vunpack.c.l.b16 %v3194
    %v3319 = vunpack.c.h.b16 %v3194
    %v3320 = vunpack.c.l.b16 %v3195
    %v3321 = vunpack.c.h.b16 %v3195
    %v3322 = vunpack.c.l.b16 %v3196
    %v3323 = vunpack.c.h.b16 %v3196
    %v3324 = vunpack.c.l.b16 %v3197
    %v3325 = vunpack.c.h.b16 %v3197
    %v3326 = vunpack.c.l.b16 %v3198
    %v3327 = vunpack.c.h.b16 %v3198
    %v3328 = vunpack.c.l.b16 %v3199
    %v3329 = vunpack.c.h.b16 %v3199
    %v3330 = vunpack.c.l.b16 %v3200
    %v3331 = vunpack.c.h.b16 %v3200
    %v3332 = vunpack.c.l.b16 %v3201
    %v3333 = vunpack.c.h.b16 %v3201
    %v3334 = vunpack.c.l.b16 %v3202
    %v3335 = vunpack.c.h.b16 %v3202
    %v3336 = vunpack.c.l.b16 %v3203
    %v3337 = vunpack.c.h.b16 %v3203
    %v3338 = vunpack.c.l.b16 %v3204
    %v3339 = vunpack.c.h.b16 %v3204
    %v3340 = vunpack.c.l.b16 %v3205
    %v3341 = vunpack.c.h.b16 %v3205
    %v3342 = vunpack.c.l.b16 %v3206
    %v3343 = vunpack.c.h.b16 %v3206
    %v3344 = vunpack.c.l.b16 %v3207
    %v3345 = vunpack.c.h.b16 %v3207
    %v3346 = vunpack.c.l.b16 %v3208
    %v3347 = vunpack.c.h.b16 %v3208
    %v3348 = vunpack.c.l.b16 %v3209
    %v3349 = vunpack.c.h.b16 %v3209
    %v3350 = vunpack.c.l.b16 %v3210
    %v3351 = vunpack.c.h.b16 %v3210
    %v3352 = vunpack.c.l.b16 %v3211
    %v3353 = vunpack.c.h.b16 %v3211
    %v3354 = vunpack.c.l.b16 %v3212
    %v3355 = vunpack.c.h.b16 %v3212
    %v3356 = vunpack.c.l.b16 %v3213
    %v3357 = vunpack.c.h.b16 %v3213
    %v3358 = vunpack.c.l.b16 %v3214
    %v3359 = vunpack.c.h.b16 %v3214
    %v3360 = vunpack.c.l.b16 %v3215
    %v3361 = vunpack.c.h.b16 %v3215
    %v3362 = vunpack.c.l.b16 %v3216
    %v3363 = vunpack.c.h.b16 %v3216
    %v3364 = vunpack.c.l.b16 %v3217
    %v3365 = vunpack.c.h.b16 %v3217
    %v3366 = vunpack.c.l.b16 %v3218
    %v3367 = vunpack.c.h.b16 %v3218
    %v3368 = vunpack.c.l.b16 %v3219
    %v3369 = vunpack.c.h.b16 %v3219
    %v3370 = vunpack.c.l.b16 %v3220
    %v3371 = vunpack.c.h.b16 %v3220
    %v3372 = vunpack.c.l.b16 %v3221
    %v3373 = vunpack.c.h.b16 %v3221
    %v3374 = vunpack.c.l.b16 %v3222
    %v3375 = vunpack.c.h.b16 %v3222
    %v3376 = vunpack.c.l.b16 %v3223
    %v3377 = vunpack.c.h.b16 %v3223
    %v3378 = vunpack.c.l.b16 %v3224
    %v3379 = vunpack.c.h.b16 %v3224
    %v3380 = vunpack.c.l.b16 %v3225
    %v3381 = vunpack.c.h.b16 %v3225
    %v3382 = vpack.c.b16 %v3288, %v3286
    %v3383 = vpack.c.b16 %v3289, %v3287
    %v3384 = vpack.c.b16 %v3292, %v3290
    %v3385 = vpack.c.b16 %v3293, %v3291
    %v3386 = vpack.c.b16 %v3296, %v3294
    %v3387 = vpack.c.b16 %v3297, %v3295
    %v3388 = vpack.c.b16 %v3300, %v3298
    %v3389 = vpack.c.b16 %v3301, %v3299
    %v3390 = vpack.c.b16 %v3304, %v3302
    %v3391 = vpack.c.b16 %v3305, %v3303
    %v3392 = vpack.c.b16 %v3308, %v3306
    %v3393 = vpack.c.b16 %v3309, %v3307
    %v3394 = vpack.c.b16 %v3312, %v3310
    %v3395 = vpack.c.b16 %v3313, %v3311
    %v3396 = vpack.c.b16 %v3316, %v3314
    %v3397 = vpack.c.b16 %v3317, %v3315
    %v3398 = vpack.c.b16 %v3320, %v3318
    %v3399 = vpack.c.b16 %v3321, %v3319
    %v3400 = vpack.c.b16 %v3324, %v3322
    %v3401 = vpack.c.b16 %v3325, %v3323
    %v3402 = vpack.c.b16 %v3328, %v3326
    %v3403 = vpack.c.b16 %v3329, %v3327
    %v3404 = vpack.c.b16 %v3332, %v3330
    %v3405 = vpack.c.b16 %v3333, %v3331
    %v3406 = vpack.c.b16 %v3336, %v3334
    %v3407 = vpack.c.b16 %v3337, %v3335
    %v3408 = vpack.c.b16 %v3340, %v3338
    %v3409 = vpack.c.b16 %v3341, %v3339
    %v3410 = vpack.c.b16 %v3344, %v3342
    %v3411 = vpack.c.b16 %v3345, %v3343
    %v3412 = vpack.c.b16 %v3348, %v3346
    %v3413 = vpack.c.b16 %v3349, %v3347
    %v3414 = vpack.c.b16 %v3352, %v3350
    %v3415 = vpack.c.b16 %v3353, %v3351
    %v3416 = vpack.c.b16 %v3356, %v3354
    %v3417 = vpack.c.b16 %v3357, %v3355
    %v3418 = vpack.c.b16 %v3360, %v3358
    %v3419 = vpack.c.b16 %v3361, %v3359
    %v3420 = vpack.c.b16 %v3364, %v3362
    %v3421 = vpack.c.b16 %v3365, %v3363
    %v3422 = vpack.c.b16 %v3368, %v3366
    %v3423 = vpack.c.b16 %v3369, %v3367
    %v3424 = vpack.c.b16 %v3372, %v3370
    %v3425 = vpack.c.b16 %v3373, %v3371
    %v3426 = vpack.c.b16 %v3376, %v3374
    %v3427 = vpack.c.b16 %v3377, %v3375
    %v3428 = vpack.c.b16 %v3380, %v3378
    %v3429 = vpack.c.b16 %v3381, %v3379
    %3478 = vmatprep.subr.bf16.mxu0 %v3383
    %3479 = vmatpush1.bf16.msra.mxu0 %v3382
    %3480 = vmatprep.subr.bf16.mxu0 %v3385
    %3481 = vmatpush1.bf16.msra.mxu0 %v3384
    %3482 = vmatprep.subr.bf16.mxu0 %v3387
    %3483 = vmatpush1.bf16.msra.mxu0 %v3386
    %3484 = vmatprep.subr.bf16.mxu0 %v3389
    %3485 = vmatpush1.bf16.msra.mxu0 %v3388
    %3486 = vmatprep.subr.bf16.mxu0 %v3391
    %3487 = vmatpush1.bf16.msra.mxu0 %v3390
    %3488 = vmatprep.subr.bf16.mxu0 %v3393
    %3489 = vmatpush1.bf16.msra.mxu0 %v3392
    %3490 = vmatprep.subr.bf16.mxu0 %v3395
    %3491 = vmatpush1.bf16.msra.mxu0 %v3394
    %3492 = vmatprep.subr.bf16.mxu0 %v3397
    %3493 = vmatpush1.bf16.msra.mxu0 %v3396
    %3494 = vmatprep.subr.bf16.mxu0 %v3399
    %3495 = vmatpush1.bf16.msra.mxu0 %v3398
    %3496 = vmatprep.subr.bf16.mxu0 %v3401
    %3497 = vmatpush1.bf16.msra.mxu0 %v3400
    %3498 = vmatprep.subr.bf16.mxu0 %v3403
    %3499 = vmatpush1.bf16.msra.mxu0 %v3402
    %3500 = vmatprep.subr.bf16.mxu0 %v3405
    %3501 = vmatpush1.bf16.msra.mxu0 %v3404
    %3502 = vmatprep.subr.bf16.mxu0 %v3407
    %3503 = vmatpush1.bf16.msra.mxu0 %v3406
    %3504 = vmatprep.subr.bf16.mxu0 %v3409
    %3505 = vmatpush1.bf16.msra.mxu0 %v3408
    %3506 = vmatprep.subr.bf16.mxu0 %v3411
    %3507 = vmatpush1.bf16.msra.mxu0 %v3410
    %3508 = vmatprep.subr.bf16.mxu0 %v3413
    %3509 = vmatpush1.bf16.msra.mxu0 %v3412
    %3510 = vmatprep.mubr.bf16.mxu0 %v3176
    %3511 = vmatmul.mubr.bf16.gmra.mrb[0].mxu0 %v3175
    %v3512 = vpop.f32.mrb[0].mxu0
    %v3513 = vadd.f32 %v3231, %v3512
    %v3514 = vpop.f32.mrb[0].mxu0
    %v3515 = vadd.f32 %v3235, %v3514
    %v3516 = vpop.f32.mrb[0].mxu0
    %v3517 = vpop.f32.mrb[0].mxu0
    %3518 = vdwg.mxu0
    %3519 = vmatprep.subr.bf16.mxu0 %v3415
    %3520 = vmatpush1.bf16.msra.mxu0 %v3414
    %3521 = vmatprep.subr.bf16.mxu0 %v3417
    %3522 = vmatpush1.bf16.msra.mxu0 %v3416
    %3523 = vmatprep.subr.bf16.mxu0 %v3419
    %3524 = vmatpush1.bf16.msra.mxu0 %v3418
    %3525 = vmatprep.subr.bf16.mxu0 %v3421
    %3526 = vmatpush1.bf16.msra.mxu0 %v3420
    %3527 = vmatprep.subr.bf16.mxu0 %v3423
    %3528 = vmatpush1.bf16.msra.mxu0 %v3422
    %3529 = vmatprep.subr.bf16.mxu0 %v3425
    %3530 = vmatpush1.bf16.msra.mxu0 %v3424
    %3531 = vmatprep.subr.bf16.mxu0 %v3427
    %3532 = vmatpush1.bf16.msra.mxu0 %v3426
    %3533 = vmatprep.subr.bf16.mxu0 %v3429
    %3534 = vmatpush1.bf16.msra.mxu0 %v3428
    %3535 = vmatprep.subr.bf16.mxu0 0
    %3536 = vmatpush1.bf16.msra.mxu0 0
    %3537 = vmatprep.subr.bf16.mxu0 0
    %3538 = vmatpush1.bf16.msra.mxu0 0
    %3539 = vmatprep.subr.bf16.mxu0 0
    %3540 = vmatpush1.bf16.msra.mxu0 0
    %3541 = vmatprep.subr.bf16.mxu0 0
    %3542 = vmatpush1.bf16.msra.mxu0 0
    %3543 = vmatprep.subr.bf16.mxu0 0
    %3544 = vmatpush1.bf16.msra.mxu0 0
    %3545 = vmatprep.subr.bf16.mxu0 0
    %3546 = vmatpush1.bf16.msra.mxu0 0
    %3547 = vmatprep.subr.bf16.mxu0 0
    %3548 = vmatpush1.bf16.msra.mxu0 0
    %3549 = vmatprep.subr.bf16.mxu0 0
    %3550 = vmatpush1.bf16.msra.mxu0 0
    %3551 = vmatprep.mubr.bf16.mxu0 0
    %3552 = vmatmul.mubr.bf16.gmra.mrb[0].mxu0 %v3177
    %v3553 = vpop.f32.mrb[0].mxu0
    %v3554 = vadd.f32 %v3513, %v3553
    %v3555 = vpop.f32.mrb[0].mxu0
    %v3556 = vadd.f32 %v3515, %v3555
    %v3557 = vpop.f32.mrb[0].mxu0
    %v3558 = vpop.f32.mrb[0].mxu0
    %3559 = vdwg.mxu0
    %v3560 = vtanh.pop %v3554
    %v3561 = vtanh.pop %v3556
    %v3562 = vpack.c.bf16 %v3560, %v3560
    %v3563 = vpack.c.bf16 %v3561, %v3561
    %v3564 = vld [vmem:[%s9] sm:$0xff]
    %v3565 = vld [vmem:[#allocation2] sm:$0x1]
    %v3567 = vlaneseq
    %v3568 = vshrl.u32 %v3567, 7
    %v3569 = vsub.s32 0, %v3568
    %v3570 = vrot.slane %v3565, %v3569
    %3571 = vset.pattern.permute.xlu0 0
    %3572 = vperm.xlu0 %3571, %v3570
    %v3573 = vpop.permute.xlu0 %3572
    %v3576 = vunpack.c.l.b16 %v3564
    %v3577 = vunpack.c.h.b16 %v3564
    %v3578 = vpack.c.b16 %v3576, %v3576
    %v3579 = vpack.c.b16 %v3577, %v3577
    %3582 = vmatprep.subr.bf16.mxu0 %v3563
    %3583 = vmatpush1.bf16.xpose.msra.mxu0 %v3562
    %3584 = vmatprep.subr.bf16.mxu0 0
    %3585 = vmatpush1.bf16.xpose.msra.mxu0 0
    %3586 = vmatprep.subr.bf16.mxu0 0
    %3587 = vmatpush1.bf16.xpose.msra.mxu0 0
    %3588 = vmatprep.subr.bf16.mxu0 0
    %3589 = vmatpush1.bf16.xpose.msra.mxu0 0
    %3590 = vmatprep.subr.bf16.mxu0 0
    %3591 = vmatpush1.bf16.xpose.msra.mxu0 0
    %3592 = vmatprep.subr.bf16.mxu0 0
    %3593 = vmatpush1.bf16.xpose.msra.mxu0 0
    %3594 = vmatprep.subr.bf16.mxu0 0
    %3595 = vmatpush1.bf16.xpose.msra.mxu0 0
    %3596 = vmatprep.subr.bf16.mxu0 0
    %3597 = vmatpush1.bf16.xpose.msra.mxu0 0
    %3598 = vmatprep.subr.bf16.mxu0 0
    %3599 = vmatpush1.bf16.xpose.msra.mxu0 0
    %3600 = vmatprep.subr.bf16.mxu0 0
    %3601 = vmatpush1.bf16.xpose.msra.mxu0 0
    %3602 = vmatprep.subr.bf16.mxu0 0
    %3603 = vmatpush1.bf16.xpose.msra.mxu0 0
    %3604 = vmatprep.subr.bf16.mxu0 0
    %3605 = vmatpush1.bf16.xpose.msra.mxu0 0
    %3606 = vmatprep.subr.bf16.mxu0 0
    %3607 = vmatpush1.bf16.xpose.msra.mxu0 0
    %3608 = vmatprep.subr.bf16.mxu0 0
    %3609 = vmatpush1.bf16.xpose.msra.mxu0 0
    %3610 = vmatprep.subr.bf16.mxu0 0
    %3611 = vmatpush1.bf16.xpose.msra.mxu0 0
    %3612 = vmatprep.subr.bf16.mxu0 0
    %3613 = vmatpush1.bf16.xpose.msra.mxu0 0
    %3614 = vmatprep.mubr.bf16.mxu0 %v3579
    %3615 = vmatmul.mubr.bf16.gmra.mrb[0].mxu0 %v3578
    %v3616 = vpop.f32.mrb[0].mxu0
    %v3617 = vadd.f32 %v3573, %v3616
    %v3618 = vpop.f32.mrb[0].mxu0
    %v3619 = vpop.f32.mrb[0].mxu0
    %v3620 = vpop.f32.mrb[0].mxu0
    %3621 = vdwg.mxu0
    %v3622 = vxor.u32 %v3617, 2147483648
    %v3623 = vmul.f32 %v3622, 1.442695
    %v3624 = vpow.pop %v3623
    %v3625 = vadd.f32 %v3624, 1.0
    %v3626 = vrcp.pop %v3625
    %v3627 = vmul.f32 1.0, %v3626
    %vm3628 = vcmask 64512
    %3629 = vst.msk [vmem:[#allocation14] sm:$0xff] %vm3628, %v3627
    // Predicated region
    $region70: #{tpu_custom_call.1} parent=1 // pred_check
      _
    $region71: #{tpu_custom_call.1} parent=1 // pred_check_branch
      %3631 = sbr.rel (0) target = $region73
    $region72: #{tpu_custom_call.1} parent=1 // pred_region
      %s3633 = ssub.s32 128, 128
      %3634 = vsyncadd [#allocation5], %s3633
      %s3636 = sshll.u32 [#allocation14], 4
      %s3637 = int_to_ptr.vmem [resolvable:$true] %s3636
      %3639 = dma.vmem_to_hbm [thread:$0]  %s3637, 128, %s11, [#allocation5]
    $region73: #{tpu_custom_call.1} parent=1 // pred_fallthru
      _
    // Predicated region
    $region74: #{tpu_custom_call.1} parent=1 // pred_check
      _
    $region75: #{tpu_custom_call.1} parent=1 // pred_check_branch
      %3641 = sbr.rel (0) target = $region77
    $region76: #{tpu_custom_call.1} parent=1 // pred_region
      %3642 = dma.done [#allocation5], 128
    $region77: #{tpu_custom_call.1} parent=1 // pred_fallthru
      _
    %3643 = vsyncpa [#allocation4], 1
    %3644 = vsyncpa [#allocation7], 1
    %3645 = vsyncpa [#allocation10], 1
    %3646 = vsyncpa [#allocation13], 1
    %3647 = vsyncpa [#allocation5], 1

</llo_original>
